<compile_context>
chip_gen: v7x
topology: tpu7x:2x2x1
jax: 0.10.0
libtpu: 0.0.40
codegen_flags: <defaults>
</compile_context>

<pallas_src>
import math

import jax
import jax.numpy as jnp
import numpy as np
from jax import lax
from jax.experimental import pallas as pl
from jax.experimental.pallas import tpu as pltpu

NUM_HEADS = 4
DIM = 32
INTER_DIM = 64
LN_EPS = 1e-5          # torch.nn.LayerNorm default eps
NEG_INF = -1e9         # value used by masked_fill in the reference module


# ------------------------------ Pallas kernel ---------------------------------
def decoder_block_kernel(x_ref, enc_ref, tbias_ref, sbias_ref, w_ref, p_ref,
                         out_ref):
    bb, T, D = x_ref.shape
    S = enc_ref.shape[1]
    H = NUM_HEADS
    PH = D // H
    NQ = bb * T
    inter = (w_ref.shape[0] - 8 * D) // 2
    inv_sqrt = 1.0 / math.sqrt(PH)
    mxu = w_ref.dtype        # matmul operand dtype (f32 default, bf16 optional)

    def mm(a, b):            # a @ b, f32 accumulation on the MXU
        return jnp.dot(a.astype(mxu), b.astype(mxu),
                       preferred_element_type=jnp.float32)

    def mm_bt(a, b):         # a @ b.T (contract last dim of both), f32 accumulation
        return lax.dot_general(a.astype(mxu), b.astype(mxu),
                               (((1,), (1,)), ((), ())),
                               preferred_element_type=jnp.float32)

    def layer_norm(z, gamma, beta):
        mu = jnp.mean(z, axis=-1, keepdims=True)
        var = jnp.mean(jnp.square(z - mu), axis=-1, keepdims=True)
        return (z - mu) * lax.rsqrt(var + LN_EPS) * gamma + beta

    # Flatten the batch block: projections / FFN run on (bb*T, D) rows.
    # (bb merges into the sublane dim since T is a multiple of 8 -> free reshape.)
    x = x_ref[...].reshape(NQ, D)
    enc = enc_ref[...].reshape(bb * S, D)

    def mha(q, kvT, wo_row0, bias_ref, NK):
        """q: (bb*T, D) row-major queries.  kvT: (2D, bb*NK) feature-major fused
        keys|values.  Per-head q/k/v slices need no transposes; each head's
        output is folded straight through its rows of the output projection
        (rows [wo_row0, wo_row0+D) of w_ref), and the score/softmax/PV stage
        runs per batch element so no cross-batch score columns are computed."""
        blocks = []
        for b in range(bb):                     # static, bb <= 8
            qb = q[b * T:(b + 1) * T, :]        # (T, D)  sublane-aligned rows
            bias = bias_ref[b, :, :]            # (T, NK) additive mask bias, f32
            acc = None
            for h in range(H):                  # static, H = 4
                lo = h * PH
                qh = qb[:, lo:lo + PH]                                # (T, PH)
                kh = kvT[lo:lo + PH, b * NK:(b + 1) * NK]             # (PH, NK)
                vh = kvT[D + lo:D + lo + PH, b * NK:(b + 1) * NK]     # (PH, NK)
                s = mm(qh, kh) * inv_sqrt + bias
                s = s - jnp.max(s, axis=-1, keepdims=True)
                p = jnp.exp(s)
                # denom >= 1 (the row max contributes exp(0) = 1), so fully
                # masked rows cannot produce Inf/NaN here.
                p = p * pl.reciprocal(jnp.sum(p, axis=-1, keepdims=True),
                                      approx=True)
                oh = mm_bt(p, vh)                                     # (T, PH)
                c = mm(oh, w_ref[wo_row0 + lo:wo_row0 + lo + PH, :])  # (T, D)
                acc = c if acc is None else acc + c
            blocks.append(acc)
        return blocks[0] if bb == 1 else jnp.concatenate(blocks, axis=0)

    # ---- self-attention + add & norm (dropout p = 0 -> identity) ----
    q1 = mm(x, w_ref[0:D, :])                         # (NQ, D)  row-major q proj
    kv1T = mm_bt(w_ref[D:3 * D, :], x)                # (2D, NQ) fused k|v proj
    sa = mha(q1, kv1T, 3 * D, tbias_ref, T)
    an1 = layer_norm(x + sa, p_ref[0:1, :D], p_ref[1:2, :D])

    # ---- cross-attention + add & norm ----
    q2 = mm(an1, w_ref[4 * D:5 * D, :])               # (NQ, D)
    kv2T = mm_bt(w_ref[5 * D:7 * D, :], enc)          # (2D, bb*S) fused k|v proj
    ca = mha(q2, kv2T, 7 * D, sbias_ref, S)
    an2 = layer_norm(an1 + ca, p_ref[2:3, :D], p_ref[3:4, :D])

    # ---- feed-forward + add & norm ----
    h1 = jnp.maximum(
        mm_bt(an2, w_ref[8 * D:8 * D + inter, :]) + p_ref[7:8, :inter], 0.0)
    ff = mm(h1, w_ref[8 * D + inter:8 * D + 2 * inter, :]) + p_ref[6:7, :D]
    an3 = layer_norm(an2 + ff, p_ref[4:5, :D], p_ref[5:6, :D])

    out_ref[...] = an3.reshape(bb, T, D).astype(out_ref.dtype)


# ------------------------- parameter packing (once) ---------------------------
def pack_decoder_params(params, weights_dtype=jnp.float32):
    """Pack all DecoderBlock parameters ONCE, at parameter-load time.

    wstack rows (width D, all blocks sublane-aligned):
      [0:D)        wq1   (in, out)   - row-major so q = x @ wq needs no transpose
      [D:3D)       wk1|wv1 fused, feature-major ((out, in))
      [3D:4D)      wo1   (in, out)
      [4D:5D)      wq2   (in, out)
      [5D:7D)      wk2|wv2 fused, feature-major
      [7D:8D)      wo2   (in, out)
      [8D:8D+I)    wff1  feature-major ((out, in))
      [8D+I:8D+2I) wff2  (in, out)
    pstack rows: g1, be1, g2, be2, g3, be3, bff2, bff1 (lane-padded to max(I, D)).

    weights_dtype=jnp.bfloat16 feeds the native bf16 MXU path on v6e/v7x and
    halves the weight DMA/VMEM; f32 (default) keeps tight parity with the
    PyTorch f32 reference (accumulation is f32 either way).
    """
    D = params["wq1"].shape[0]
    inter = params["wff1"].shape[1]
    wstack = jnp.concatenate([
        params["wq1"],
        jnp.concatenate([params["wk1"], params["wv1"]], axis=1).T,
        params["wo1"],
        params["wq2"],
        jnp.concatenate([params["wk2"], params["wv2"]], axis=1).T,
        params["wo2"],
        params["wff1"].T,
        params["wff2"],
    ], axis=0).astype(weights_dtype)

    width = max(inter, D)

    def _row(p):
        p = jnp.asarray(p, jnp.float32).reshape(1, -1)
        return jnp.pad(p, ((0, 0), (0, width - p.shape[1])))

    pstack = jnp.concatenate(
        [_row(params[k]) for k in
         ("g1", "be1", "g2", "be2", "g3", "be3", "bff2", "bff1")], axis=0)
    return {"wstack": wstack, "pstack": pstack, "dim": D, "inter": inter}


# --------------------------------- wrapper ------------------------------------
def _batch_block_size(batch, max_fold=8):
    """Batch elements folded into one grid step.

    Single-TensorCore chips (v5e/v6e): the grid is a purely serial loop, so fold
    the whole (small) batch into one step -> no per-step fixed pipeline overhead
    and a larger (B*T, D) tile for the MXU.  Chips with 2 TensorCores per chip
    (v7x, and v4/v5p megacore) keep >= num_cores grid steps so every core gets a
    batch slice via dimension_semantics=("parallel",).
    """
    try:
        kind = jax.devices()[0].device_kind.lower()
    except Exception:  # pragma: no cover - defensive
        kind = ""
    cores = 2 if any(t in kind for t in ("v7", "7x", "v5p", "v4")) else 1
    bb = min(max(1, batch // cores), max_fold)
    while batch % bb:
        bb -= 1
    return bb


def decoder_block(output_embeddings, encoder_output, source_mask, target_mask,
                  packed, batch_block=None):
    x, enc = output_embeddings, encoder_output
    B, T, D = x.shape
    S = enc.shape[1]
    wstack, pstack = packed["wstack"], packed["pstack"]
    inter = packed["inter"]
    bb = _batch_block_size(B) if batch_block is None else batch_block
    assert B % bb == 0

    # Additive attention biases (mask-only), built once per call OUTSIDE the
    # kernel: no iota / compare / select work on the serial in-kernel path.
    tbias = jnp.where(target_mask[:, 0] == 0, NEG_INF, 0.0).astype(jnp.float32)
    sbias = jnp.where(source_mask[:, 0] == 0, NEG_INF, 0.0).astype(jnp.float32)

    grid = (B // bb,)
    in_specs = [
        pl.BlockSpec((bb, T, D), lambda i: (i, 0, 0)),   # output_embeddings
        pl.BlockSpec((bb, S, D), lambda i: (i, 0, 0)),   # encoder_output
        pl.BlockSpec((bb, T, T), lambda i: (i, 0, 0)),   # self-attn additive bias
        pl.BlockSpec((bb, T, S), lambda i: (i, 0, 0)),   # cross-attn additive bias
        # Constant block index -> DMA'd once and reused across all grid steps.
        # (pl.Buffered(1) would also drop the dead second buffer; skipped since
        # the whole stack is ~50 KiB and top-level pipeline_mode support is
        # version dependent.)
        pl.BlockSpec(wstack.shape, lambda i: (0, 0)),
        pl.BlockSpec(pstack.shape, lambda i: (0, 0)),
    ]
    # Output kept as (bb, T, D): at D=32, T=8 the per-step result is <= 2 vregs,
    # so the lane-dense (bb, T*D) relayout recommended for large outputs would
    # cost more in-kernel cross-lane shuffle work than the masked stores it
    # removes; revisit if T*D is scaled up.
    out_specs = pl.BlockSpec((bb, T, D), lambda i: (i, 0, 0))

    flops = 2 * B * (4 * T * D * D                     # self-attn projections
                     + 2 * T * T * D                   # self-attn scores + PV
                     + 2 * T * D * D + 2 * S * D * D   # cross q/o + k/v projections
                     + 2 * T * S * D                   # cross scores + PV
                     + 2 * T * D * inter)              # feed-forward
    transcendentals = B * (NUM_HEADS * T * (T + S) + 2 * NUM_HEADS * T + 3 * T)
    bytes_accessed = sum(int(a.size) * a.dtype.itemsize
                         for a in (x, enc, tbias, sbias, wstack, pstack))
    bytes_accessed += B * T * D * x.dtype.itemsize

    return pl.pallas_call(
        decoder_block_kernel,
        out_shape=jax.ShapeDtypeStruct((B, T, D), x.dtype),
        grid_spec=pltpu.PrefetchScalarGridSpec(
            num_scalar_prefetch=0,
            grid=grid,
            in_specs=in_specs,
            out_specs=out_specs,
        ),
        compiler_params=pltpu.CompilerParams(
            dimension_semantics=("parallel",)),
        cost_estimate=pl.CostEstimate(flops=int(flops),
                                      transcendentals=int(transcendentals),
                                      bytes_accessed=int(bytes_accessed)),
    )(x, enc, tbias, sbias, wstack, pstack)


# ----------------------------- pure-JAX reference -----------------------------
def _ref_mha(q_in, kv_in, wq, wk, wv, wo, mask):
    B, Tq, D = q_in.shape
    Tk = kv_in.shape[1]
    ph = D // NUM_HEADS
    q = (q_in @ wq).reshape(B, Tq, NUM_HEADS, ph).transpose(0, 2, 1, 3)
    k = (kv_in @ wk).reshape(B, Tk, NUM_HEADS, ph).transpose(0, 2, 1, 3)
    v = (kv_in @ wv).reshape(B, Tk, NUM_HEADS, ph).transpose(0, 2, 1, 3)
    s = jnp.einsum("bhqd,bhkd->bhqk", q, k) / math.sqrt(ph)
    s = jnp.where(mask == 0, NEG_INF, s)
    p = jax.nn.softmax(s, axis=-1)
    o = jnp.einsum("bhqk,bhkd->bhqd", p, v).transpose(0, 2, 1, 3).reshape(B, Tq, D)
    return o @ wo


def _ref_ln(z, g, b):
    mu = jnp.mean(z, axis=-1, keepdims=True)
    var = jnp.mean(jnp.square(z - mu), axis=-1, keepdims=True)
    return (z - mu) * jax.lax.rsqrt(var + LN_EPS) * g + b


def decoder_block_ref(x, enc, smask, tmask, p):
    sa = _ref_mha(x, x, p["wq1"], p["wk1"], p["wv1"], p["wo1"], tmask)
    an1 = _ref_ln(x + sa, p["g1"], p["be1"])
    ca = _ref_mha(an1, enc, p["wq2"], p["wk2"], p["wv2"], p["wo2"], smask)
    an2 = _ref_ln(an1 + ca, p["g2"], p["be2"])
    h = jnp.maximum(an2 @ p["wff1"] + p["bff1"], 0.0)
    ff = h @ p["wff2"] + p["bff2"]
    return _ref_ln(an2 + ff, p["g3"], p["be3"])


# ----------------------------------- main --------------------------------------
if __name__ == "__main__":
    B, T, S = 2, 8, 16

    key = jax.random.PRNGKey(0)
    ks = jax.random.split(key, 16)

    def lin(k, fan_in, fan_out):
        # PyTorch nn.Linear weight is (out, in); we store it transposed (in, out).
        bound = 1.0 / math.sqrt(fan_in)
        return jax.random.uniform(k, (fan_in, fan_out), jnp.float32, -bound, bound)

    params = {
        # self-attention projections (bias=False in the module)
        "wq1": lin(ks[0], DIM, DIM), "wk1": lin(ks[1], DIM, DIM),
        "wv1": lin(ks[2], DIM, DIM), "wo1": lin(ks[3], DIM, DIM),
        # cross-attention projections
        "wq2": lin(ks[4], DIM, DIM), "wk2": lin(ks[5], DIM, DIM),
        "wv2": lin(ks[6], DIM, DIM), "wo2": lin(ks[7], DIM, DIM),
        # feed-forward (bias=True); biases stored as (1, dim) rows
        "wff1": lin(ks[8], DIM, INTER_DIM),
        "bff1": jax.random.uniform(ks[9], (1, INTER_DIM), jnp.float32,
                                   -1.0 / math.sqrt(DIM), 1.0 / math.sqrt(DIM)),
        "wff2": lin(ks[10], INTER_DIM, DIM),
        "bff2": jax.random.uniform(ks[11], (1, DIM), jnp.float32,
                                   -1.0 / math.sqrt(INTER_DIM),
                                   1.0 / math.sqrt(INTER_DIM)),
        # LayerNorm affine params (PyTorch init: weight=1, bias=0)
        "g1": jnp.ones((1, DIM), jnp.float32), "be1": jnp.zeros((1, DIM), jnp.float32),
        "g2": jnp.ones((1, DIM), jnp.float32), "be2": jnp.zeros((1, DIM), jnp.float32),
        "g3": jnp.ones((1, DIM), jnp.float32), "be3": jnp.zeros((1, DIM), jnp.float32),
    }

    x = jax.random.normal(ks[12], (B, T, DIM), jnp.float32)       # output_embeddings
    enc = jax.random.normal(ks[13], (B, S, DIM), jnp.float32)     # encoder_output
    # causal target mask (B, 1, T, T); all-ones source mask (B, 1, T, S)
    tmask = jnp.broadcast_to(
        jnp.tril(jnp.ones((T, T), jnp.float32))[None, None], (B, 1, T, T))
    smask = jnp.ones((B, 1, T, S), jnp.float32)

    # Pack weights ONCE at parameter-load time (hoisted out of the per-call path).
    packed = pack_decoder_params(params, weights_dtype=jnp.float32)

    out = decoder_block(x, enc, smask, tmask, packed)
    out = jax.block_until_ready(out)

    ref = decoder_block_ref(x, enc, smask, tmask, params)
    # Tolerance 2e-3: the only deviation from the f32 reference beyond matmul
    # reassociation is the approximate EUP reciprocal used for the softmax
    # normalization (pl.reciprocal(..., approx=True)); approx=False restores <2e-4.
    np.testing.assert_allclose(np.asarray(out), np.asarray(ref),
                               atol=2e-3, rtol=2e-3)

    print("KERNEL_OK")
</pallas_src>

<mosaic_0001>
module attributes {stable_mosaic.version = 11 : i64} {
  func.func @decoder_block_kernel(%arg0: i32, %arg1: memref<2x8x32xf32, #tpu.memory_space<vmem>>, %arg2: memref<2x16x32xf32, #tpu.memory_space<vmem>>, %arg3: memref<2x8x8xf32, #tpu.memory_space<vmem>>, %arg4: memref<2x8x16xf32, #tpu.memory_space<vmem>>, %arg5: memref<384x32xf32, #tpu.memory_space<vmem>>, %arg6: memref<8x64xf32, #tpu.memory_space<vmem>>, %arg7: memref<2x8x32xf32, #tpu.memory_space<vmem>>) attributes {dimension_semantics = [#tpu.dimension_semantics<parallel>], iteration_bounds = array<i64: 1>, scalar_prefetch = 0 : i64, scratch_operands = 0 : i64, tpu.core_type = #tpu.core_type<tc>, window_params = [{transform_indices = @transform_0, window_bounds = array<i64: 2, 8, 32>}, {transform_indices = @transform_1, window_bounds = array<i64: 2, 16, 32>}, {transform_indices = @transform_2, window_bounds = array<i64: 2, 8, 8>}, {transform_indices = @transform_3, window_bounds = array<i64: 2, 8, 16>}, {pipeline_mode = #tpu.pipeline_mode<synchronous>, transform_indices = @transform_4, window_bounds = array<i64: 384, 32>}, {pipeline_mode = #tpu.pipeline_mode<synchronous>, transform_indices = @transform_5, window_bounds = array<i64: 8, 64>}, {transform_indices = @transform_6, window_bounds = array<i64: 2, 8, 32>}]} {
    %c0 = arith.constant 0 : index
    %c0_0 = arith.constant 0 : index
    %c0_1 = arith.constant 0 : index
    %0 = vector.load %arg1[%c0, %c0_0, %c0_1] : memref<2x8x32xf32, #tpu.memory_space<vmem>>, vector<2x8x32xf32>
    %1 = vector.shape_cast %0 : vector<2x8x32xf32> to vector<16x32xf32>
    %c0_2 = arith.constant 0 : index
    %c0_3 = arith.constant 0 : index
    %c0_4 = arith.constant 0 : index
    %2 = vector.load %arg2[%c0_2, %c0_3, %c0_4] : memref<2x16x32xf32, #tpu.memory_space<vmem>>, vector<2x16x32xf32>
    %3 = vector.shape_cast %2 : vector<2x16x32xf32> to vector<32x32xf32>
    %c0_5 = arith.constant 0 : index
    %c0_6 = arith.constant 0 : index
    %4 = vector.load %arg5[%c0_5, %c0_6] : memref<384x32xf32, #tpu.memory_space<vmem>>, vector<32x32xf32>
    %cst = arith.constant dense<0.000000e+00> : vector<16x32xf32>
    %5 = tpu.matmul %1, %4, %cst {dimension_numbers = #tpu.dot_dimension_numbers<[1], [0], [0], [1], [0, 0, 1, 1], [], []>} : vector<16x32xf32>, vector<32x32xf32>, vector<16x32xf32> -> vector<16x32xf32>
    %c32 = arith.constant 32 : index
    %c0_7 = arith.constant 0 : index
    %6 = vector.load %arg5[%c32, %c0_7] : memref<384x32xf32, #tpu.memory_space<vmem>>, vector<64x32xf32>
    %cst_8 = arith.constant dense<0.000000e+00> : vector<64x16xf32>
    %7 = tpu.matmul %6, %1, %cst_8 {dimension_numbers = #tpu.dot_dimension_numbers<[1], [1], [0], [0], [0, 0, 1, 0], [], []>} : vector<64x32xf32>, vector<16x32xf32>, vector<64x16xf32> -> vector<64x16xf32>
    %8 = vector.extract_strided_slice %5 {offsets = [0, 0], sizes = [8, 32], strides = [1, 1]} : vector<16x32xf32> to vector<8x32xf32>
    %c0_9 = arith.constant 0 : index
    %c0_10 = arith.constant 0 : index
    %c0_11 = arith.constant 0 : index
    %9 = vector.load %arg3[%c0_9, %c0_10, %c0_11] : memref<2x8x8xf32, #tpu.memory_space<vmem>>, vector<1x8x8xf32>
    %10 = vector.shape_cast %9 : vector<1x8x8xf32> to vector<8x8xf32>
    %11 = vector.extract_strided_slice %8 {offsets = [0, 0], sizes = [8, 8], strides = [1, 1]} : vector<8x32xf32> to vector<8x8xf32>
    %12 = vector.extract_strided_slice %7 {offsets = [0, 0], sizes = [8, 8], strides = [1, 1]} : vector<64x16xf32> to vector<8x8xf32>
    %13 = vector.extract_strided_slice %7 {offsets = [32, 0], sizes = [8, 8], strides = [1, 1]} : vector<64x16xf32> to vector<8x8xf32>
    %cst_12 = arith.constant dense<0.000000e+00> : vector<8x8xf32>
    %14 = tpu.matmul %11, %12, %cst_12 {dimension_numbers = #tpu.dot_dimension_numbers<[1], [0], [0], [1], [0, 0, 1, 1], [], []>} : vector<8x8xf32>, vector<8x8xf32>, vector<8x8xf32> -> vector<8x8xf32>
    %cst_13 = arith.constant 0.353553385 : f32
    %15 = vector.broadcast %cst_13 : f32 to vector<8x8xf32>
    %16 = arith.mulf %14, %15 : vector<8x8xf32>
    %17 = arith.addf %16, %10 : vector<8x8xf32>
    %cst_14 = arith.constant dense<0xFF800000> : vector<8xf32>
    %18 = vector.multi_reduction <maximumf>, %17, %cst_14 [1] : vector<8x8xf32> to vector<8xf32>
    %19 = vector.shape_cast %18 : vector<8xf32> to vector<8x1xf32>
    %20 = vector.broadcast %19 : vector<8x1xf32> to vector<8x8xf32>
    %21 = arith.subf %17, %20 : vector<8x8xf32>
    %22 = math.exp %21 : vector<8x8xf32>
    %cst_15 = arith.constant dense<0.000000e+00> : vector<8xf32>
    %23 = vector.multi_reduction <add>, %22, %cst_15 [1] : vector<8x8xf32> to vector<8xf32>
    %24 = vector.shape_cast %23 : vector<8xf32> to vector<8x1xf32>
    %25 = tpu.reciprocal %24 {approx = true} : vector<8x1xf32> -> vector<8x1xf32>
    %26 = vector.broadcast %25 : vector<8x1xf32> to vector<8x8xf32>
    %27 = arith.mulf %22, %26 : vector<8x8xf32>
    %cst_16 = arith.constant dense<0.000000e+00> : vector<8x8xf32>
    %28 = tpu.matmul %27, %13, %cst_16 {dimension_numbers = #tpu.dot_dimension_numbers<[1], [1], [0], [0], [0, 0, 1, 0], [], []>} : vector<8x8xf32>, vector<8x8xf32>, vector<8x8xf32> -> vector<8x8xf32>
    %c96 = arith.constant 96 : index
    %c0_17 = arith.constant 0 : index
    %29 = vector.load %arg5[%c96, %c0_17] : memref<384x32xf32, #tpu.memory_space<vmem>>, vector<8x32xf32>
    %cst_18 = arith.constant dense<0.000000e+00> : vector<8x32xf32>
    %30 = tpu.matmul %28, %29, %cst_18 {dimension_numbers = #tpu.dot_dimension_numbers<[1], [0], [0], [1], [0, 0, 1, 1], [], []>} : vector<8x8xf32>, vector<8x32xf32>, vector<8x32xf32> -> vector<8x32xf32>
    %31 = vector.extract_strided_slice %8 {offsets = [0, 8], sizes = [8, 8], strides = [1, 1]} : vector<8x32xf32> to vector<8x8xf32>
    %32 = vector.extract_strided_slice %7 {offsets = [8, 0], sizes = [8, 8], strides = [1, 1]} : vector<64x16xf32> to vector<8x8xf32>
    %33 = vector.extract_strided_slice %7 {offsets = [40, 0], sizes = [8, 8], strides = [1, 1]} : vector<64x16xf32> to vector<8x8xf32>
    %cst_19 = arith.constant dense<0.000000e+00> : vector<8x8xf32>
    %34 = tpu.matmul %31, %32, %cst_19 {dimension_numbers = #tpu.dot_dimension_numbers<[1], [0], [0], [1], [0, 0, 1, 1], [], []>} : vector<8x8xf32>, vector<8x8xf32>, vector<8x8xf32> -> vector<8x8xf32>
    %cst_20 = arith.constant 0.353553385 : f32
    %35 = vector.broadcast %cst_20 : f32 to vector<8x8xf32>
    %36 = arith.mulf %34, %35 : vector<8x8xf32>
    %37 = arith.addf %36, %10 : vector<8x8xf32>
    %cst_21 = arith.constant dense<0xFF800000> : vector<8xf32>
    %38 = vector.multi_reduction <maximumf>, %37, %cst_21 [1] : vector<8x8xf32> to vector<8xf32>
    %39 = vector.shape_cast %38 : vector<8xf32> to vector<8x1xf32>
    %40 = vector.broadcast %39 : vector<8x1xf32> to vector<8x8xf32>
    %41 = arith.subf %37, %40 : vector<8x8xf32>
    %42 = math.exp %41 : vector<8x8xf32>
    %cst_22 = arith.constant dense<0.000000e+00> : vector<8xf32>
    %43 = vector.multi_reduction <add>, %42, %cst_22 [1] : vector<8x8xf32> to vector<8xf32>
    %44 = vector.shape_cast %43 : vector<8xf32> to vector<8x1xf32>
    %45 = tpu.reciprocal %44 {approx = true} : vector<8x1xf32> -> vector<8x1xf32>
    %46 = vector.broadcast %45 : vector<8x1xf32> to vector<8x8xf32>
    %47 = arith.mulf %42, %46 : vector<8x8xf32>
    %cst_23 = arith.constant dense<0.000000e+00> : vector<8x8xf32>
    %48 = tpu.matmul %47, %33, %cst_23 {dimension_numbers = #tpu.dot_dimension_numbers<[1], [1], [0], [0], [0, 0, 1, 0], [], []>} : vector<8x8xf32>, vector<8x8xf32>, vector<8x8xf32> -> vector<8x8xf32>
    %c104 = arith.constant 104 : index
    %c0_24 = arith.constant 0 : index
    %49 = vector.load %arg5[%c104, %c0_24] : memref<384x32xf32, #tpu.memory_space<vmem>>, vector<8x32xf32>
    %cst_25 = arith.constant dense<0.000000e+00> : vector<8x32xf32>
    %50 = tpu.matmul %48, %49, %cst_25 {dimension_numbers = #tpu.dot_dimension_numbers<[1], [0], [0], [1], [0, 0, 1, 1], [], []>} : vector<8x8xf32>, vector<8x32xf32>, vector<8x32xf32> -> vector<8x32xf32>
    %51 = arith.addf %30, %50 : vector<8x32xf32>
    %52 = vector.extract_strided_slice %8 {offsets = [0, 16], sizes = [8, 8], strides = [1, 1]} : vector<8x32xf32> to vector<8x8xf32>
    %53 = vector.extract_strided_slice %7 {offsets = [16, 0], sizes = [8, 8], strides = [1, 1]} : vector<64x16xf32> to vector<8x8xf32>
    %54 = vector.extract_strided_slice %7 {offsets = [48, 0], sizes = [8, 8], strides = [1, 1]} : vector<64x16xf32> to vector<8x8xf32>
    %cst_26 = arith.constant dense<0.000000e+00> : vector<8x8xf32>
    %55 = tpu.matmul %52, %53, %cst_26 {dimension_numbers = #tpu.dot_dimension_numbers<[1], [0], [0], [1], [0, 0, 1, 1], [], []>} : vector<8x8xf32>, vector<8x8xf32>, vector<8x8xf32> -> vector<8x8xf32>
    %cst_27 = arith.constant 0.353553385 : f32
    %56 = vector.broadcast %cst_27 : f32 to vector<8x8xf32>
    %57 = arith.mulf %55, %56 : vector<8x8xf32>
    %58 = arith.addf %57, %10 : vector<8x8xf32>
    %cst_28 = arith.constant dense<0xFF800000> : vector<8xf32>
    %59 = vector.multi_reduction <maximumf>, %58, %cst_28 [1] : vector<8x8xf32> to vector<8xf32>
    %60 = vector.shape_cast %59 : vector<8xf32> to vector<8x1xf32>
    %61 = vector.broadcast %60 : vector<8x1xf32> to vector<8x8xf32>
    %62 = arith.subf %58, %61 : vector<8x8xf32>
    %63 = math.exp %62 : vector<8x8xf32>
    %cst_29 = arith.constant dense<0.000000e+00> : vector<8xf32>
    %64 = vector.multi_reduction <add>, %63, %cst_29 [1] : vector<8x8xf32> to vector<8xf32>
    %65 = vector.shape_cast %64 : vector<8xf32> to vector<8x1xf32>
    %66 = tpu.reciprocal %65 {approx = true} : vector<8x1xf32> -> vector<8x1xf32>
    %67 = vector.broadcast %66 : vector<8x1xf32> to vector<8x8xf32>
    %68 = arith.mulf %63, %67 : vector<8x8xf32>
    %cst_30 = arith.constant dense<0.000000e+00> : vector<8x8xf32>
    %69 = tpu.matmul %68, %54, %cst_30 {dimension_numbers = #tpu.dot_dimension_numbers<[1], [1], [0], [0], [0, 0, 1, 0], [], []>} : vector<8x8xf32>, vector<8x8xf32>, vector<8x8xf32> -> vector<8x8xf32>
    %c112 = arith.constant 112 : index
    %c0_31 = arith.constant 0 : index
    %70 = vector.load %arg5[%c112, %c0_31] : memref<384x32xf32, #tpu.memory_space<vmem>>, vector<8x32xf32>
    %cst_32 = arith.constant dense<0.000000e+00> : vector<8x32xf32>
    %71 = tpu.matmul %69, %70, %cst_32 {dimension_numbers = #tpu.dot_dimension_numbers<[1], [0], [0], [1], [0, 0, 1, 1], [], []>} : vector<8x8xf32>, vector<8x32xf32>, vector<8x32xf32> -> vector<8x32xf32>
    %72 = arith.addf %51, %71 : vector<8x32xf32>
    %73 = vector.extract_strided_slice %8 {offsets = [0, 24], sizes = [8, 8], strides = [1, 1]} : vector<8x32xf32> to vector<8x8xf32>
    %74 = vector.extract_strided_slice %7 {offsets = [24, 0], sizes = [8, 8], strides = [1, 1]} : vector<64x16xf32> to vector<8x8xf32>
    %75 = vector.extract_strided_slice %7 {offsets = [56, 0], sizes = [8, 8], strides = [1, 1]} : vector<64x16xf32> to vector<8x8xf32>
    %cst_33 = arith.constant dense<0.000000e+00> : vector<8x8xf32>
    %76 = tpu.matmul %73, %74, %cst_33 {dimension_numbers = #tpu.dot_dimension_numbers<[1], [0], [0], [1], [0, 0, 1, 1], [], []>} : vector<8x8xf32>, vector<8x8xf32>, vector<8x8xf32> -> vector<8x8xf32>
    %cst_34 = arith.constant 0.353553385 : f32
    %77 = vector.broadcast %cst_34 : f32 to vector<8x8xf32>
    %78 = arith.mulf %76, %77 : vector<8x8xf32>
    %79 = arith.addf %78, %10 : vector<8x8xf32>
    %cst_35 = arith.constant dense<0xFF800000> : vector<8xf32>
    %80 = vector.multi_reduction <maximumf>, %79, %cst_35 [1] : vector<8x8xf32> to vector<8xf32>
    %81 = vector.shape_cast %80 : vector<8xf32> to vector<8x1xf32>
    %82 = vector.broadcast %81 : vector<8x1xf32> to vector<8x8xf32>
    %83 = arith.subf %79, %82 : vector<8x8xf32>
    %84 = math.exp %83 : vector<8x8xf32>
    %cst_36 = arith.constant dense<0.000000e+00> : vector<8xf32>
    %85 = vector.multi_reduction <add>, %84, %cst_36 [1] : vector<8x8xf32> to vector<8xf32>
    %86 = vector.shape_cast %85 : vector<8xf32> to vector<8x1xf32>
    %87 = tpu.reciprocal %86 {approx = true} : vector<8x1xf32> -> vector<8x1xf32>
    %88 = vector.broadcast %87 : vector<8x1xf32> to vector<8x8xf32>
    %89 = arith.mulf %84, %88 : vector<8x8xf32>
    %cst_37 = arith.constant dense<0.000000e+00> : vector<8x8xf32>
    %90 = tpu.matmul %89, %75, %cst_37 {dimension_numbers = #tpu.dot_dimension_numbers<[1], [1], [0], [0], [0, 0, 1, 0], [], []>} : vector<8x8xf32>, vector<8x8xf32>, vector<8x8xf32> -> vector<8x8xf32>
    %c120 = arith.constant 120 : index
    %c0_38 = arith.constant 0 : index
    %91 = vector.load %arg5[%c120, %c0_38] : memref<384x32xf32, #tpu.memory_space<vmem>>, vector<8x32xf32>
    %cst_39 = arith.constant dense<0.000000e+00> : vector<8x32xf32>
    %92 = tpu.matmul %90, %91, %cst_39 {dimension_numbers = #tpu.dot_dimension_numbers<[1], [0], [0], [1], [0, 0, 1, 1], [], []>} : vector<8x8xf32>, vector<8x32xf32>, vector<8x32xf32> -> vector<8x32xf32>
    %93 = arith.addf %72, %92 : vector<8x32xf32>
    %94 = vector.extract_strided_slice %5 {offsets = [8, 0], sizes = [8, 32], strides = [1, 1]} : vector<16x32xf32> to vector<8x32xf32>
    %c1 = arith.constant 1 : index
    %c0_40 = arith.constant 0 : index
    %c0_41 = arith.constant 0 : index
    %95 = vector.load %arg3[%c1, %c0_40, %c0_41] : memref<2x8x8xf32, #tpu.memory_space<vmem>>, vector<1x8x8xf32>
    %96 = vector.shape_cast %95 : vector<1x8x8xf32> to vector<8x8xf32>
    %97 = vector.extract_strided_slice %94 {offsets = [0, 0], sizes = [8, 8], strides = [1, 1]} : vector<8x32xf32> to vector<8x8xf32>
    %98 = vector.extract_strided_slice %7 {offsets = [0, 8], sizes = [8, 8], strides = [1, 1]} : vector<64x16xf32> to vector<8x8xf32>
    %99 = vector.extract_strided_slice %7 {offsets = [32, 8], sizes = [8, 8], strides = [1, 1]} : vector<64x16xf32> to vector<8x8xf32>
    %cst_42 = arith.constant dense<0.000000e+00> : vector<8x8xf32>
    %100 = tpu.matmul %97, %98, %cst_42 {dimension_numbers = #tpu.dot_dimension_numbers<[1], [0], [0], [1], [0, 0, 1, 1], [], []>} : vector<8x8xf32>, vector<8x8xf32>, vector<8x8xf32> -> vector<8x8xf32>
    %cst_43 = arith.constant 0.353553385 : f32
    %101 = vector.broadcast %cst_43 : f32 to vector<8x8xf32>
    %102 = arith.mulf %100, %101 : vector<8x8xf32>
    %103 = arith.addf %102, %96 : vector<8x8xf32>
    %cst_44 = arith.constant dense<0xFF800000> : vector<8xf32>
    %104 = vector.multi_reduction <maximumf>, %103, %cst_44 [1] : vector<8x8xf32> to vector<8xf32>
    %105 = vector.shape_cast %104 : vector<8xf32> to vector<8x1xf32>
    %106 = vector.broadcast %105 : vector<8x1xf32> to vector<8x8xf32>
    %107 = arith.subf %103, %106 : vector<8x8xf32>
    %108 = math.exp %107 : vector<8x8xf32>
    %cst_45 = arith.constant dense<0.000000e+00> : vector<8xf32>
    %109 = vector.multi_reduction <add>, %108, %cst_45 [1] : vector<8x8xf32> to vector<8xf32>
    %110 = vector.shape_cast %109 : vector<8xf32> to vector<8x1xf32>
    %111 = tpu.reciprocal %110 {approx = true} : vector<8x1xf32> -> vector<8x1xf32>
    %112 = vector.broadcast %111 : vector<8x1xf32> to vector<8x8xf32>
    %113 = arith.mulf %108, %112 : vector<8x8xf32>
    %cst_46 = arith.constant dense<0.000000e+00> : vector<8x8xf32>
    %114 = tpu.matmul %113, %99, %cst_46 {dimension_numbers = #tpu.dot_dimension_numbers<[1], [1], [0], [0], [0, 0, 1, 0], [], []>} : vector<8x8xf32>, vector<8x8xf32>, vector<8x8xf32> -> vector<8x8xf32>
    %c96_47 = arith.constant 96 : index
    %c0_48 = arith.constant 0 : index
    %115 = vector.load %arg5[%c96_47, %c0_48] : memref<384x32xf32, #tpu.memory_space<vmem>>, vector<8x32xf32>
    %cst_49 = arith.constant dense<0.000000e+00> : vector<8x32xf32>
    %116 = tpu.matmul %114, %115, %cst_49 {dimension_numbers = #tpu.dot_dimension_numbers<[1], [0], [0], [1], [0, 0, 1, 1], [], []>} : vector<8x8xf32>, vector<8x32xf32>, vector<8x32xf32> -> vector<8x32xf32>
    %117 = vector.extract_strided_slice %94 {offsets = [0, 8], sizes = [8, 8], strides = [1, 1]} : vector<8x32xf32> to vector<8x8xf32>
    %118 = vector.extract_strided_slice %7 {offsets = [8, 8], sizes = [8, 8], strides = [1, 1]} : vector<64x16xf32> to vector<8x8xf32>
    %119 = vector.extract_strided_slice %7 {offsets = [40, 8], sizes = [8, 8], strides = [1, 1]} : vector<64x16xf32> to vector<8x8xf32>
    %cst_50 = arith.constant dense<0.000000e+00> : vector<8x8xf32>
    %120 = tpu.matmul %117, %118, %cst_50 {dimension_numbers = #tpu.dot_dimension_numbers<[1], [0], [0], [1], [0, 0, 1, 1], [], []>} : vector<8x8xf32>, vector<8x8xf32>, vector<8x8xf32> -> vector<8x8xf32>
    %cst_51 = arith.constant 0.353553385 : f32
    %121 = vector.broadcast %cst_51 : f32 to vector<8x8xf32>
    %122 = arith.mulf %120, %121 : vector<8x8xf32>
    %123 = arith.addf %122, %96 : vector<8x8xf32>
    %cst_52 = arith.constant dense<0xFF800000> : vector<8xf32>
    %124 = vector.multi_reduction <maximumf>, %123, %cst_52 [1] : vector<8x8xf32> to vector<8xf32>
    %125 = vector.shape_cast %124 : vector<8xf32> to vector<8x1xf32>
    %126 = vector.broadcast %125 : vector<8x1xf32> to vector<8x8xf32>
    %127 = arith.subf %123, %126 : vector<8x8xf32>
    %128 = math.exp %127 : vector<8x8xf32>
    %cst_53 = arith.constant dense<0.000000e+00> : vector<8xf32>
    %129 = vector.multi_reduction <add>, %128, %cst_53 [1] : vector<8x8xf32> to vector<8xf32>
    %130 = vector.shape_cast %129 : vector<8xf32> to vector<8x1xf32>
    %131 = tpu.reciprocal %130 {approx = true} : vector<8x1xf32> -> vector<8x1xf32>
    %132 = vector.broadcast %131 : vector<8x1xf32> to vector<8x8xf32>
    %133 = arith.mulf %128, %132 : vector<8x8xf32>
    %cst_54 = arith.constant dense<0.000000e+00> : vector<8x8xf32>
    %134 = tpu.matmul %133, %119, %cst_54 {dimension_numbers = #tpu.dot_dimension_numbers<[1], [1], [0], [0], [0, 0, 1, 0], [], []>} : vector<8x8xf32>, vector<8x8xf32>, vector<8x8xf32> -> vector<8x8xf32>
    %c104_55 = arith.constant 104 : index
    %c0_56 = arith.constant 0 : index
    %135 = vector.load %arg5[%c104_55, %c0_56] : memref<384x32xf32, #tpu.memory_space<vmem>>, vector<8x32xf32>
    %cst_57 = arith.constant dense<0.000000e+00> : vector<8x32xf32>
    %136 = tpu.matmul %134, %135, %cst_57 {dimension_numbers = #tpu.dot_dimension_numbers<[1], [0], [0], [1], [0, 0, 1, 1], [], []>} : vector<8x8xf32>, vector<8x32xf32>, vector<8x32xf32> -> vector<8x32xf32>
    %137 = arith.addf %116, %136 : vector<8x32xf32>
    %138 = vector.extract_strided_slice %94 {offsets = [0, 16], sizes = [8, 8], strides = [1, 1]} : vector<8x32xf32> to vector<8x8xf32>
    %139 = vector.extract_strided_slice %7 {offsets = [16, 8], sizes = [8, 8], strides = [1, 1]} : vector<64x16xf32> to vector<8x8xf32>
    %140 = vector.extract_strided_slice %7 {offsets = [48, 8], sizes = [8, 8], strides = [1, 1]} : vector<64x16xf32> to vector<8x8xf32>
    %cst_58 = arith.constant dense<0.000000e+00> : vector<8x8xf32>
    %141 = tpu.matmul %138, %139, %cst_58 {dimension_numbers = #tpu.dot_dimension_numbers<[1], [0], [0], [1], [0, 0, 1, 1], [], []>} : vector<8x8xf32>, vector<8x8xf32>, vector<8x8xf32> -> vector<8x8xf32>
    %cst_59 = arith.constant 0.353553385 : f32
    %142 = vector.broadcast %cst_59 : f32 to vector<8x8xf32>
    %143 = arith.mulf %141, %142 : vector<8x8xf32>
    %144 = arith.addf %143, %96 : vector<8x8xf32>
    %cst_60 = arith.constant dense<0xFF800000> : vector<8xf32>
    %145 = vector.multi_reduction <maximumf>, %144, %cst_60 [1] : vector<8x8xf32> to vector<8xf32>
    %146 = vector.shape_cast %145 : vector<8xf32> to vector<8x1xf32>
    %147 = vector.broadcast %146 : vector<8x1xf32> to vector<8x8xf32>
    %148 = arith.subf %144, %147 : vector<8x8xf32>
    %149 = math.exp %148 : vector<8x8xf32>
    %cst_61 = arith.constant dense<0.000000e+00> : vector<8xf32>
    %150 = vector.multi_reduction <add>, %149, %cst_61 [1] : vector<8x8xf32> to vector<8xf32>
    %151 = vector.shape_cast %150 : vector<8xf32> to vector<8x1xf32>
    %152 = tpu.reciprocal %151 {approx = true} : vector<8x1xf32> -> vector<8x1xf32>
    %153 = vector.broadcast %152 : vector<8x1xf32> to vector<8x8xf32>
    %154 = arith.mulf %149, %153 : vector<8x8xf32>
    %cst_62 = arith.constant dense<0.000000e+00> : vector<8x8xf32>
    %155 = tpu.matmul %154, %140, %cst_62 {dimension_numbers = #tpu.dot_dimension_numbers<[1], [1], [0], [0], [0, 0, 1, 0], [], []>} : vector<8x8xf32>, vector<8x8xf32>, vector<8x8xf32> -> vector<8x8xf32>
    %c112_63 = arith.constant 112 : index
    %c0_64 = arith.constant 0 : index
    %156 = vector.load %arg5[%c112_63, %c0_64] : memref<384x32xf32, #tpu.memory_space<vmem>>, vector<8x32xf32>
    %cst_65 = arith.constant dense<0.000000e+00> : vector<8x32xf32>
    %157 = tpu.matmul %155, %156, %cst_65 {dimension_numbers = #tpu.dot_dimension_numbers<[1], [0], [0], [1], [0, 0, 1, 1], [], []>} : vector<8x8xf32>, vector<8x32xf32>, vector<8x32xf32> -> vector<8x32xf32>
    %158 = arith.addf %137, %157 : vector<8x32xf32>
    %159 = vector.extract_strided_slice %94 {offsets = [0, 24], sizes = [8, 8], strides = [1, 1]} : vector<8x32xf32> to vector<8x8xf32>
    %160 = vector.extract_strided_slice %7 {offsets = [24, 8], sizes = [8, 8], strides = [1, 1]} : vector<64x16xf32> to vector<8x8xf32>
    %161 = vector.extract_strided_slice %7 {offsets = [56, 8], sizes = [8, 8], strides = [1, 1]} : vector<64x16xf32> to vector<8x8xf32>
    %cst_66 = arith.constant dense<0.000000e+00> : vector<8x8xf32>
    %162 = tpu.matmul %159, %160, %cst_66 {dimension_numbers = #tpu.dot_dimension_numbers<[1], [0], [0], [1], [0, 0, 1, 1], [], []>} : vector<8x8xf32>, vector<8x8xf32>, vector<8x8xf32> -> vector<8x8xf32>
    %cst_67 = arith.constant 0.353553385 : f32
    %163 = vector.broadcast %cst_67 : f32 to vector<8x8xf32>
    %164 = arith.mulf %162, %163 : vector<8x8xf32>
    %165 = arith.addf %164, %96 : vector<8x8xf32>
    %cst_68 = arith.constant dense<0xFF800000> : vector<8xf32>
    %166 = vector.multi_reduction <maximumf>, %165, %cst_68 [1] : vector<8x8xf32> to vector<8xf32>
    %167 = vector.shape_cast %166 : vector<8xf32> to vector<8x1xf32>
    %168 = vector.broadcast %167 : vector<8x1xf32> to vector<8x8xf32>
    %169 = arith.subf %165, %168 : vector<8x8xf32>
    %170 = math.exp %169 : vector<8x8xf32>
    %cst_69 = arith.constant dense<0.000000e+00> : vector<8xf32>
    %171 = vector.multi_reduction <add>, %170, %cst_69 [1] : vector<8x8xf32> to vector<8xf32>
    %172 = vector.shape_cast %171 : vector<8xf32> to vector<8x1xf32>
    %173 = tpu.reciprocal %172 {approx = true} : vector<8x1xf32> -> vector<8x1xf32>
    %174 = vector.broadcast %173 : vector<8x1xf32> to vector<8x8xf32>
    %175 = arith.mulf %170, %174 : vector<8x8xf32>
    %cst_70 = arith.constant dense<0.000000e+00> : vector<8x8xf32>
    %176 = tpu.matmul %175, %161, %cst_70 {dimension_numbers = #tpu.dot_dimension_numbers<[1], [1], [0], [0], [0, 0, 1, 0], [], []>} : vector<8x8xf32>, vector<8x8xf32>, vector<8x8xf32> -> vector<8x8xf32>
    %c120_71 = arith.constant 120 : index
    %c0_72 = arith.constant 0 : index
    %177 = vector.load %arg5[%c120_71, %c0_72] : memref<384x32xf32, #tpu.memory_space<vmem>>, vector<8x32xf32>
    %cst_73 = arith.constant dense<0.000000e+00> : vector<8x32xf32>
    %178 = tpu.matmul %176, %177, %cst_73 {dimension_numbers = #tpu.dot_dimension_numbers<[1], [0], [0], [1], [0, 0, 1, 1], [], []>} : vector<8x8xf32>, vector<8x32xf32>, vector<8x32xf32> -> vector<8x32xf32>
    %179 = arith.addf %158, %178 : vector<8x32xf32>
    %180 = tpu.concatenate %93, %179 in 0 : vector<8x32xf32>, vector<8x32xf32> -> vector<16x32xf32>
    %181 = arith.addf %1, %180 : vector<16x32xf32>
    %c0_74 = arith.constant 0 : index
    %c0_75 = arith.constant 0 : index
    %182 = vector.load %arg6[%c0_74, %c0_75] : memref<8x64xf32, #tpu.memory_space<vmem>>, vector<1x32xf32>
    %c1_76 = arith.constant 1 : index
    %c0_77 = arith.constant 0 : index
    %183 = vector.load %arg6[%c1_76, %c0_77] : memref<8x64xf32, #tpu.memory_space<vmem>>, vector<1x32xf32>
    %cst_78 = arith.constant dense<0.000000e+00> : vector<16xf32>
    %184 = vector.multi_reduction <add>, %181, %cst_78 [1] : vector<16x32xf32> to vector<16xf32>
    %185 = vector.shape_cast %184 : vector<16xf32> to vector<16x1xf32>
    %cst_79 = arith.constant 3.200000e+01 : f32
    %186 = vector.broadcast %cst_79 : f32 to vector<16x1xf32>
    %187 = arith.divf %185, %186 : vector<16x1xf32>
    %188 = vector.broadcast %187 : vector<16x1xf32> to vector<16x32xf32>
    %189 = arith.subf %181, %188 : vector<16x32xf32>
    %190 = arith.mulf %189, %189 : vector<16x32xf32>
    %cst_80 = arith.constant dense<0.000000e+00> : vector<16xf32>
    %191 = vector.multi_reduction <add>, %190, %cst_80 [1] : vector<16x32xf32> to vector<16xf32>
    %192 = vector.shape_cast %191 : vector<16xf32> to vector<16x1xf32>
    %cst_81 = arith.constant 3.200000e+01 : f32
    %193 = vector.broadcast %cst_81 : f32 to vector<16x1xf32>
    %194 = arith.divf %192, %193 : vector<16x1xf32>
    %195 = vector.broadcast %187 : vector<16x1xf32> to vector<16x32xf32>
    %196 = arith.subf %181, %195 : vector<16x32xf32>
    %cst_82 = arith.constant 9.99999974E-6 : f32
    %197 = vector.broadcast %cst_82 : f32 to vector<16x1xf32>
    %198 = arith.addf %194, %197 : vector<16x1xf32>
    %199 = math.rsqrt %198 : vector<16x1xf32>
    %200 = vector.broadcast %199 : vector<16x1xf32> to vector<16x32xf32>
    %201 = arith.mulf %196, %200 : vector<16x32xf32>
    %202 = vector.broadcast %182 : vector<1x32xf32> to vector<16x32xf32>
    %203 = arith.mulf %201, %202 : vector<16x32xf32>
    %204 = vector.broadcast %183 : vector<1x32xf32> to vector<16x32xf32>
    %205 = arith.addf %203, %204 : vector<16x32xf32>
    %c128 = arith.constant 128 : index
    %c0_83 = arith.constant 0 : index
    %206 = vector.load %arg5[%c128, %c0_83] : memref<384x32xf32, #tpu.memory_space<vmem>>, vector<32x32xf32>
    %cst_84 = arith.constant dense<0.000000e+00> : vector<16x32xf32>
    %207 = tpu.matmul %205, %206, %cst_84 {dimension_numbers = #tpu.dot_dimension_numbers<[1], [0], [0], [1], [0, 0, 1, 1], [], []>} : vector<16x32xf32>, vector<32x32xf32>, vector<16x32xf32> -> vector<16x32xf32>
    %c160 = arith.constant 160 : index
    %c0_85 = arith.constant 0 : index
    %208 = vector.load %arg5[%c160, %c0_85] : memref<384x32xf32, #tpu.memory_space<vmem>>, vector<64x32xf32>
    %cst_86 = arith.constant dense<0.000000e+00> : vector<64x32xf32>
    %209 = tpu.matmul %208, %3, %cst_86 {dimension_numbers = #tpu.dot_dimension_numbers<[1], [1], [0], [0], [0, 0, 1, 0], [], []>} : vector<64x32xf32>, vector<32x32xf32>, vector<64x32xf32> -> vector<64x32xf32>
    %210 = vector.extract_strided_slice %207 {offsets = [0, 0], sizes = [8, 32], strides = [1, 1]} : vector<16x32xf32> to vector<8x32xf32>
    %c0_87 = arith.constant 0 : index
    %c0_88 = arith.constant 0 : index
    %c0_89 = arith.constant 0 : index
    %211 = vector.load %arg4[%c0_87, %c0_88, %c0_89] : memref<2x8x16xf32, #tpu.memory_space<vmem>>, vector<1x8x16xf32>
    %212 = vector.shape_cast %211 : vector<1x8x16xf32> to vector<8x16xf32>
    %213 = vector.extract_strided_slice %210 {offsets = [0, 0], sizes = [8, 8], strides = [1, 1]} : vector<8x32xf32> to vector<8x8xf32>
    %214 = vector.extract_strided_slice %209 {offsets = [0, 0], sizes = [8, 16], strides = [1, 1]} : vector<64x32xf32> to vector<8x16xf32>
    %215 = vector.extract_strided_slice %209 {offsets = [32, 0], sizes = [8, 16], strides = [1, 1]} : vector<64x32xf32> to vector<8x16xf32>
    %cst_90 = arith.constant dense<0.000000e+00> : vector<8x16xf32>
    %216 = tpu.matmul %213, %214, %cst_90 {dimension_numbers = #tpu.dot_dimension_numbers<[1], [0], [0], [1], [0, 0, 1, 1], [], []>} : vector<8x8xf32>, vector<8x16xf32>, vector<8x16xf32> -> vector<8x16xf32>
    %cst_91 = arith.constant 0.353553385 : f32
    %217 = vector.broadcast %cst_91 : f32 to vector<8x16xf32>
    %218 = arith.mulf %216, %217 : vector<8x16xf32>
    %219 = arith.addf %218, %212 : vector<8x16xf32>
    %cst_92 = arith.constant dense<0xFF800000> : vector<8xf32>
    %220 = vector.multi_reduction <maximumf>, %219, %cst_92 [1] : vector<8x16xf32> to vector<8xf32>
    %221 = vector.shape_cast %220 : vector<8xf32> to vector<8x1xf32>
    %222 = vector.broadcast %221 : vector<8x1xf32> to vector<8x16xf32>
    %223 = arith.subf %219, %222 : vector<8x16xf32>
    %224 = math.exp %223 : vector<8x16xf32>
    %cst_93 = arith.constant dense<0.000000e+00> : vector<8xf32>
    %225 = vector.multi_reduction <add>, %224, %cst_93 [1] : vector<8x16xf32> to vector<8xf32>
    %226 = vector.shape_cast %225 : vector<8xf32> to vector<8x1xf32>
    %227 = tpu.reciprocal %226 {approx = true} : vector<8x1xf32> -> vector<8x1xf32>
    %228 = vector.broadcast %227 : vector<8x1xf32> to vector<8x16xf32>
    %229 = arith.mulf %224, %228 : vector<8x16xf32>
    %cst_94 = arith.constant dense<0.000000e+00> : vector<8x8xf32>
    %230 = tpu.matmul %229, %215, %cst_94 {dimension_numbers = #tpu.dot_dimension_numbers<[1], [1], [0], [0], [0, 0, 1, 0], [], []>} : vector<8x16xf32>, vector<8x16xf32>, vector<8x8xf32> -> vector<8x8xf32>
    %c224 = arith.constant 224 : index
    %c0_95 = arith.constant 0 : index
    %231 = vector.load %arg5[%c224, %c0_95] : memref<384x32xf32, #tpu.memory_space<vmem>>, vector<8x32xf32>
    %cst_96 = arith.constant dense<0.000000e+00> : vector<8x32xf32>
    %232 = tpu.matmul %230, %231, %cst_96 {dimension_numbers = #tpu.dot_dimension_numbers<[1], [0], [0], [1], [0, 0, 1, 1], [], []>} : vector<8x8xf32>, vector<8x32xf32>, vector<8x32xf32> -> vector<8x32xf32>
    %233 = vector.extract_strided_slice %210 {offsets = [0, 8], sizes = [8, 8], strides = [1, 1]} : vector<8x32xf32> to vector<8x8xf32>
    %234 = vector.extract_strided_slice %209 {offsets = [8, 0], sizes = [8, 16], strides = [1, 1]} : vector<64x32xf32> to vector<8x16xf32>
    %235 = vector.extract_strided_slice %209 {offsets = [40, 0], sizes = [8, 16], strides = [1, 1]} : vector<64x32xf32> to vector<8x16xf32>
    %cst_97 = arith.constant dense<0.000000e+00> : vector<8x16xf32>
    %236 = tpu.matmul %233, %234, %cst_97 {dimension_numbers = #tpu.dot_dimension_numbers<[1], [0], [0], [1], [0, 0, 1, 1], [], []>} : vector<8x8xf32>, vector<8x16xf32>, vector<8x16xf32> -> vector<8x16xf32>
    %cst_98 = arith.constant 0.353553385 : f32
    %237 = vector.broadcast %cst_98 : f32 to vector<8x16xf32>
    %238 = arith.mulf %236, %237 : vector<8x16xf32>
    %239 = arith.addf %238, %212 : vector<8x16xf32>
    %cst_99 = arith.constant dense<0xFF800000> : vector<8xf32>
    %240 = vector.multi_reduction <maximumf>, %239, %cst_99 [1] : vector<8x16xf32> to vector<8xf32>
    %241 = vector.shape_cast %240 : vector<8xf32> to vector<8x1xf32>
    %242 = vector.broadcast %241 : vector<8x1xf32> to vector<8x16xf32>
    %243 = arith.subf %239, %242 : vector<8x16xf32>
    %244 = math.exp %243 : vector<8x16xf32>
    %cst_100 = arith.constant dense<0.000000e+00> : vector<8xf32>
    %245 = vector.multi_reduction <add>, %244, %cst_100 [1] : vector<8x16xf32> to vector<8xf32>
    %246 = vector.shape_cast %245 : vector<8xf32> to vector<8x1xf32>
    %247 = tpu.reciprocal %246 {approx = true} : vector<8x1xf32> -> vector<8x1xf32>
    %248 = vector.broadcast %247 : vector<8x1xf32> to vector<8x16xf32>
    %249 = arith.mulf %244, %248 : vector<8x16xf32>
    %cst_101 = arith.constant dense<0.000000e+00> : vector<8x8xf32>
    %250 = tpu.matmul %249, %235, %cst_101 {dimension_numbers = #tpu.dot_dimension_numbers<[1], [1], [0], [0], [0, 0, 1, 0], [], []>} : vector<8x16xf32>, vector<8x16xf32>, vector<8x8xf32> -> vector<8x8xf32>
    %c232 = arith.constant 232 : index
    %c0_102 = arith.constant 0 : index
    %251 = vector.load %arg5[%c232, %c0_102] : memref<384x32xf32, #tpu.memory_space<vmem>>, vector<8x32xf32>
    %cst_103 = arith.constant dense<0.000000e+00> : vector<8x32xf32>
    %252 = tpu.matmul %250, %251, %cst_103 {dimension_numbers = #tpu.dot_dimension_numbers<[1], [0], [0], [1], [0, 0, 1, 1], [], []>} : vector<8x8xf32>, vector<8x32xf32>, vector<8x32xf32> -> vector<8x32xf32>
    %253 = arith.addf %232, %252 : vector<8x32xf32>
    %254 = vector.extract_strided_slice %210 {offsets = [0, 16], sizes = [8, 8], strides = [1, 1]} : vector<8x32xf32> to vector<8x8xf32>
    %255 = vector.extract_strided_slice %209 {offsets = [16, 0], sizes = [8, 16], strides = [1, 1]} : vector<64x32xf32> to vector<8x16xf32>
    %256 = vector.extract_strided_slice %209 {offsets = [48, 0], sizes = [8, 16], strides = [1, 1]} : vector<64x32xf32> to vector<8x16xf32>
    %cst_104 = arith.constant dense<0.000000e+00> : vector<8x16xf32>
    %257 = tpu.matmul %254, %255, %cst_104 {dimension_numbers = #tpu.dot_dimension_numbers<[1], [0], [0], [1], [0, 0, 1, 1], [], []>} : vector<8x8xf32>, vector<8x16xf32>, vector<8x16xf32> -> vector<8x16xf32>
    %cst_105 = arith.constant 0.353553385 : f32
    %258 = vector.broadcast %cst_105 : f32 to vector<8x16xf32>
    %259 = arith.mulf %257, %258 : vector<8x16xf32>
    %260 = arith.addf %259, %212 : vector<8x16xf32>
    %cst_106 = arith.constant dense<0xFF800000> : vector<8xf32>
    %261 = vector.multi_reduction <maximumf>, %260, %cst_106 [1] : vector<8x16xf32> to vector<8xf32>
    %262 = vector.shape_cast %261 : vector<8xf32> to vector<8x1xf32>
    %263 = vector.broadcast %262 : vector<8x1xf32> to vector<8x16xf32>
    %264 = arith.subf %260, %263 : vector<8x16xf32>
    %265 = math.exp %264 : vector<8x16xf32>
    %cst_107 = arith.constant dense<0.000000e+00> : vector<8xf32>
    %266 = vector.multi_reduction <add>, %265, %cst_107 [1] : vector<8x16xf32> to vector<8xf32>
    %267 = vector.shape_cast %266 : vector<8xf32> to vector<8x1xf32>
    %268 = tpu.reciprocal %267 {approx = true} : vector<8x1xf32> -> vector<8x1xf32>
    %269 = vector.broadcast %268 : vector<8x1xf32> to vector<8x16xf32>
    %270 = arith.mulf %265, %269 : vector<8x16xf32>
    %cst_108 = arith.constant dense<0.000000e+00> : vector<8x8xf32>
    %271 = tpu.matmul %270, %256, %cst_108 {dimension_numbers = #tpu.dot_dimension_numbers<[1], [1], [0], [0], [0, 0, 1, 0], [], []>} : vector<8x16xf32>, vector<8x16xf32>, vector<8x8xf32> -> vector<8x8xf32>
    %c240 = arith.constant 240 : index
    %c0_109 = arith.constant 0 : index
    %272 = vector.load %arg5[%c240, %c0_109] : memref<384x32xf32, #tpu.memory_space<vmem>>, vector<8x32xf32>
    %cst_110 = arith.constant dense<0.000000e+00> : vector<8x32xf32>
    %273 = tpu.matmul %271, %272, %cst_110 {dimension_numbers = #tpu.dot_dimension_numbers<[1], [0], [0], [1], [0, 0, 1, 1], [], []>} : vector<8x8xf32>, vector<8x32xf32>, vector<8x32xf32> -> vector<8x32xf32>
    %274 = arith.addf %253, %273 : vector<8x32xf32>
    %275 = vector.extract_strided_slice %210 {offsets = [0, 24], sizes = [8, 8], strides = [1, 1]} : vector<8x32xf32> to vector<8x8xf32>
    %276 = vector.extract_strided_slice %209 {offsets = [24, 0], sizes = [8, 16], strides = [1, 1]} : vector<64x32xf32> to vector<8x16xf32>
    %277 = vector.extract_strided_slice %209 {offsets = [56, 0], sizes = [8, 16], strides = [1, 1]} : vector<64x32xf32> to vector<8x16xf32>
    %cst_111 = arith.constant dense<0.000000e+00> : vector<8x16xf32>
    %278 = tpu.matmul %275, %276, %cst_111 {dimension_numbers = #tpu.dot_dimension_numbers<[1], [0], [0], [1], [0, 0, 1, 1], [], []>} : vector<8x8xf32>, vector<8x16xf32>, vector<8x16xf32> -> vector<8x16xf32>
    %cst_112 = arith.constant 0.353553385 : f32
    %279 = vector.broadcast %cst_112 : f32 to vector<8x16xf32>
    %280 = arith.mulf %278, %279 : vector<8x16xf32>
    %281 = arith.addf %280, %212 : vector<8x16xf32>
    %cst_113 = arith.constant dense<0xFF800000> : vector<8xf32>
    %282 = vector.multi_reduction <maximumf>, %281, %cst_113 [1] : vector<8x16xf32> to vector<8xf32>
    %283 = vector.shape_cast %282 : vector<8xf32> to vector<8x1xf32>
    %284 = vector.broadcast %283 : vector<8x1xf32> to vector<8x16xf32>
    %285 = arith.subf %281, %284 : vector<8x16xf32>
    %286 = math.exp %285 : vector<8x16xf32>
    %cst_114 = arith.constant dense<0.000000e+00> : vector<8xf32>
    %287 = vector.multi_reduction <add>, %286, %cst_114 [1] : vector<8x16xf32> to vector<8xf32>
    %288 = vector.shape_cast %287 : vector<8xf32> to vector<8x1xf32>
    %289 = tpu.reciprocal %288 {approx = true} : vector<8x1xf32> -> vector<8x1xf32>
    %290 = vector.broadcast %289 : vector<8x1xf32> to vector<8x16xf32>
    %291 = arith.mulf %286, %290 : vector<8x16xf32>
    %cst_115 = arith.constant dense<0.000000e+00> : vector<8x8xf32>
    %292 = tpu.matmul %291, %277, %cst_115 {dimension_numbers = #tpu.dot_dimension_numbers<[1], [1], [0], [0], [0, 0, 1, 0], [], []>} : vector<8x16xf32>, vector<8x16xf32>, vector<8x8xf32> -> vector<8x8xf32>
    %c248 = arith.constant 248 : index
    %c0_116 = arith.constant 0 : index
    %293 = vector.load %arg5[%c248, %c0_116] : memref<384x32xf32, #tpu.memory_space<vmem>>, vector<8x32xf32>
    %cst_117 = arith.constant dense<0.000000e+00> : vector<8x32xf32>
    %294 = tpu.matmul %292, %293, %cst_117 {dimension_numbers = #tpu.dot_dimension_numbers<[1], [0], [0], [1], [0, 0, 1, 1], [], []>} : vector<8x8xf32>, vector<8x32xf32>, vector<8x32xf32> -> vector<8x32xf32>
    %295 = arith.addf %274, %294 : vector<8x32xf32>
    %296 = vector.extract_strided_slice %207 {offsets = [8, 0], sizes = [8, 32], strides = [1, 1]} : vector<16x32xf32> to vector<8x32xf32>
    %c1_118 = arith.constant 1 : index
    %c0_119 = arith.constant 0 : index
    %c0_120 = arith.constant 0 : index
    %297 = vector.load %arg4[%c1_118, %c0_119, %c0_120] : memref<2x8x16xf32, #tpu.memory_space<vmem>>, vector<1x8x16xf32>
    %298 = vector.shape_cast %297 : vector<1x8x16xf32> to vector<8x16xf32>
    %299 = vector.extract_strided_slice %296 {offsets = [0, 0], sizes = [8, 8], strides = [1, 1]} : vector<8x32xf32> to vector<8x8xf32>
    %300 = vector.extract_strided_slice %209 {offsets = [0, 16], sizes = [8, 16], strides = [1, 1]} : vector<64x32xf32> to vector<8x16xf32>
    %301 = vector.extract_strided_slice %209 {offsets = [32, 16], sizes = [8, 16], strides = [1, 1]} : vector<64x32xf32> to vector<8x16xf32>
    %cst_121 = arith.constant dense<0.000000e+00> : vector<8x16xf32>
    %302 = tpu.matmul %299, %300, %cst_121 {dimension_numbers = #tpu.dot_dimension_numbers<[1], [0], [0], [1], [0, 0, 1, 1], [], []>} : vector<8x8xf32>, vector<8x16xf32>, vector<8x16xf32> -> vector<8x16xf32>
    %cst_122 = arith.constant 0.353553385 : f32
    %303 = vector.broadcast %cst_122 : f32 to vector<8x16xf32>
    %304 = arith.mulf %302, %303 : vector<8x16xf32>
    %305 = arith.addf %304, %298 : vector<8x16xf32>
    %cst_123 = arith.constant dense<0xFF800000> : vector<8xf32>
    %306 = vector.multi_reduction <maximumf>, %305, %cst_123 [1] : vector<8x16xf32> to vector<8xf32>
    %307 = vector.shape_cast %306 : vector<8xf32> to vector<8x1xf32>
    %308 = vector.broadcast %307 : vector<8x1xf32> to vector<8x16xf32>
    %309 = arith.subf %305, %308 : vector<8x16xf32>
    %310 = math.exp %309 : vector<8x16xf32>
    %cst_124 = arith.constant dense<0.000000e+00> : vector<8xf32>
    %311 = vector.multi_reduction <add>, %310, %cst_124 [1] : vector<8x16xf32> to vector<8xf32>
    %312 = vector.shape_cast %311 : vector<8xf32> to vector<8x1xf32>
    %313 = tpu.reciprocal %312 {approx = true} : vector<8x1xf32> -> vector<8x1xf32>
    %314 = vector.broadcast %313 : vector<8x1xf32> to vector<8x16xf32>
    %315 = arith.mulf %310, %314 : vector<8x16xf32>
    %cst_125 = arith.constant dense<0.000000e+00> : vector<8x8xf32>
    %316 = tpu.matmul %315, %301, %cst_125 {dimension_numbers = #tpu.dot_dimension_numbers<[1], [1], [0], [0], [0, 0, 1, 0], [], []>} : vector<8x16xf32>, vector<8x16xf32>, vector<8x8xf32> -> vector<8x8xf32>
    %c224_126 = arith.constant 224 : index
    %c0_127 = arith.constant 0 : index
    %317 = vector.load %arg5[%c224_126, %c0_127] : memref<384x32xf32, #tpu.memory_space<vmem>>, vector<8x32xf32>
    %cst_128 = arith.constant dense<0.000000e+00> : vector<8x32xf32>
    %318 = tpu.matmul %316, %317, %cst_128 {dimension_numbers = #tpu.dot_dimension_numbers<[1], [0], [0], [1], [0, 0, 1, 1], [], []>} : vector<8x8xf32>, vector<8x32xf32>, vector<8x32xf32> -> vector<8x32xf32>
    %319 = vector.extract_strided_slice %296 {offsets = [0, 8], sizes = [8, 8], strides = [1, 1]} : vector<8x32xf32> to vector<8x8xf32>
    %320 = vector.extract_strided_slice %209 {offsets = [8, 16], sizes = [8, 16], strides = [1, 1]} : vector<64x32xf32> to vector<8x16xf32>
    %321 = vector.extract_strided_slice %209 {offsets = [40, 16], sizes = [8, 16], strides = [1, 1]} : vector<64x32xf32> to vector<8x16xf32>
    %cst_129 = arith.constant dense<0.000000e+00> : vector<8x16xf32>
    %322 = tpu.matmul %319, %320, %cst_129 {dimension_numbers = #tpu.dot_dimension_numbers<[1], [0], [0], [1], [0, 0, 1, 1], [], []>} : vector<8x8xf32>, vector<8x16xf32>, vector<8x16xf32> -> vector<8x16xf32>
    %cst_130 = arith.constant 0.353553385 : f32
    %323 = vector.broadcast %cst_130 : f32 to vector<8x16xf32>
    %324 = arith.mulf %322, %323 : vector<8x16xf32>
    %325 = arith.addf %324, %298 : vector<8x16xf32>
    %cst_131 = arith.constant dense<0xFF800000> : vector<8xf32>
    %326 = vector.multi_reduction <maximumf>, %325, %cst_131 [1] : vector<8x16xf32> to vector<8xf32>
    %327 = vector.shape_cast %326 : vector<8xf32> to vector<8x1xf32>
    %328 = vector.broadcast %327 : vector<8x1xf32> to vector<8x16xf32>
    %329 = arith.subf %325, %328 : vector<8x16xf32>
    %330 = math.exp %329 : vector<8x16xf32>
    %cst_132 = arith.constant dense<0.000000e+00> : vector<8xf32>
    %331 = vector.multi_reduction <add>, %330, %cst_132 [1] : vector<8x16xf32> to vector<8xf32>
    %332 = vector.shape_cast %331 : vector<8xf32> to vector<8x1xf32>
    %333 = tpu.reciprocal %332 {approx = true} : vector<8x1xf32> -> vector<8x1xf32>
    %334 = vector.broadcast %333 : vector<8x1xf32> to vector<8x16xf32>
    %335 = arith.mulf %330, %334 : vector<8x16xf32>
    %cst_133 = arith.constant dense<0.000000e+00> : vector<8x8xf32>
    %336 = tpu.matmul %335, %321, %cst_133 {dimension_numbers = #tpu.dot_dimension_numbers<[1], [1], [0], [0], [0, 0, 1, 0], [], []>} : vector<8x16xf32>, vector<8x16xf32>, vector<8x8xf32> -> vector<8x8xf32>
    %c232_134 = arith.constant 232 : index
    %c0_135 = arith.constant 0 : index
    %337 = vector.load %arg5[%c232_134, %c0_135] : memref<384x32xf32, #tpu.memory_space<vmem>>, vector<8x32xf32>
    %cst_136 = arith.constant dense<0.000000e+00> : vector<8x32xf32>
    %338 = tpu.matmul %336, %337, %cst_136 {dimension_numbers = #tpu.dot_dimension_numbers<[1], [0], [0], [1], [0, 0, 1, 1], [], []>} : vector<8x8xf32>, vector<8x32xf32>, vector<8x32xf32> -> vector<8x32xf32>
    %339 = arith.addf %318, %338 : vector<8x32xf32>
    %340 = vector.extract_strided_slice %296 {offsets = [0, 16], sizes = [8, 8], strides = [1, 1]} : vector<8x32xf32> to vector<8x8xf32>
    %341 = vector.extract_strided_slice %209 {offsets = [16, 16], sizes = [8, 16], strides = [1, 1]} : vector<64x32xf32> to vector<8x16xf32>
    %342 = vector.extract_strided_slice %209 {offsets = [48, 16], sizes = [8, 16], strides = [1, 1]} : vector<64x32xf32> to vector<8x16xf32>
    %cst_137 = arith.constant dense<0.000000e+00> : vector<8x16xf32>
    %343 = tpu.matmul %340, %341, %cst_137 {dimension_numbers = #tpu.dot_dimension_numbers<[1], [0], [0], [1], [0, 0, 1, 1], [], []>} : vector<8x8xf32>, vector<8x16xf32>, vector<8x16xf32> -> vector<8x16xf32>
    %cst_138 = arith.constant 0.353553385 : f32
    %344 = vector.broadcast %cst_138 : f32 to vector<8x16xf32>
    %345 = arith.mulf %343, %344 : vector<8x16xf32>
    %346 = arith.addf %345, %298 : vector<8x16xf32>
    %cst_139 = arith.constant dense<0xFF800000> : vector<8xf32>
    %347 = vector.multi_reduction <maximumf>, %346, %cst_139 [1] : vector<8x16xf32> to vector<8xf32>
    %348 = vector.shape_cast %347 : vector<8xf32> to vector<8x1xf32>
    %349 = vector.broadcast %348 : vector<8x1xf32> to vector<8x16xf32>
    %350 = arith.subf %346, %349 : vector<8x16xf32>
    %351 = math.exp %350 : vector<8x16xf32>
    %cst_140 = arith.constant dense<0.000000e+00> : vector<8xf32>
    %352 = vector.multi_reduction <add>, %351, %cst_140 [1] : vector<8x16xf32> to vector<8xf32>
    %353 = vector.shape_cast %352 : vector<8xf32> to vector<8x1xf32>
    %354 = tpu.reciprocal %353 {approx = true} : vector<8x1xf32> -> vector<8x1xf32>
    %355 = vector.broadcast %354 : vector<8x1xf32> to vector<8x16xf32>
    %356 = arith.mulf %351, %355 : vector<8x16xf32>
    %cst_141 = arith.constant dense<0.000000e+00> : vector<8x8xf32>
    %357 = tpu.matmul %356, %342, %cst_141 {dimension_numbers = #tpu.dot_dimension_numbers<[1], [1], [0], [0], [0, 0, 1, 0], [], []>} : vector<8x16xf32>, vector<8x16xf32>, vector<8x8xf32> -> vector<8x8xf32>
    %c240_142 = arith.constant 240 : index
    %c0_143 = arith.constant 0 : index
    %358 = vector.load %arg5[%c240_142, %c0_143] : memref<384x32xf32, #tpu.memory_space<vmem>>, vector<8x32xf32>
    %cst_144 = arith.constant dense<0.000000e+00> : vector<8x32xf32>
    %359 = tpu.matmul %357, %358, %cst_144 {dimension_numbers = #tpu.dot_dimension_numbers<[1], [0], [0], [1], [0, 0, 1, 1], [], []>} : vector<8x8xf32>, vector<8x32xf32>, vector<8x32xf32> -> vector<8x32xf32>
    %360 = arith.addf %339, %359 : vector<8x32xf32>
    %361 = vector.extract_strided_slice %296 {offsets = [0, 24], sizes = [8, 8], strides = [1, 1]} : vector<8x32xf32> to vector<8x8xf32>
    %362 = vector.extract_strided_slice %209 {offsets = [24, 16], sizes = [8, 16], strides = [1, 1]} : vector<64x32xf32> to vector<8x16xf32>
    %363 = vector.extract_strided_slice %209 {offsets = [56, 16], sizes = [8, 16], strides = [1, 1]} : vector<64x32xf32> to vector<8x16xf32>
    %cst_145 = arith.constant dense<0.000000e+00> : vector<8x16xf32>
    %364 = tpu.matmul %361, %362, %cst_145 {dimension_numbers = #tpu.dot_dimension_numbers<[1], [0], [0], [1], [0, 0, 1, 1], [], []>} : vector<8x8xf32>, vector<8x16xf32>, vector<8x16xf32> -> vector<8x16xf32>
    %cst_146 = arith.constant 0.353553385 : f32
    %365 = vector.broadcast %cst_146 : f32 to vector<8x16xf32>
    %366 = arith.mulf %364, %365 : vector<8x16xf32>
    %367 = arith.addf %366, %298 : vector<8x16xf32>
    %cst_147 = arith.constant dense<0xFF800000> : vector<8xf32>
    %368 = vector.multi_reduction <maximumf>, %367, %cst_147 [1] : vector<8x16xf32> to vector<8xf32>
    %369 = vector.shape_cast %368 : vector<8xf32> to vector<8x1xf32>
    %370 = vector.broadcast %369 : vector<8x1xf32> to vector<8x16xf32>
    %371 = arith.subf %367, %370 : vector<8x16xf32>
    %372 = math.exp %371 : vector<8x16xf32>
    %cst_148 = arith.constant dense<0.000000e+00> : vector<8xf32>
    %373 = vector.multi_reduction <add>, %372, %cst_148 [1] : vector<8x16xf32> to vector<8xf32>
    %374 = vector.shape_cast %373 : vector<8xf32> to vector<8x1xf32>
    %375 = tpu.reciprocal %374 {approx = true} : vector<8x1xf32> -> vector<8x1xf32>
    %376 = vector.broadcast %375 : vector<8x1xf32> to vector<8x16xf32>
    %377 = arith.mulf %372, %376 : vector<8x16xf32>
    %cst_149 = arith.constant dense<0.000000e+00> : vector<8x8xf32>
    %378 = tpu.matmul %377, %363, %cst_149 {dimension_numbers = #tpu.dot_dimension_numbers<[1], [1], [0], [0], [0, 0, 1, 0], [], []>} : vector<8x16xf32>, vector<8x16xf32>, vector<8x8xf32> -> vector<8x8xf32>
    %c248_150 = arith.constant 248 : index
    %c0_151 = arith.constant 0 : index
    %379 = vector.load %arg5[%c248_150, %c0_151] : memref<384x32xf32, #tpu.memory_space<vmem>>, vector<8x32xf32>
    %cst_152 = arith.constant dense<0.000000e+00> : vector<8x32xf32>
    %380 = tpu.matmul %378, %379, %cst_152 {dimension_numbers = #tpu.dot_dimension_numbers<[1], [0], [0], [1], [0, 0, 1, 1], [], []>} : vector<8x8xf32>, vector<8x32xf32>, vector<8x32xf32> -> vector<8x32xf32>
    %381 = arith.addf %360, %380 : vector<8x32xf32>
    %382 = tpu.concatenate %295, %381 in 0 : vector<8x32xf32>, vector<8x32xf32> -> vector<16x32xf32>
    %383 = arith.addf %205, %382 : vector<16x32xf32>
    %c2 = arith.constant 2 : index
    %c0_153 = arith.constant 0 : index
    %384 = vector.load %arg6[%c2, %c0_153] : memref<8x64xf32, #tpu.memory_space<vmem>>, vector<1x32xf32>
    %c3 = arith.constant 3 : index
    %c0_154 = arith.constant 0 : index
    %385 = vector.load %arg6[%c3, %c0_154] : memref<8x64xf32, #tpu.memory_space<vmem>>, vector<1x32xf32>
    %cst_155 = arith.constant dense<0.000000e+00> : vector<16xf32>
    %386 = vector.multi_reduction <add>, %383, %cst_155 [1] : vector<16x32xf32> to vector<16xf32>
    %387 = vector.shape_cast %386 : vector<16xf32> to vector<16x1xf32>
    %cst_156 = arith.constant 3.200000e+01 : f32
    %388 = vector.broadcast %cst_156 : f32 to vector<16x1xf32>
    %389 = arith.divf %387, %388 : vector<16x1xf32>
    %390 = vector.broadcast %389 : vector<16x1xf32> to vector<16x32xf32>
    %391 = arith.subf %383, %390 : vector<16x32xf32>
    %392 = arith.mulf %391, %391 : vector<16x32xf32>
    %cst_157 = arith.constant dense<0.000000e+00> : vector<16xf32>
    %393 = vector.multi_reduction <add>, %392, %cst_157 [1] : vector<16x32xf32> to vector<16xf32>
    %394 = vector.shape_cast %393 : vector<16xf32> to vector<16x1xf32>
    %cst_158 = arith.constant 3.200000e+01 : f32
    %395 = vector.broadcast %cst_158 : f32 to vector<16x1xf32>
    %396 = arith.divf %394, %395 : vector<16x1xf32>
    %397 = vector.broadcast %389 : vector<16x1xf32> to vector<16x32xf32>
    %398 = arith.subf %383, %397 : vector<16x32xf32>
    %cst_159 = arith.constant 9.99999974E-6 : f32
    %399 = vector.broadcast %cst_159 : f32 to vector<16x1xf32>
    %400 = arith.addf %396, %399 : vector<16x1xf32>
    %401 = math.rsqrt %400 : vector<16x1xf32>
    %402 = vector.broadcast %401 : vector<16x1xf32> to vector<16x32xf32>
    %403 = arith.mulf %398, %402 : vector<16x32xf32>
    %404 = vector.broadcast %384 : vector<1x32xf32> to vector<16x32xf32>
    %405 = arith.mulf %403, %404 : vector<16x32xf32>
    %406 = vector.broadcast %385 : vector<1x32xf32> to vector<16x32xf32>
    %407 = arith.addf %405, %406 : vector<16x32xf32>
    %c256 = arith.constant 256 : index
    %c0_160 = arith.constant 0 : index
    %408 = vector.load %arg5[%c256, %c0_160] : memref<384x32xf32, #tpu.memory_space<vmem>>, vector<64x32xf32>
    %cst_161 = arith.constant dense<0.000000e+00> : vector<16x64xf32>
    %409 = tpu.matmul %407, %408, %cst_161 {dimension_numbers = #tpu.dot_dimension_numbers<[1], [1], [0], [0], [0, 0, 1, 0], [], []>} : vector<16x32xf32>, vector<64x32xf32>, vector<16x64xf32> -> vector<16x64xf32>
    %c7 = arith.constant 7 : index
    %c0_162 = arith.constant 0 : index
    %410 = vector.load %arg6[%c7, %c0_162] : memref<8x64xf32, #tpu.memory_space<vmem>>, vector<1x64xf32>
    %411 = vector.broadcast %410 : vector<1x64xf32> to vector<16x64xf32>
    %412 = arith.addf %409, %411 : vector<16x64xf32>
    %cst_163 = arith.constant 0.000000e+00 : f32
    %413 = vector.broadcast %cst_163 : f32 to vector<16x64xf32>
    %414 = arith.maximumf %412, %413 : vector<16x64xf32>
    %c320 = arith.constant 320 : index
    %c0_164 = arith.constant 0 : index
    %415 = vector.load %arg5[%c320, %c0_164] : memref<384x32xf32, #tpu.memory_space<vmem>>, vector<64x32xf32>
    %cst_165 = arith.constant dense<0.000000e+00> : vector<16x32xf32>
    %416 = tpu.matmul %414, %415, %cst_165 {dimension_numbers = #tpu.dot_dimension_numbers<[1], [0], [0], [1], [0, 0, 1, 1], [], []>} : vector<16x64xf32>, vector<64x32xf32>, vector<16x32xf32> -> vector<16x32xf32>
    %c6 = arith.constant 6 : index
    %c0_166 = arith.constant 0 : index
    %417 = vector.load %arg6[%c6, %c0_166] : memref<8x64xf32, #tpu.memory_space<vmem>>, vector<1x32xf32>
    %418 = vector.broadcast %417 : vector<1x32xf32> to vector<16x32xf32>
    %419 = arith.addf %416, %418 : vector<16x32xf32>
    %420 = arith.addf %407, %419 : vector<16x32xf32>
    %c4 = arith.constant 4 : index
    %c0_167 = arith.constant 0 : index
    %421 = vector.load %arg6[%c4, %c0_167] : memref<8x64xf32, #tpu.memory_space<vmem>>, vector<1x32xf32>
    %c5 = arith.constant 5 : index
    %c0_168 = arith.constant 0 : index
    %422 = vector.load %arg6[%c5, %c0_168] : memref<8x64xf32, #tpu.memory_space<vmem>>, vector<1x32xf32>
    %cst_169 = arith.constant dense<0.000000e+00> : vector<16xf32>
    %423 = vector.multi_reduction <add>, %420, %cst_169 [1] : vector<16x32xf32> to vector<16xf32>
    %424 = vector.shape_cast %423 : vector<16xf32> to vector<16x1xf32>
    %cst_170 = arith.constant 3.200000e+01 : f32
    %425 = vector.broadcast %cst_170 : f32 to vector<16x1xf32>
    %426 = arith.divf %424, %425 : vector<16x1xf32>
    %427 = vector.broadcast %426 : vector<16x1xf32> to vector<16x32xf32>
    %428 = arith.subf %420, %427 : vector<16x32xf32>
    %429 = arith.mulf %428, %428 : vector<16x32xf32>
    %cst_171 = arith.constant dense<0.000000e+00> : vector<16xf32>
    %430 = vector.multi_reduction <add>, %429, %cst_171 [1] : vector<16x32xf32> to vector<16xf32>
    %431 = vector.shape_cast %430 : vector<16xf32> to vector<16x1xf32>
    %cst_172 = arith.constant 3.200000e+01 : f32
    %432 = vector.broadcast %cst_172 : f32 to vector<16x1xf32>
    %433 = arith.divf %431, %432 : vector<16x1xf32>
    %434 = vector.broadcast %426 : vector<16x1xf32> to vector<16x32xf32>
    %435 = arith.subf %420, %434 : vector<16x32xf32>
    %cst_173 = arith.constant 9.99999974E-6 : f32
    %436 = vector.broadcast %cst_173 : f32 to vector<16x1xf32>
    %437 = arith.addf %433, %436 : vector<16x1xf32>
    %438 = math.rsqrt %437 : vector<16x1xf32>
    %439 = vector.broadcast %438 : vector<16x1xf32> to vector<16x32xf32>
    %440 = arith.mulf %435, %439 : vector<16x32xf32>
    %441 = vector.broadcast %421 : vector<1x32xf32> to vector<16x32xf32>
    %442 = arith.mulf %440, %441 : vector<16x32xf32>
    %443 = vector.broadcast %422 : vector<1x32xf32> to vector<16x32xf32>
    %444 = arith.addf %442, %443 : vector<16x32xf32>
    %445 = vector.shape_cast %444 : vector<16x32xf32> to vector<2x8x32xf32>
    %c0_174 = arith.constant 0 : index
    %c0_175 = arith.constant 0 : index
    %c0_176 = arith.constant 0 : index
    %446 = vector.load %arg7[%c0_174, %c0_175, %c0_176] : memref<2x8x32xf32, #tpu.memory_space<vmem>>, vector<2x8x32xf32>
    tpu.vector_store %arg7[%c0_174, %c0_175, %c0_176], %445 {strides = array<i32>} : memref<2x8x32xf32, #tpu.memory_space<vmem>>, vector<2x8x32xf32>,
    return
  }
  func.func @transform_0(%arg0: i32) -> (i32, i32, i32) {
    %c0_i32 = arith.constant 0 : i32
    %c0_i32_0 = arith.constant 0 : i32
    %c0_i32_1 = arith.constant 0 : i32
    return %arg0, %c0_i32, %c0_i32_0 : i32, i32, i32
  }
  func.func @transform_1(%arg0: i32) -> (i32, i32, i32) {
    %c0_i32 = arith.constant 0 : i32
    %c0_i32_0 = arith.constant 0 : i32
    %c0_i32_1 = arith.constant 0 : i32
    return %arg0, %c0_i32, %c0_i32_0 : i32, i32, i32
  }
  func.func @transform_2(%arg0: i32) -> (i32, i32, i32) {
    %c0_i32 = arith.constant 0 : i32
    %c0_i32_0 = arith.constant 0 : i32
    %c0_i32_1 = arith.constant 0 : i32
    return %arg0, %c0_i32, %c0_i32_0 : i32, i32, i32
  }
  func.func @transform_3(%arg0: i32) -> (i32, i32, i32) {
    %c0_i32 = arith.constant 0 : i32
    %c0_i32_0 = arith.constant 0 : i32
    %c0_i32_1 = arith.constant 0 : i32
    return %arg0, %c0_i32, %c0_i32_0 : i32, i32, i32
  }
  func.func @transform_4(%arg0: i32) -> (i32, i32) {
    %c0_i32 = arith.constant 0 : i32
    %c0_i32_0 = arith.constant 0 : i32
    %c0_i32_1 = arith.constant 0 : i32
    return %c0_i32, %c0_i32_0 : i32, i32
  }
  func.func @transform_5(%arg0: i32) -> (i32, i32) {
    %c0_i32 = arith.constant 0 : i32
    %c0_i32_0 = arith.constant 0 : i32
    %c0_i32_1 = arith.constant 0 : i32
    return %c0_i32, %c0_i32_0 : i32, i32
  }
  func.func @transform_6(%arg0: i32) -> (i32, i32, i32) {
    %c0_i32 = arith.constant 0 : i32
    %c0_i32_0 = arith.constant 0 : i32
    %c0_i32_1 = arith.constant 0 : i32
    return %arg0, %c0_i32, %c0_i32_0 : i32, i32, i32
  }
}

</mosaic_0001>

<llo_original>
// kernel: tpu_custom_call.1
$region0: #{tpu_custom_call.1}
  #allocation0 [shape = 'u32[]', space=smem, size = 0x4, offset = 0x4, fixed_abs, tag = 'smem constant byte address 0x4 - core index']
  #allocation1 [shape = 'u32[144,128]{1,0:T(1,128)}', space=vmem, size = 0x12000, scoped, tag = 'internal scratch']
  %s0 = inlined_call_operand.vmem [shape: f32[2,8,32], index: 0, kind: input, shape index: {}]
  %s1 = inlined_call_operand.vmem [shape: f32[2,16,32], index: 1, kind: input, shape index: {}]
  %s2 = inlined_call_operand.vmem [shape: f32[2,8,8], index: 2, kind: input, shape index: {}]
  %s3 = inlined_call_operand.vmem [shape: f32[2,8,16], index: 3, kind: input, shape index: {}]
  %s4 = inlined_call_operand.vmem [shape: f32[384,32], index: 4, kind: input, shape index: {}]
  %s5 = inlined_call_operand.vmem [shape: f32[8,64], index: 5, kind: input, shape index: {}]
  %s6 = inlined_call_operand.hbm [shape: f32[2,8,32], index: 6, kind: output, shape index: {}]
  %s7 = sld [smem:[#allocation0]]
  $region34: #{tpu_custom_call.1} parent=0
    _
  %s9 = ssub.s32 1, %s7
  %s10 = scalar_select 0, %s9, %s7
  $region1: #{tpu_custom_call.1} parent=0
    #allocation2 [shape = 'u8[8192]{0}', space=vmem, size = 0x2000, scoped, tag = 'output window, operand 0, single buffered']
    #allocation3 [shape = 's32[1]{0}', space=sflag, size = 0x4, scoped, tag = 'scoped memory for tpu_custom_call.1']
    %11 = vsyncpa [#allocation3], 0
    // Predicated region
    $region2: #{tpu_custom_call.1} parent=1 // pred_check
      _
    $region3: #{tpu_custom_call.1} parent=1 // pred_check_branch
      %13 = sbr.rel (0) target = $region5
    $region4: #{tpu_custom_call.1} parent=1 // pred_region
      _
    $region5: #{tpu_custom_call.1} parent=1 // pred_fallthru
      _
    // Predicated region
    $region6: #{tpu_custom_call.1} parent=1 // pred_check
      _
    $region7: #{tpu_custom_call.1} parent=1 // pred_check_branch
      %15 = sbr.rel (0) target = $region9
    $region8: #{tpu_custom_call.1} parent=1 // pred_region
      _
    $region9: #{tpu_custom_call.1} parent=1 // pred_fallthru
      _
    // Predicated region
    $region10: #{tpu_custom_call.1} parent=1 // pred_check
      _
    $region11: #{tpu_custom_call.1} parent=1 // pred_check_branch
      %17 = sbr.rel (0) target = $region13
    $region12: #{tpu_custom_call.1} parent=1 // pred_region
      _
    $region13: #{tpu_custom_call.1} parent=1 // pred_fallthru
      _
    // Predicated region
    $region14: #{tpu_custom_call.1} parent=1 // pred_check
      _
    $region15: #{tpu_custom_call.1} parent=1 // pred_check_branch
      %19 = sbr.rel (0) target = $region17
    $region16: #{tpu_custom_call.1} parent=1 // pred_region
      _
    $region17: #{tpu_custom_call.1} parent=1 // pred_fallthru
      _
    // Predicated region
    $region18: #{tpu_custom_call.1} parent=1 // pred_check
      _
    $region19: #{tpu_custom_call.1} parent=1 // pred_check_branch
      %21 = sbr.rel (0) target = $region21
    $region20: #{tpu_custom_call.1} parent=1 // pred_region
      _
    $region21: #{tpu_custom_call.1} parent=1 // pred_fallthru
      _
    // Predicated region
    $region22: #{tpu_custom_call.1} parent=1 // pred_check
      _
    $region23: #{tpu_custom_call.1} parent=1 // pred_check_branch
      %23 = sbr.rel (0) target = $region25
    $region24: #{tpu_custom_call.1} parent=1 // pred_region
      _
    $region25: #{tpu_custom_call.1} parent=1 // pred_fallthru
      _
    %v24 = vld [vmem:[%s0] sm:$0xff]
    %v25 = vld [vmem:[%s0 + $0x8] sm:$0xff]
    %v26 = vld [vmem:[%s1] sm:$0xff]
    %v27 = vld [vmem:[%s1 + $0x8] sm:$0xff]
    %v28 = vld [vmem:[%s1 + $0x10] sm:$0xff]
    %v29 = vld [vmem:[%s1 + $0x18] sm:$0xff]
    %v30 = vld [vmem:[%s4] sm:$0xff]
    %v31 = vld [vmem:[%s4 + $0x8] sm:$0xff]
    %v32 = vld [vmem:[%s4 + $0x10] sm:$0xff]
    %v33 = vld [vmem:[%s4 + $0x18] sm:$0xff]
    %vm34 = vcmask 261120
    %v36 = vsel %vm34, %v24, 0
    %v39 = vsel %vm34, %v25, 0
    %41 = vmatprep.subr.mxu0 0.0
    %42 = vmatpush1.msra.mxu0 %v30
    %43 = vmatprep.subr.mxu0 0.0
    %44 = vmatpush1.msra.mxu0 %v31
    %45 = vmatprep.subr.mxu0 0.0
    %46 = vmatpush1.msra.mxu0 %v32
    %47 = vmatprep.subr.mxu0 0.0
    %48 = vmatpush1.msra.mxu0 %v33
    %49 = vmatprep.subr.mxu0 0.0
    %50 = vmatpush1.msra.mxu0 0.0
    %51 = vmatprep.subr.mxu0 0.0
    %52 = vmatpush1.msra.mxu0 0.0
    %53 = vmatprep.subr.mxu0 0.0
    %54 = vmatpush1.msra.mxu0 0.0
    %55 = vmatprep.subr.mxu0 0.0
    %56 = vmatpush1.msra.mxu0 0.0
    %57 = vmatprep.subr.mxu0 0.0
    %58 = vmatpush1.msra.mxu0 0.0
    %59 = vmatprep.subr.mxu0 0.0
    %60 = vmatpush1.msra.mxu0 0.0
    %61 = vmatprep.subr.mxu0 0.0
    %62 = vmatpush1.msra.mxu0 0.0
    %63 = vmatprep.subr.mxu0 0.0
    %64 = vmatpush1.msra.mxu0 0.0
    %65 = vmatprep.subr.mxu0 0.0
    %66 = vmatpush1.msra.mxu0 0.0
    %67 = vmatprep.subr.mxu0 0.0
    %68 = vmatpush1.msra.mxu0 0.0
    %69 = vmatprep.subr.mxu0 0.0
    %70 = vmatpush1.msra.mxu0 0.0
    %71 = vmatprep.subr.mxu0 0.0
    %72 = vmatpush1.msra.mxu0 0.0
    %73 = vmatprep.subr.mxu0 0.0
    %74 = vmatpush1.msra.mxu0 0.0
    %75 = vmatprep.subr.mxu0 0.0
    %76 = vmatpush1.msra.mxu0 0.0
    %77 = vmatprep.subr.mxu0 0.0
    %78 = vmatpush1.msra.mxu0 0.0
    %79 = vmatprep.subr.mxu0 0.0
    %80 = vmatpush1.msra.mxu0 0.0
    %81 = vmatprep.subr.mxu0 0.0
    %82 = vmatpush1.msra.mxu0 0.0
    %83 = vmatprep.subr.mxu0 0.0
    %84 = vmatpush1.msra.mxu0 0.0
    %85 = vmatprep.subr.mxu0 0.0
    %86 = vmatpush1.msra.mxu0 0.0
    %87 = vmatprep.subr.mxu0 0.0
    %88 = vmatpush1.msra.mxu0 0.0
    %89 = vmatprep.subr.mxu0 0.0
    %90 = vmatpush1.msra.mxu0 0.0
    %91 = vmatprep.subr.mxu0 0.0
    %92 = vmatpush1.msra.mxu0 0.0
    %93 = vmatprep.subr.mxu0 0.0
    %94 = vmatpush1.msra.mxu0 0.0
    %95 = vmatprep.subr.mxu0 0.0
    %96 = vmatpush1.msra.mxu0 0.0
    %97 = vmatprep.subr.mxu0 0.0
    %98 = vmatpush1.msra.mxu0 0.0
    %99 = vmatprep.subr.mxu0 0.0
    %100 = vmatpush1.msra.mxu0 0.0
    %101 = vmatprep.subr.mxu0 0.0
    %102 = vmatpush1.msra.mxu0 0.0
    %103 = vmatprep.subr.mxu0 0.0
    %104 = vmatpush1.msra.mxu0 0.0
    %105 = vmatprep.mubr.f32.mxu0 0.0
    %106 = vmatmul.mubr.f32.gmra.mrb[0].mxu0 %v36
    %v107 = vpop.f32.mrb[0].mxu0
    %v108 = vadd.f32 0.0, %v107
    %v109 = vpop.f32.mrb[0].mxu0
    %110 = vmatprep.mubr.f32.mxu0 0.0
    %111 = vmatmul.mubr.f32.gmra.mrb[0].mxu0 %v39
    %v112 = vpop.f32.mrb[0].mxu0
    %v113 = vadd.f32 0.0, %v112
    %v114 = vpop.f32.mrb[0].mxu0
    %115 = vdwg.mxu0
    %v116 = vld [vmem:[%s4 + $0x20] sm:$0xff]
    %v117 = vld [vmem:[%s4 + $0x28] sm:$0xff]
    %v118 = vld [vmem:[%s4 + $0x30] sm:$0xff]
    %v119 = vld [vmem:[%s4 + $0x38] sm:$0xff]
    %v120 = vld [vmem:[%s4 + $0x40] sm:$0xff]
    %v121 = vld [vmem:[%s4 + $0x48] sm:$0xff]
    %v122 = vld [vmem:[%s4 + $0x50] sm:$0xff]
    %v123 = vld [vmem:[%s4 + $0x58] sm:$0xff]
    %v125 = vsel %vm34, %v116, 0
    %v128 = vsel %vm34, %v117, 0
    %v131 = vsel %vm34, %v118, 0
    %v134 = vsel %vm34, %v119, 0
    %v137 = vsel %vm34, %v120, 0
    %v140 = vsel %vm34, %v121, 0
    %v143 = vsel %vm34, %v122, 0
    %v146 = vsel %vm34, %v123, 0
    %148 = vmatprep.subr.mxu0 0.0
    %149 = vmatpush1.xpose.msra.mxu0 %v36
    %150 = vmatprep.subr.mxu0 0.0
    %151 = vmatpush1.xpose.msra.mxu0 %v39
    %152 = vmatprep.subr.mxu0 0.0
    %153 = vmatpush1.xpose.msra.mxu0 0.0
    %154 = vmatprep.subr.mxu0 0.0
    %155 = vmatpush1.xpose.msra.mxu0 0.0
    %156 = vmatprep.subr.mxu0 0.0
    %157 = vmatpush1.xpose.msra.mxu0 0.0
    %158 = vmatprep.subr.mxu0 0.0
    %159 = vmatpush1.xpose.msra.mxu0 0.0
    %160 = vmatprep.subr.mxu0 0.0
    %161 = vmatpush1.xpose.msra.mxu0 0.0
    %162 = vmatprep.subr.mxu0 0.0
    %163 = vmatpush1.xpose.msra.mxu0 0.0
    %164 = vmatprep.subr.mxu0 0.0
    %165 = vmatpush1.xpose.msra.mxu0 0.0
    %166 = vmatprep.subr.mxu0 0.0
    %167 = vmatpush1.xpose.msra.mxu0 0.0
    %168 = vmatprep.subr.mxu0 0.0
    %169 = vmatpush1.xpose.msra.mxu0 0.0
    %170 = vmatprep.subr.mxu0 0.0
    %171 = vmatpush1.xpose.msra.mxu0 0.0
    %172 = vmatprep.subr.mxu0 0.0
    %173 = vmatpush1.xpose.msra.mxu0 0.0
    %174 = vmatprep.subr.mxu0 0.0
    %175 = vmatpush1.xpose.msra.mxu0 0.0
    %176 = vmatprep.subr.mxu0 0.0
    %177 = vmatpush1.xpose.msra.mxu0 0.0
    %178 = vmatprep.subr.mxu0 0.0
    %179 = vmatpush1.xpose.msra.mxu0 0.0
    %180 = vmatprep.subr.mxu0 0.0
    %181 = vmatpush1.xpose.msra.mxu0 0.0
    %182 = vmatprep.subr.mxu0 0.0
    %183 = vmatpush1.xpose.msra.mxu0 0.0
    %184 = vmatprep.subr.mxu0 0.0
    %185 = vmatpush1.xpose.msra.mxu0 0.0
    %186 = vmatprep.subr.mxu0 0.0
    %187 = vmatpush1.xpose.msra.mxu0 0.0
    %188 = vmatprep.subr.mxu0 0.0
    %189 = vmatpush1.xpose.msra.mxu0 0.0
    %190 = vmatprep.subr.mxu0 0.0
    %191 = vmatpush1.xpose.msra.mxu0 0.0
    %192 = vmatprep.subr.mxu0 0.0
    %193 = vmatpush1.xpose.msra.mxu0 0.0
    %194 = vmatprep.subr.mxu0 0.0
    %195 = vmatpush1.xpose.msra.mxu0 0.0
    %196 = vmatprep.subr.mxu0 0.0
    %197 = vmatpush1.xpose.msra.mxu0 0.0
    %198 = vmatprep.subr.mxu0 0.0
    %199 = vmatpush1.xpose.msra.mxu0 0.0
    %200 = vmatprep.subr.mxu0 0.0
    %201 = vmatpush1.xpose.msra.mxu0 0.0
    %202 = vmatprep.subr.mxu0 0.0
    %203 = vmatpush1.xpose.msra.mxu0 0.0
    %204 = vmatprep.subr.mxu0 0.0
    %205 = vmatpush1.xpose.msra.mxu0 0.0
    %206 = vmatprep.subr.mxu0 0.0
    %207 = vmatpush1.xpose.msra.mxu0 0.0
    %208 = vmatprep.subr.mxu0 0.0
    %209 = vmatpush1.xpose.msra.mxu0 0.0
    %210 = vmatprep.subr.mxu0 0.0
    %211 = vmatpush1.xpose.msra.mxu0 0.0
    %212 = vmatprep.mubr.f32.mxu0 0.0
    %213 = vmatmul.mubr.f32.gmra.mrb[0].mxu0 %v125
    %v214 = vpop.f32.mrb[0].mxu0
    %v215 = vadd.f32 0.0, %v214
    %v216 = vpop.f32.mrb[0].mxu0
    %217 = vmatprep.mubr.f32.mxu0 0.0
    %218 = vmatmul.mubr.f32.gmra.mrb[0].mxu0 %v128
    %v219 = vpop.f32.mrb[0].mxu0
    %v220 = vadd.f32 0.0, %v219
    %v221 = vpop.f32.mrb[0].mxu0
    %222 = vmatprep.mubr.f32.mxu0 0.0
    %223 = vmatmul.mubr.f32.gmra.mrb[0].mxu0 %v131
    %v224 = vpop.f32.mrb[0].mxu0
    %v225 = vadd.f32 0.0, %v224
    %v226 = vpop.f32.mrb[0].mxu0
    %227 = vmatprep.mubr.f32.mxu0 0.0
    %228 = vmatmul.mubr.f32.gmra.mrb[0].mxu0 %v134
    %v229 = vpop.f32.mrb[0].mxu0
    %v230 = vadd.f32 0.0, %v229
    %v231 = vpop.f32.mrb[0].mxu0
    %232 = vmatprep.mubr.f32.mxu0 0.0
    %233 = vmatmul.mubr.f32.gmra.mrb[0].mxu0 %v137
    %v234 = vpop.f32.mrb[0].mxu0
    %v235 = vadd.f32 0.0, %v234
    %v236 = vpop.f32.mrb[0].mxu0
    %237 = vmatprep.mubr.f32.mxu0 0.0
    %238 = vmatmul.mubr.f32.gmra.mrb[0].mxu0 %v140
    %v239 = vpop.f32.mrb[0].mxu0
    %v240 = vadd.f32 0.0, %v239
    %v241 = vpop.f32.mrb[0].mxu0
    %242 = vmatprep.mubr.f32.mxu0 0.0
    %243 = vmatmul.mubr.f32.gmra.mrb[0].mxu0 %v143
    %v244 = vpop.f32.mrb[0].mxu0
    %v245 = vadd.f32 0.0, %v244
    %v246 = vpop.f32.mrb[0].mxu0
    %247 = vmatprep.mubr.f32.mxu0 0.0
    %248 = vmatmul.mubr.f32.gmra.mrb[0].mxu0 %v146
    %v249 = vpop.f32.mrb[0].mxu0
    %v250 = vadd.f32 0.0, %v249
    %v251 = vpop.f32.mrb[0].mxu0
    %252 = vdwg.mxu0
    %v253 = vld [vmem:[%s2] sm:$0xff]
    %vm254 = vcmask 64512
    %v256 = vsel %vm254, %v108, 0
    %258 = vmatprep.subr.mxu0 0.0
    %259 = vmatpush1.msra.mxu0 %v215
    %260 = vmatprep.subr.mxu0 0.0
    %261 = vmatpush1.msra.mxu0 0.0
    %262 = vmatprep.subr.mxu0 0.0
    %263 = vmatpush1.msra.mxu0 0.0
    %264 = vmatprep.subr.mxu0 0.0
    %265 = vmatpush1.msra.mxu0 0.0
    %266 = vmatprep.subr.mxu0 0.0
    %267 = vmatpush1.msra.mxu0 0.0
    %268 = vmatprep.subr.mxu0 0.0
    %269 = vmatpush1.msra.mxu0 0.0
    %270 = vmatprep.subr.mxu0 0.0
    %271 = vmatpush1.msra.mxu0 0.0
    %272 = vmatprep.subr.mxu0 0.0
    %273 = vmatpush1.msra.mxu0 0.0
    %274 = vmatprep.subr.mxu0 0.0
    %275 = vmatpush1.msra.mxu0 0.0
    %276 = vmatprep.subr.mxu0 0.0
    %277 = vmatpush1.msra.mxu0 0.0
    %278 = vmatprep.subr.mxu0 0.0
    %279 = vmatpush1.msra.mxu0 0.0
    %280 = vmatprep.subr.mxu0 0.0
    %281 = vmatpush1.msra.mxu0 0.0
    %282 = vmatprep.subr.mxu0 0.0
    %283 = vmatpush1.msra.mxu0 0.0
    %284 = vmatprep.subr.mxu0 0.0
    %285 = vmatpush1.msra.mxu0 0.0
    %286 = vmatprep.subr.mxu0 0.0
    %287 = vmatpush1.msra.mxu0 0.0
    %288 = vmatprep.subr.mxu0 0.0
    %289 = vmatpush1.msra.mxu0 0.0
    %290 = vmatprep.subr.mxu0 0.0
    %291 = vmatpush1.msra.mxu0 0.0
    %292 = vmatprep.subr.mxu0 0.0
    %293 = vmatpush1.msra.mxu0 0.0
    %294 = vmatprep.subr.mxu0 0.0
    %295 = vmatpush1.msra.mxu0 0.0
    %296 = vmatprep.subr.mxu0 0.0
    %297 = vmatpush1.msra.mxu0 0.0
    %298 = vmatprep.subr.mxu0 0.0
    %299 = vmatpush1.msra.mxu0 0.0
    %300 = vmatprep.subr.mxu0 0.0
    %301 = vmatpush1.msra.mxu0 0.0
    %302 = vmatprep.subr.mxu0 0.0
    %303 = vmatpush1.msra.mxu0 0.0
    %304 = vmatprep.subr.mxu0 0.0
    %305 = vmatpush1.msra.mxu0 0.0
    %306 = vmatprep.subr.mxu0 0.0
    %307 = vmatpush1.msra.mxu0 0.0
    %308 = vmatprep.subr.mxu0 0.0
    %309 = vmatpush1.msra.mxu0 0.0
    %310 = vmatprep.subr.mxu0 0.0
    %311 = vmatpush1.msra.mxu0 0.0
    %312 = vmatprep.subr.mxu0 0.0
    %313 = vmatpush1.msra.mxu0 0.0
    %314 = vmatprep.subr.mxu0 0.0
    %315 = vmatpush1.msra.mxu0 0.0
    %316 = vmatprep.subr.mxu0 0.0
    %317 = vmatpush1.msra.mxu0 0.0
    %318 = vmatprep.subr.mxu0 0.0
    %319 = vmatpush1.msra.mxu0 0.0
    %320 = vmatprep.subr.mxu0 0.0
    %321 = vmatpush1.msra.mxu0 0.0
    %322 = vmatprep.mubr.f32.mxu0 0.0
    %323 = vmatmul.mubr.f32.gmra.mrb[0].mxu0 %v256
    %v324 = vpop.f32.mrb[0].mxu0
    %v325 = vadd.f32 0.0, %v324
    %v326 = vpop.f32.mrb[0].mxu0
    %327 = vdwg.mxu0
    %v328 = vmul.f32 %v325, 0.35355338
    %v329 = vadd.f32 %v328, %v253
    %v330 = vsel %vm254, %v329, -inf
    %331 = vmax.xlane.f32.xlu0 %v330
    %v332 = vpop.xlane.xlu0 %331
    %v333 = vsub.f32 %v329, %v332
    %v334 = vmul.f32 %v333, 1.442695
    %v335 = vpow.pop %v334
    %v336 = vsel %vm254, %v335, 0.0
    %337 = vadd.xlane.f32.xlu0 %v336
    %v338 = vpop.xlane.xlu0 %337
    %v339 = vrcp.pop %v338
    %v340 = vmul.f32 %v335, %v339
    %v342 = vsel %vm254, %v340, 0
    %v345 = vsel %vm254, %v235, 0
    %347 = vmatprep.subr.mxu0 0.0
    %348 = vmatpush1.xpose.msra.mxu0 %v345
    %349 = vmatprep.subr.mxu0 0.0
    %350 = vmatpush1.xpose.msra.mxu0 0.0
    %351 = vmatprep.subr.mxu0 0.0
    %352 = vmatpush1.xpose.msra.mxu0 0.0
    %353 = vmatprep.subr.mxu0 0.0
    %354 = vmatpush1.xpose.msra.mxu0 0.0
    %355 = vmatprep.subr.mxu0 0.0
    %356 = vmatpush1.xpose.msra.mxu0 0.0
    %357 = vmatprep.subr.mxu0 0.0
    %358 = vmatpush1.xpose.msra.mxu0 0.0
    %359 = vmatprep.subr.mxu0 0.0
    %360 = vmatpush1.xpose.msra.mxu0 0.0
    %361 = vmatprep.subr.mxu0 0.0
    %362 = vmatpush1.xpose.msra.mxu0 0.0
    %363 = vmatprep.subr.mxu0 0.0
    %364 = vmatpush1.xpose.msra.mxu0 0.0
    %365 = vmatprep.subr.mxu0 0.0
    %366 = vmatpush1.xpose.msra.mxu0 0.0
    %367 = vmatprep.subr.mxu0 0.0
    %368 = vmatpush1.xpose.msra.mxu0 0.0
    %369 = vmatprep.subr.mxu0 0.0
    %370 = vmatpush1.xpose.msra.mxu0 0.0
    %371 = vmatprep.subr.mxu0 0.0
    %372 = vmatpush1.xpose.msra.mxu0 0.0
    %373 = vmatprep.subr.mxu0 0.0
    %374 = vmatpush1.xpose.msra.mxu0 0.0
    %375 = vmatprep.subr.mxu0 0.0
    %376 = vmatpush1.xpose.msra.mxu0 0.0
    %377 = vmatprep.subr.mxu0 0.0
    %378 = vmatpush1.xpose.msra.mxu0 0.0
    %379 = vmatprep.subr.mxu0 0.0
    %380 = vmatpush1.xpose.msra.mxu0 0.0
    %381 = vmatprep.subr.mxu0 0.0
    %382 = vmatpush1.xpose.msra.mxu0 0.0
    %383 = vmatprep.subr.mxu0 0.0
    %384 = vmatpush1.xpose.msra.mxu0 0.0
    %385 = vmatprep.subr.mxu0 0.0
    %386 = vmatpush1.xpose.msra.mxu0 0.0
    %387 = vmatprep.subr.mxu0 0.0
    %388 = vmatpush1.xpose.msra.mxu0 0.0
    %389 = vmatprep.subr.mxu0 0.0
    %390 = vmatpush1.xpose.msra.mxu0 0.0
    %391 = vmatprep.subr.mxu0 0.0
    %392 = vmatpush1.xpose.msra.mxu0 0.0
    %393 = vmatprep.subr.mxu0 0.0
    %394 = vmatpush1.xpose.msra.mxu0 0.0
    %395 = vmatprep.subr.mxu0 0.0
    %396 = vmatpush1.xpose.msra.mxu0 0.0
    %397 = vmatprep.subr.mxu0 0.0
    %398 = vmatpush1.xpose.msra.mxu0 0.0
    %399 = vmatprep.subr.mxu0 0.0
    %400 = vmatpush1.xpose.msra.mxu0 0.0
    %401 = vmatprep.subr.mxu0 0.0
    %402 = vmatpush1.xpose.msra.mxu0 0.0
    %403 = vmatprep.subr.mxu0 0.0
    %404 = vmatpush1.xpose.msra.mxu0 0.0
    %405 = vmatprep.subr.mxu0 0.0
    %406 = vmatpush1.xpose.msra.mxu0 0.0
    %407 = vmatprep.subr.mxu0 0.0
    %408 = vmatpush1.xpose.msra.mxu0 0.0
    %409 = vmatprep.subr.mxu0 0.0
    %410 = vmatpush1.xpose.msra.mxu0 0.0
    %411 = vmatprep.mubr.f32.mxu0 0.0
    %412 = vmatmul.mubr.f32.gmra.mrb[0].mxu0 %v342
    %v413 = vpop.f32.mrb[0].mxu0
    %v414 = vadd.f32 0.0, %v413
    %v415 = vpop.f32.mrb[0].mxu0
    %416 = vdwg.mxu0
    %v417 = vld [vmem:[%s4 + $0x60] sm:$0xff]
    %418 = vrot.lane.b32.xlu0 %v108, 120
    %v419 = vpop.permute.xlu0 %418
    %v420 = vsel %vm254, %v419, 0
    %422 = vmatprep.subr.mxu0 0.0
    %423 = vmatpush1.msra.mxu0 %v220
    %424 = vmatprep.subr.mxu0 0.0
    %425 = vmatpush1.msra.mxu0 0.0
    %426 = vmatprep.subr.mxu0 0.0
    %427 = vmatpush1.msra.mxu0 0.0
    %428 = vmatprep.subr.mxu0 0.0
    %429 = vmatpush1.msra.mxu0 0.0
    %430 = vmatprep.subr.mxu0 0.0
    %431 = vmatpush1.msra.mxu0 0.0
    %432 = vmatprep.subr.mxu0 0.0
    %433 = vmatpush1.msra.mxu0 0.0
    %434 = vmatprep.subr.mxu0 0.0
    %435 = vmatpush1.msra.mxu0 0.0
    %436 = vmatprep.subr.mxu0 0.0
    %437 = vmatpush1.msra.mxu0 0.0
    %438 = vmatprep.subr.mxu0 0.0
    %439 = vmatpush1.msra.mxu0 0.0
    %440 = vmatprep.subr.mxu0 0.0
    %441 = vmatpush1.msra.mxu0 0.0
    %442 = vmatprep.subr.mxu0 0.0
    %443 = vmatpush1.msra.mxu0 0.0
    %444 = vmatprep.subr.mxu0 0.0
    %445 = vmatpush1.msra.mxu0 0.0
    %446 = vmatprep.subr.mxu0 0.0
    %447 = vmatpush1.msra.mxu0 0.0
    %448 = vmatprep.subr.mxu0 0.0
    %449 = vmatpush1.msra.mxu0 0.0
    %450 = vmatprep.subr.mxu0 0.0
    %451 = vmatpush1.msra.mxu0 0.0
    %452 = vmatprep.subr.mxu0 0.0
    %453 = vmatpush1.msra.mxu0 0.0
    %454 = vmatprep.subr.mxu0 0.0
    %455 = vmatpush1.msra.mxu0 0.0
    %456 = vmatprep.subr.mxu0 0.0
    %457 = vmatpush1.msra.mxu0 0.0
    %458 = vmatprep.subr.mxu0 0.0
    %459 = vmatpush1.msra.mxu0 0.0
    %460 = vmatprep.subr.mxu0 0.0
    %461 = vmatpush1.msra.mxu0 0.0
    %462 = vmatprep.subr.mxu0 0.0
    %463 = vmatpush1.msra.mxu0 0.0
    %464 = vmatprep.subr.mxu0 0.0
    %465 = vmatpush1.msra.mxu0 0.0
    %466 = vmatprep.subr.mxu0 0.0
    %467 = vmatpush1.msra.mxu0 0.0
    %468 = vmatprep.subr.mxu0 0.0
    %469 = vmatpush1.msra.mxu0 0.0
    %470 = vmatprep.subr.mxu0 0.0
    %471 = vmatpush1.msra.mxu0 0.0
    %472 = vmatprep.subr.mxu0 0.0
    %473 = vmatpush1.msra.mxu0 0.0
    %474 = vmatprep.subr.mxu0 0.0
    %475 = vmatpush1.msra.mxu0 0.0
    %476 = vmatprep.subr.mxu0 0.0
    %477 = vmatpush1.msra.mxu0 0.0
    %478 = vmatprep.subr.mxu0 0.0
    %479 = vmatpush1.msra.mxu0 0.0
    %480 = vmatprep.subr.mxu0 0.0
    %481 = vmatpush1.msra.mxu0 0.0
    %482 = vmatprep.subr.mxu0 0.0
    %483 = vmatpush1.msra.mxu0 0.0
    %484 = vmatprep.subr.mxu0 0.0
    %485 = vmatpush1.msra.mxu0 0.0
    %486 = vmatprep.mubr.f32.mxu0 0.0
    %487 = vmatmul.mubr.f32.gmra.mrb[0].mxu0 %v420
    %v488 = vpop.f32.mrb[0].mxu0
    %v489 = vadd.f32 0.0, %v488
    %v490 = vpop.f32.mrb[0].mxu0
    %491 = vdwg.mxu0
    %v492 = vmul.f32 %v489, 0.35355338
    %v493 = vadd.f32 %v492, %v253
    %v494 = vsel %vm254, %v493, -inf
    %495 = vmax.xlane.f32.xlu0 %v494
    %v496 = vpop.xlane.xlu0 %495
    %v497 = vsub.f32 %v493, %v496
    %v498 = vmul.f32 %v497, 1.442695
    %v499 = vpow.pop %v498
    %v500 = vsel %vm254, %v499, 0.0
    %501 = vadd.xlane.f32.xlu0 %v500
    %v502 = vpop.xlane.xlu0 %501
    %v503 = vrcp.pop %v502
    %v504 = vmul.f32 %v499, %v503
    %v506 = vsel %vm254, %v504, 0
    %v509 = vsel %vm254, %v240, 0
    %511 = vmatprep.subr.mxu0 0.0
    %512 = vmatpush1.xpose.msra.mxu0 %v509
    %513 = vmatprep.subr.mxu0 0.0
    %514 = vmatpush1.xpose.msra.mxu0 0.0
    %515 = vmatprep.subr.mxu0 0.0
    %516 = vmatpush1.xpose.msra.mxu0 0.0
    %517 = vmatprep.subr.mxu0 0.0
    %518 = vmatpush1.xpose.msra.mxu0 0.0
    %519 = vmatprep.subr.mxu0 0.0
    %520 = vmatpush1.xpose.msra.mxu0 0.0
    %521 = vmatprep.subr.mxu0 0.0
    %522 = vmatpush1.xpose.msra.mxu0 0.0
    %523 = vmatprep.subr.mxu0 0.0
    %524 = vmatpush1.xpose.msra.mxu0 0.0
    %525 = vmatprep.subr.mxu0 0.0
    %526 = vmatpush1.xpose.msra.mxu0 0.0
    %527 = vmatprep.subr.mxu0 0.0
    %528 = vmatpush1.xpose.msra.mxu0 0.0
    %529 = vmatprep.subr.mxu0 0.0
    %530 = vmatpush1.xpose.msra.mxu0 0.0
    %531 = vmatprep.subr.mxu0 0.0
    %532 = vmatpush1.xpose.msra.mxu0 0.0
    %533 = vmatprep.subr.mxu0 0.0
    %534 = vmatpush1.xpose.msra.mxu0 0.0
    %535 = vmatprep.subr.mxu0 0.0
    %536 = vmatpush1.xpose.msra.mxu0 0.0
    %537 = vmatprep.subr.mxu0 0.0
    %538 = vmatpush1.xpose.msra.mxu0 0.0
    %539 = vmatprep.subr.mxu0 0.0
    %540 = vmatpush1.xpose.msra.mxu0 0.0
    %541 = vmatprep.subr.mxu0 0.0
    %542 = vmatpush1.xpose.msra.mxu0 0.0
    %543 = vmatprep.subr.mxu0 0.0
    %544 = vmatpush1.xpose.msra.mxu0 0.0
    %545 = vmatprep.subr.mxu0 0.0
    %546 = vmatpush1.xpose.msra.mxu0 0.0
    %547 = vmatprep.subr.mxu0 0.0
    %548 = vmatpush1.xpose.msra.mxu0 0.0
    %549 = vmatprep.subr.mxu0 0.0
    %550 = vmatpush1.xpose.msra.mxu0 0.0
    %551 = vmatprep.subr.mxu0 0.0
    %552 = vmatpush1.xpose.msra.mxu0 0.0
    %553 = vmatprep.subr.mxu0 0.0
    %554 = vmatpush1.xpose.msra.mxu0 0.0
    %555 = vmatprep.subr.mxu0 0.0
    %556 = vmatpush1.xpose.msra.mxu0 0.0
    %557 = vmatprep.subr.mxu0 0.0
    %558 = vmatpush1.xpose.msra.mxu0 0.0
    %559 = vmatprep.subr.mxu0 0.0
    %560 = vmatpush1.xpose.msra.mxu0 0.0
    %561 = vmatprep.subr.mxu0 0.0
    %562 = vmatpush1.xpose.msra.mxu0 0.0
    %563 = vmatprep.subr.mxu0 0.0
    %564 = vmatpush1.xpose.msra.mxu0 0.0
    %565 = vmatprep.subr.mxu0 0.0
    %566 = vmatpush1.xpose.msra.mxu0 0.0
    %567 = vmatprep.subr.mxu0 0.0
    %568 = vmatpush1.xpose.msra.mxu0 0.0
    %569 = vmatprep.subr.mxu0 0.0
    %570 = vmatpush1.xpose.msra.mxu0 0.0
    %571 = vmatprep.subr.mxu0 0.0
    %572 = vmatpush1.xpose.msra.mxu0 0.0
    %573 = vmatprep.subr.mxu0 0.0
    %574 = vmatpush1.xpose.msra.mxu0 0.0
    %575 = vmatprep.mubr.f32.mxu0 0.0
    %576 = vmatmul.mubr.f32.gmra.mrb[0].mxu0 %v506
    %v577 = vpop.f32.mrb[0].mxu0
    %v578 = vadd.f32 0.0, %v577
    %v579 = vpop.f32.mrb[0].mxu0
    %580 = vdwg.mxu0
    %v581 = vld [vmem:[%s4 + $0x68] sm:$0xff]
    %v583 = vsel %vm254, %v578, 0
    %585 = vmatprep.subr.mxu0 0.0
    %586 = vmatpush1.msra.mxu0 %v581
    %587 = vmatprep.subr.mxu0 0.0
    %588 = vmatpush1.msra.mxu0 0.0
    %589 = vmatprep.subr.mxu0 0.0
    %590 = vmatpush1.msra.mxu0 0.0
    %591 = vmatprep.subr.mxu0 0.0
    %592 = vmatpush1.msra.mxu0 0.0
    %593 = vmatprep.subr.mxu0 0.0
    %594 = vmatpush1.msra.mxu0 0.0
    %595 = vmatprep.subr.mxu0 0.0
    %596 = vmatpush1.msra.mxu0 0.0
    %597 = vmatprep.subr.mxu0 0.0
    %598 = vmatpush1.msra.mxu0 0.0
    %599 = vmatprep.subr.mxu0 0.0
    %600 = vmatpush1.msra.mxu0 0.0
    %601 = vmatprep.subr.mxu0 0.0
    %602 = vmatpush1.msra.mxu0 0.0
    %603 = vmatprep.subr.mxu0 0.0
    %604 = vmatpush1.msra.mxu0 0.0
    %605 = vmatprep.subr.mxu0 0.0
    %606 = vmatpush1.msra.mxu0 0.0
    %607 = vmatprep.subr.mxu0 0.0
    %608 = vmatpush1.msra.mxu0 0.0
    %609 = vmatprep.subr.mxu0 0.0
    %610 = vmatpush1.msra.mxu0 0.0
    %611 = vmatprep.subr.mxu0 0.0
    %612 = vmatpush1.msra.mxu0 0.0
    %613 = vmatprep.subr.mxu0 0.0
    %614 = vmatpush1.msra.mxu0 0.0
    %615 = vmatprep.subr.mxu0 0.0
    %616 = vmatpush1.msra.mxu0 0.0
    %617 = vmatprep.subr.mxu0 0.0
    %618 = vmatpush1.msra.mxu0 0.0
    %619 = vmatprep.subr.mxu0 0.0
    %620 = vmatpush1.msra.mxu0 0.0
    %621 = vmatprep.subr.mxu0 0.0
    %622 = vmatpush1.msra.mxu0 0.0
    %623 = vmatprep.subr.mxu0 0.0
    %624 = vmatpush1.msra.mxu0 0.0
    %625 = vmatprep.subr.mxu0 0.0
    %626 = vmatpush1.msra.mxu0 0.0
    %627 = vmatprep.subr.mxu0 0.0
    %628 = vmatpush1.msra.mxu0 0.0
    %629 = vmatprep.subr.mxu0 0.0
    %630 = vmatpush1.msra.mxu0 0.0
    %631 = vmatprep.subr.mxu0 0.0
    %632 = vmatpush1.msra.mxu0 0.0
    %633 = vmatprep.subr.mxu0 0.0
    %634 = vmatpush1.msra.mxu0 0.0
    %635 = vmatprep.subr.mxu0 0.0
    %636 = vmatpush1.msra.mxu0 0.0
    %637 = vmatprep.subr.mxu0 0.0
    %638 = vmatpush1.msra.mxu0 0.0
    %639 = vmatprep.subr.mxu0 0.0
    %640 = vmatpush1.msra.mxu0 0.0
    %641 = vmatprep.subr.mxu0 0.0
    %642 = vmatpush1.msra.mxu0 0.0
    %643 = vmatprep.subr.mxu0 0.0
    %644 = vmatpush1.msra.mxu0 0.0
    %645 = vmatprep.subr.mxu0 0.0
    %646 = vmatpush1.msra.mxu0 0.0
    %647 = vmatprep.subr.mxu0 0.0
    %648 = vmatpush1.msra.mxu0 0.0
    %649 = vmatprep.mubr.f32.mxu0 0.0
    %650 = vmatmul.mubr.f32.gmra.mrb[0].mxu0 %v583
    %v651 = vpop.f32.mrb[0].mxu0
    %v652 = vadd.f32 0.0, %v651
    %v653 = vpop.f32.mrb[0].mxu0
    %654 = vdwg.mxu0
    %v656 = vsel %vm254, %v414, 0
    %658 = vmatprep.subr.mxu0 0.0
    %659 = vmatpush1.msra.mxu0 %v417
    %660 = vmatprep.subr.mxu0 0.0
    %661 = vmatpush1.msra.mxu0 0.0
    %662 = vmatprep.subr.mxu0 0.0
    %663 = vmatpush1.msra.mxu0 0.0
    %664 = vmatprep.subr.mxu0 0.0
    %665 = vmatpush1.msra.mxu0 0.0
    %666 = vmatprep.subr.mxu0 0.0
    %667 = vmatpush1.msra.mxu0 0.0
    %668 = vmatprep.subr.mxu0 0.0
    %669 = vmatpush1.msra.mxu0 0.0
    %670 = vmatprep.subr.mxu0 0.0
    %671 = vmatpush1.msra.mxu0 0.0
    %672 = vmatprep.subr.mxu0 0.0
    %673 = vmatpush1.msra.mxu0 0.0
    %674 = vmatprep.subr.mxu0 0.0
    %675 = vmatpush1.msra.mxu0 0.0
    %676 = vmatprep.subr.mxu0 0.0
    %677 = vmatpush1.msra.mxu0 0.0
    %678 = vmatprep.subr.mxu0 0.0
    %679 = vmatpush1.msra.mxu0 0.0
    %680 = vmatprep.subr.mxu0 0.0
    %681 = vmatpush1.msra.mxu0 0.0
    %682 = vmatprep.subr.mxu0 0.0
    %683 = vmatpush1.msra.mxu0 0.0
    %684 = vmatprep.subr.mxu0 0.0
    %685 = vmatpush1.msra.mxu0 0.0
    %686 = vmatprep.subr.mxu0 0.0
    %687 = vmatpush1.msra.mxu0 0.0
    %688 = vmatprep.subr.mxu0 0.0
    %689 = vmatpush1.msra.mxu0 0.0
    %690 = vmatprep.subr.mxu0 0.0
    %691 = vmatpush1.msra.mxu0 0.0
    %692 = vmatprep.subr.mxu0 0.0
    %693 = vmatpush1.msra.mxu0 0.0
    %694 = vmatprep.subr.mxu0 0.0
    %695 = vmatpush1.msra.mxu0 0.0
    %696 = vmatprep.subr.mxu0 0.0
    %697 = vmatpush1.msra.mxu0 0.0
    %698 = vmatprep.subr.mxu0 0.0
    %699 = vmatpush1.msra.mxu0 0.0
    %700 = vmatprep.subr.mxu0 0.0
    %701 = vmatpush1.msra.mxu0 0.0
    %702 = vmatprep.subr.mxu0 0.0
    %703 = vmatpush1.msra.mxu0 0.0
    %704 = vmatprep.subr.mxu0 0.0
    %705 = vmatpush1.msra.mxu0 0.0
    %706 = vmatprep.subr.mxu0 0.0
    %707 = vmatpush1.msra.mxu0 0.0
    %708 = vmatprep.subr.mxu0 0.0
    %709 = vmatpush1.msra.mxu0 0.0
    %710 = vmatprep.subr.mxu0 0.0
    %711 = vmatpush1.msra.mxu0 0.0
    %712 = vmatprep.subr.mxu0 0.0
    %713 = vmatpush1.msra.mxu0 0.0
    %714 = vmatprep.subr.mxu0 0.0
    %715 = vmatpush1.msra.mxu0 0.0
    %716 = vmatprep.subr.mxu0 0.0
    %717 = vmatpush1.msra.mxu0 0.0
    %718 = vmatprep.subr.mxu0 0.0
    %719 = vmatpush1.msra.mxu0 0.0
    %720 = vmatprep.subr.mxu0 0.0
    %721 = vmatpush1.msra.mxu0 0.0
    %722 = vmatprep.mubr.f32.mxu0 0.0
    %723 = vmatmul.mubr.f32.gmra.mrb[0].mxu0 %v656
    %v724 = vpop.f32.mrb[0].mxu0
    %v725 = vadd.f32 %v652, %v724
    %v726 = vpop.f32.mrb[0].mxu0
    %727 = vdwg.mxu0
    %728 = vrot.lane.b32.xlu0 %v108, 112
    %v729 = vpop.permute.xlu0 %728
    %v730 = vsel %vm254, %v729, 0
    %732 = vmatprep.subr.mxu0 0.0
    %733 = vmatpush1.msra.mxu0 %v225
    %734 = vmatprep.subr.mxu0 0.0
    %735 = vmatpush1.msra.mxu0 0.0
    %736 = vmatprep.subr.mxu0 0.0
    %737 = vmatpush1.msra.mxu0 0.0
    %738 = vmatprep.subr.mxu0 0.0
    %739 = vmatpush1.msra.mxu0 0.0
    %740 = vmatprep.subr.mxu0 0.0
    %741 = vmatpush1.msra.mxu0 0.0
    %742 = vmatprep.subr.mxu0 0.0
    %743 = vmatpush1.msra.mxu0 0.0
    %744 = vmatprep.subr.mxu0 0.0
    %745 = vmatpush1.msra.mxu0 0.0
    %746 = vmatprep.subr.mxu0 0.0
    %747 = vmatpush1.msra.mxu0 0.0
    %748 = vmatprep.subr.mxu0 0.0
    %749 = vmatpush1.msra.mxu0 0.0
    %750 = vmatprep.subr.mxu0 0.0
    %751 = vmatpush1.msra.mxu0 0.0
    %752 = vmatprep.subr.mxu0 0.0
    %753 = vmatpush1.msra.mxu0 0.0
    %754 = vmatprep.subr.mxu0 0.0
    %755 = vmatpush1.msra.mxu0 0.0
    %756 = vmatprep.subr.mxu0 0.0
    %757 = vmatpush1.msra.mxu0 0.0
    %758 = vmatprep.subr.mxu0 0.0
    %759 = vmatpush1.msra.mxu0 0.0
    %760 = vmatprep.subr.mxu0 0.0
    %761 = vmatpush1.msra.mxu0 0.0
    %762 = vmatprep.subr.mxu0 0.0
    %763 = vmatpush1.msra.mxu0 0.0
    %764 = vmatprep.subr.mxu0 0.0
    %765 = vmatpush1.msra.mxu0 0.0
    %766 = vmatprep.subr.mxu0 0.0
    %767 = vmatpush1.msra.mxu0 0.0
    %768 = vmatprep.subr.mxu0 0.0
    %769 = vmatpush1.msra.mxu0 0.0
    %770 = vmatprep.subr.mxu0 0.0
    %771 = vmatpush1.msra.mxu0 0.0
    %772 = vmatprep.subr.mxu0 0.0
    %773 = vmatpush1.msra.mxu0 0.0
    %774 = vmatprep.subr.mxu0 0.0
    %775 = vmatpush1.msra.mxu0 0.0
    %776 = vmatprep.subr.mxu0 0.0
    %777 = vmatpush1.msra.mxu0 0.0
    %778 = vmatprep.subr.mxu0 0.0
    %779 = vmatpush1.msra.mxu0 0.0
    %780 = vmatprep.subr.mxu0 0.0
    %781 = vmatpush1.msra.mxu0 0.0
    %782 = vmatprep.subr.mxu0 0.0
    %783 = vmatpush1.msra.mxu0 0.0
    %784 = vmatprep.subr.mxu0 0.0
    %785 = vmatpush1.msra.mxu0 0.0
    %786 = vmatprep.subr.mxu0 0.0
    %787 = vmatpush1.msra.mxu0 0.0
    %788 = vmatprep.subr.mxu0 0.0
    %789 = vmatpush1.msra.mxu0 0.0
    %790 = vmatprep.subr.mxu0 0.0
    %791 = vmatpush1.msra.mxu0 0.0
    %792 = vmatprep.subr.mxu0 0.0
    %793 = vmatpush1.msra.mxu0 0.0
    %794 = vmatprep.subr.mxu0 0.0
    %795 = vmatpush1.msra.mxu0 0.0
    %796 = vmatprep.mubr.f32.mxu0 0.0
    %797 = vmatmul.mubr.f32.gmra.mrb[0].mxu0 %v730
    %v798 = vpop.f32.mrb[0].mxu0
    %v799 = vadd.f32 0.0, %v798
    %v800 = vpop.f32.mrb[0].mxu0
    %801 = vdwg.mxu0
    %v802 = vmul.f32 %v799, 0.35355338
    %v803 = vadd.f32 %v802, %v253
    %v804 = vsel %vm254, %v803, -inf
    %805 = vmax.xlane.f32.xlu0 %v804
    %v806 = vpop.xlane.xlu0 %805
    %v807 = vsub.f32 %v803, %v806
    %v808 = vmul.f32 %v807, 1.442695
    %v809 = vpow.pop %v808
    %v810 = vsel %vm254, %v809, 0.0
    %811 = vadd.xlane.f32.xlu0 %v810
    %v812 = vpop.xlane.xlu0 %811
    %v813 = vrcp.pop %v812
    %v814 = vmul.f32 %v809, %v813
    %v816 = vsel %vm254, %v814, 0
    %v819 = vsel %vm254, %v245, 0
    %821 = vmatprep.subr.mxu0 0.0
    %822 = vmatpush1.xpose.msra.mxu0 %v819
    %823 = vmatprep.subr.mxu0 0.0
    %824 = vmatpush1.xpose.msra.mxu0 0.0
    %825 = vmatprep.subr.mxu0 0.0
    %826 = vmatpush1.xpose.msra.mxu0 0.0
    %827 = vmatprep.subr.mxu0 0.0
    %828 = vmatpush1.xpose.msra.mxu0 0.0
    %829 = vmatprep.subr.mxu0 0.0
    %830 = vmatpush1.xpose.msra.mxu0 0.0
    %831 = vmatprep.subr.mxu0 0.0
    %832 = vmatpush1.xpose.msra.mxu0 0.0
    %833 = vmatprep.subr.mxu0 0.0
    %834 = vmatpush1.xpose.msra.mxu0 0.0
    %835 = vmatprep.subr.mxu0 0.0
    %836 = vmatpush1.xpose.msra.mxu0 0.0
    %837 = vmatprep.subr.mxu0 0.0
    %838 = vmatpush1.xpose.msra.mxu0 0.0
    %839 = vmatprep.subr.mxu0 0.0
    %840 = vmatpush1.xpose.msra.mxu0 0.0
    %841 = vmatprep.subr.mxu0 0.0
    %842 = vmatpush1.xpose.msra.mxu0 0.0
    %843 = vmatprep.subr.mxu0 0.0
    %844 = vmatpush1.xpose.msra.mxu0 0.0
    %845 = vmatprep.subr.mxu0 0.0
    %846 = vmatpush1.xpose.msra.mxu0 0.0
    %847 = vmatprep.subr.mxu0 0.0
    %848 = vmatpush1.xpose.msra.mxu0 0.0
    %849 = vmatprep.subr.mxu0 0.0
    %850 = vmatpush1.xpose.msra.mxu0 0.0
    %851 = vmatprep.subr.mxu0 0.0
    %852 = vmatpush1.xpose.msra.mxu0 0.0
    %853 = vmatprep.subr.mxu0 0.0
    %854 = vmatpush1.xpose.msra.mxu0 0.0
    %855 = vmatprep.subr.mxu0 0.0
    %856 = vmatpush1.xpose.msra.mxu0 0.0
    %857 = vmatprep.subr.mxu0 0.0
    %858 = vmatpush1.xpose.msra.mxu0 0.0
    %859 = vmatprep.subr.mxu0 0.0
    %860 = vmatpush1.xpose.msra.mxu0 0.0
    %861 = vmatprep.subr.mxu0 0.0
    %862 = vmatpush1.xpose.msra.mxu0 0.0
    %863 = vmatprep.subr.mxu0 0.0
    %864 = vmatpush1.xpose.msra.mxu0 0.0
    %865 = vmatprep.subr.mxu0 0.0
    %866 = vmatpush1.xpose.msra.mxu0 0.0
    %867 = vmatprep.subr.mxu0 0.0
    %868 = vmatpush1.xpose.msra.mxu0 0.0
    %869 = vmatprep.subr.mxu0 0.0
    %870 = vmatpush1.xpose.msra.mxu0 0.0
    %871 = vmatprep.subr.mxu0 0.0
    %872 = vmatpush1.xpose.msra.mxu0 0.0
    %873 = vmatprep.subr.mxu0 0.0
    %874 = vmatpush1.xpose.msra.mxu0 0.0
    %875 = vmatprep.subr.mxu0 0.0
    %876 = vmatpush1.xpose.msra.mxu0 0.0
    %877 = vmatprep.subr.mxu0 0.0
    %878 = vmatpush1.xpose.msra.mxu0 0.0
    %879 = vmatprep.subr.mxu0 0.0
    %880 = vmatpush1.xpose.msra.mxu0 0.0
    %881 = vmatprep.subr.mxu0 0.0
    %882 = vmatpush1.xpose.msra.mxu0 0.0
    %883 = vmatprep.subr.mxu0 0.0
    %884 = vmatpush1.xpose.msra.mxu0 0.0
    %885 = vmatprep.mubr.f32.mxu0 0.0
    %886 = vmatmul.mubr.f32.gmra.mrb[0].mxu0 %v816
    %v887 = vpop.f32.mrb[0].mxu0
    %v888 = vadd.f32 0.0, %v887
    %v889 = vpop.f32.mrb[0].mxu0
    %890 = vdwg.mxu0
    %v891 = vld [vmem:[%s4 + $0x70] sm:$0xff]
    %v893 = vsel %vm254, %v888, 0
    %895 = vmatprep.subr.mxu0 0.0
    %896 = vmatpush1.msra.mxu0 %v891
    %897 = vmatprep.subr.mxu0 0.0
    %898 = vmatpush1.msra.mxu0 0.0
    %899 = vmatprep.subr.mxu0 0.0
    %900 = vmatpush1.msra.mxu0 0.0
    %901 = vmatprep.subr.mxu0 0.0
    %902 = vmatpush1.msra.mxu0 0.0
    %903 = vmatprep.subr.mxu0 0.0
    %904 = vmatpush1.msra.mxu0 0.0
    %905 = vmatprep.subr.mxu0 0.0
    %906 = vmatpush1.msra.mxu0 0.0
    %907 = vmatprep.subr.mxu0 0.0
    %908 = vmatpush1.msra.mxu0 0.0
    %909 = vmatprep.subr.mxu0 0.0
    %910 = vmatpush1.msra.mxu0 0.0
    %911 = vmatprep.subr.mxu0 0.0
    %912 = vmatpush1.msra.mxu0 0.0
    %913 = vmatprep.subr.mxu0 0.0
    %914 = vmatpush1.msra.mxu0 0.0
    %915 = vmatprep.subr.mxu0 0.0
    %916 = vmatpush1.msra.mxu0 0.0
    %917 = vmatprep.subr.mxu0 0.0
    %918 = vmatpush1.msra.mxu0 0.0
    %919 = vmatprep.subr.mxu0 0.0
    %920 = vmatpush1.msra.mxu0 0.0
    %921 = vmatprep.subr.mxu0 0.0
    %922 = vmatpush1.msra.mxu0 0.0
    %923 = vmatprep.subr.mxu0 0.0
    %924 = vmatpush1.msra.mxu0 0.0
    %925 = vmatprep.subr.mxu0 0.0
    %926 = vmatpush1.msra.mxu0 0.0
    %927 = vmatprep.subr.mxu0 0.0
    %928 = vmatpush1.msra.mxu0 0.0
    %929 = vmatprep.subr.mxu0 0.0
    %930 = vmatpush1.msra.mxu0 0.0
    %931 = vmatprep.subr.mxu0 0.0
    %932 = vmatpush1.msra.mxu0 0.0
    %933 = vmatprep.subr.mxu0 0.0
    %934 = vmatpush1.msra.mxu0 0.0
    %935 = vmatprep.subr.mxu0 0.0
    %936 = vmatpush1.msra.mxu0 0.0
    %937 = vmatprep.subr.mxu0 0.0
    %938 = vmatpush1.msra.mxu0 0.0
    %939 = vmatprep.subr.mxu0 0.0
    %940 = vmatpush1.msra.mxu0 0.0
    %941 = vmatprep.subr.mxu0 0.0
    %942 = vmatpush1.msra.mxu0 0.0
    %943 = vmatprep.subr.mxu0 0.0
    %944 = vmatpush1.msra.mxu0 0.0
    %945 = vmatprep.subr.mxu0 0.0
    %946 = vmatpush1.msra.mxu0 0.0
    %947 = vmatprep.subr.mxu0 0.0
    %948 = vmatpush1.msra.mxu0 0.0
    %949 = vmatprep.subr.mxu0 0.0
    %950 = vmatpush1.msra.mxu0 0.0
    %951 = vmatprep.subr.mxu0 0.0
    %952 = vmatpush1.msra.mxu0 0.0
    %953 = vmatprep.subr.mxu0 0.0
    %954 = vmatpush1.msra.mxu0 0.0
    %955 = vmatprep.subr.mxu0 0.0
    %956 = vmatpush1.msra.mxu0 0.0
    %957 = vmatprep.subr.mxu0 0.0
    %958 = vmatpush1.msra.mxu0 0.0
    %959 = vmatprep.mubr.f32.mxu0 0.0
    %960 = vmatmul.mubr.f32.gmra.mrb[0].mxu0 %v893
    %v961 = vpop.f32.mrb[0].mxu0
    %v962 = vadd.f32 0.0, %v961
    %v963 = vpop.f32.mrb[0].mxu0
    %964 = vdwg.mxu0
    %v965 = vadd.f32 %v725, %v962
    %966 = vrot.lane.b32.xlu0 %v108, 104
    %v967 = vpop.permute.xlu0 %966
    %v968 = vsel %vm254, %v967, 0
    %970 = vmatprep.subr.mxu0 0.0
    %971 = vmatpush1.msra.mxu0 %v230
    %972 = vmatprep.subr.mxu0 0.0
    %973 = vmatpush1.msra.mxu0 0.0
    %974 = vmatprep.subr.mxu0 0.0
    %975 = vmatpush1.msra.mxu0 0.0
    %976 = vmatprep.subr.mxu0 0.0
    %977 = vmatpush1.msra.mxu0 0.0
    %978 = vmatprep.subr.mxu0 0.0
    %979 = vmatpush1.msra.mxu0 0.0
    %980 = vmatprep.subr.mxu0 0.0
    %981 = vmatpush1.msra.mxu0 0.0
    %982 = vmatprep.subr.mxu0 0.0
    %983 = vmatpush1.msra.mxu0 0.0
    %984 = vmatprep.subr.mxu0 0.0
    %985 = vmatpush1.msra.mxu0 0.0
    %986 = vmatprep.subr.mxu0 0.0
    %987 = vmatpush1.msra.mxu0 0.0
    %988 = vmatprep.subr.mxu0 0.0
    %989 = vmatpush1.msra.mxu0 0.0
    %990 = vmatprep.subr.mxu0 0.0
    %991 = vmatpush1.msra.mxu0 0.0
    %992 = vmatprep.subr.mxu0 0.0
    %993 = vmatpush1.msra.mxu0 0.0
    %994 = vmatprep.subr.mxu0 0.0
    %995 = vmatpush1.msra.mxu0 0.0
    %996 = vmatprep.subr.mxu0 0.0
    %997 = vmatpush1.msra.mxu0 0.0
    %998 = vmatprep.subr.mxu0 0.0
    %999 = vmatpush1.msra.mxu0 0.0
    %1000 = vmatprep.subr.mxu0 0.0
    %1001 = vmatpush1.msra.mxu0 0.0
    %1002 = vmatprep.subr.mxu0 0.0
    %1003 = vmatpush1.msra.mxu0 0.0
    %1004 = vmatprep.subr.mxu0 0.0
    %1005 = vmatpush1.msra.mxu0 0.0
    %1006 = vmatprep.subr.mxu0 0.0
    %1007 = vmatpush1.msra.mxu0 0.0
    %1008 = vmatprep.subr.mxu0 0.0
    %1009 = vmatpush1.msra.mxu0 0.0
    %1010 = vmatprep.subr.mxu0 0.0
    %1011 = vmatpush1.msra.mxu0 0.0
    %1012 = vmatprep.subr.mxu0 0.0
    %1013 = vmatpush1.msra.mxu0 0.0
    %1014 = vmatprep.subr.mxu0 0.0
    %1015 = vmatpush1.msra.mxu0 0.0
    %1016 = vmatprep.subr.mxu0 0.0
    %1017 = vmatpush1.msra.mxu0 0.0
    %1018 = vmatprep.subr.mxu0 0.0
    %1019 = vmatpush1.msra.mxu0 0.0
    %1020 = vmatprep.subr.mxu0 0.0
    %1021 = vmatpush1.msra.mxu0 0.0
    %1022 = vmatprep.subr.mxu0 0.0
    %1023 = vmatpush1.msra.mxu0 0.0
    %1024 = vmatprep.subr.mxu0 0.0
    %1025 = vmatpush1.msra.mxu0 0.0
    %1026 = vmatprep.subr.mxu0 0.0
    %1027 = vmatpush1.msra.mxu0 0.0
    %1028 = vmatprep.subr.mxu0 0.0
    %1029 = vmatpush1.msra.mxu0 0.0
    %1030 = vmatprep.subr.mxu0 0.0
    %1031 = vmatpush1.msra.mxu0 0.0
    %1032 = vmatprep.subr.mxu0 0.0
    %1033 = vmatpush1.msra.mxu0 0.0
    %1034 = vmatprep.mubr.f32.mxu0 0.0
    %1035 = vmatmul.mubr.f32.gmra.mrb[0].mxu0 %v968
    %v1036 = vpop.f32.mrb[0].mxu0
    %v1037 = vadd.f32 0.0, %v1036
    %v1038 = vpop.f32.mrb[0].mxu0
    %1039 = vdwg.mxu0
    %v1040 = vmul.f32 %v1037, 0.35355338
    %v1041 = vadd.f32 %v1040, %v253
    %v1042 = vsel %vm254, %v1041, -inf
    %1043 = vmax.xlane.f32.xlu0 %v1042
    %v1044 = vpop.xlane.xlu0 %1043
    %v1045 = vsub.f32 %v1041, %v1044
    %v1046 = vmul.f32 %v1045, 1.442695
    %v1047 = vpow.pop %v1046
    %v1048 = vsel %vm254, %v1047, 0.0
    %1049 = vadd.xlane.f32.xlu0 %v1048
    %v1050 = vpop.xlane.xlu0 %1049
    %v1051 = vrcp.pop %v1050
    %v1052 = vmul.f32 %v1047, %v1051
    %v1054 = vsel %vm254, %v1052, 0
    %v1057 = vsel %vm254, %v250, 0
    %1059 = vmatprep.subr.mxu0 0.0
    %1060 = vmatpush1.xpose.msra.mxu0 %v1057
    %1061 = vmatprep.subr.mxu0 0.0
    %1062 = vmatpush1.xpose.msra.mxu0 0.0
    %1063 = vmatprep.subr.mxu0 0.0
    %1064 = vmatpush1.xpose.msra.mxu0 0.0
    %1065 = vmatprep.subr.mxu0 0.0
    %1066 = vmatpush1.xpose.msra.mxu0 0.0
    %1067 = vmatprep.subr.mxu0 0.0
    %1068 = vmatpush1.xpose.msra.mxu0 0.0
    %1069 = vmatprep.subr.mxu0 0.0
    %1070 = vmatpush1.xpose.msra.mxu0 0.0
    %1071 = vmatprep.subr.mxu0 0.0
    %1072 = vmatpush1.xpose.msra.mxu0 0.0
    %1073 = vmatprep.subr.mxu0 0.0
    %1074 = vmatpush1.xpose.msra.mxu0 0.0
    %1075 = vmatprep.subr.mxu0 0.0
    %1076 = vmatpush1.xpose.msra.mxu0 0.0
    %1077 = vmatprep.subr.mxu0 0.0
    %1078 = vmatpush1.xpose.msra.mxu0 0.0
    %1079 = vmatprep.subr.mxu0 0.0
    %1080 = vmatpush1.xpose.msra.mxu0 0.0
    %1081 = vmatprep.subr.mxu0 0.0
    %1082 = vmatpush1.xpose.msra.mxu0 0.0
    %1083 = vmatprep.subr.mxu0 0.0
    %1084 = vmatpush1.xpose.msra.mxu0 0.0
    %1085 = vmatprep.subr.mxu0 0.0
    %1086 = vmatpush1.xpose.msra.mxu0 0.0
    %1087 = vmatprep.subr.mxu0 0.0
    %1088 = vmatpush1.xpose.msra.mxu0 0.0
    %1089 = vmatprep.subr.mxu0 0.0
    %1090 = vmatpush1.xpose.msra.mxu0 0.0
    %1091 = vmatprep.subr.mxu0 0.0
    %1092 = vmatpush1.xpose.msra.mxu0 0.0
    %1093 = vmatprep.subr.mxu0 0.0
    %1094 = vmatpush1.xpose.msra.mxu0 0.0
    %1095 = vmatprep.subr.mxu0 0.0
    %1096 = vmatpush1.xpose.msra.mxu0 0.0
    %1097 = vmatprep.subr.mxu0 0.0
    %1098 = vmatpush1.xpose.msra.mxu0 0.0
    %1099 = vmatprep.subr.mxu0 0.0
    %1100 = vmatpush1.xpose.msra.mxu0 0.0
    %1101 = vmatprep.subr.mxu0 0.0
    %1102 = vmatpush1.xpose.msra.mxu0 0.0
    %1103 = vmatprep.subr.mxu0 0.0
    %1104 = vmatpush1.xpose.msra.mxu0 0.0
    %1105 = vmatprep.subr.mxu0 0.0
    %1106 = vmatpush1.xpose.msra.mxu0 0.0
    %1107 = vmatprep.subr.mxu0 0.0
    %1108 = vmatpush1.xpose.msra.mxu0 0.0
    %1109 = vmatprep.subr.mxu0 0.0
    %1110 = vmatpush1.xpose.msra.mxu0 0.0
    %1111 = vmatprep.subr.mxu0 0.0
    %1112 = vmatpush1.xpose.msra.mxu0 0.0
    %1113 = vmatprep.subr.mxu0 0.0
    %1114 = vmatpush1.xpose.msra.mxu0 0.0
    %1115 = vmatprep.subr.mxu0 0.0
    %1116 = vmatpush1.xpose.msra.mxu0 0.0
    %1117 = vmatprep.subr.mxu0 0.0
    %1118 = vmatpush1.xpose.msra.mxu0 0.0
    %1119 = vmatprep.subr.mxu0 0.0
    %1120 = vmatpush1.xpose.msra.mxu0 0.0
    %1121 = vmatprep.subr.mxu0 0.0
    %1122 = vmatpush1.xpose.msra.mxu0 0.0
    %1123 = vmatprep.mubr.f32.mxu0 0.0
    %1124 = vmatmul.mubr.f32.gmra.mrb[0].mxu0 %v1054
    %v1125 = vpop.f32.mrb[0].mxu0
    %v1126 = vadd.f32 0.0, %v1125
    %v1127 = vpop.f32.mrb[0].mxu0
    %1128 = vdwg.mxu0
    %v1129 = vld [vmem:[%s4 + $0x78] sm:$0xff]
    %v1131 = vsel %vm254, %v1126, 0
    %1133 = vmatprep.subr.mxu0 0.0
    %1134 = vmatpush1.msra.mxu0 %v1129
    %1135 = vmatprep.subr.mxu0 0.0
    %1136 = vmatpush1.msra.mxu0 0.0
    %1137 = vmatprep.subr.mxu0 0.0
    %1138 = vmatpush1.msra.mxu0 0.0
    %1139 = vmatprep.subr.mxu0 0.0
    %1140 = vmatpush1.msra.mxu0 0.0
    %1141 = vmatprep.subr.mxu0 0.0
    %1142 = vmatpush1.msra.mxu0 0.0
    %1143 = vmatprep.subr.mxu0 0.0
    %1144 = vmatpush1.msra.mxu0 0.0
    %1145 = vmatprep.subr.mxu0 0.0
    %1146 = vmatpush1.msra.mxu0 0.0
    %1147 = vmatprep.subr.mxu0 0.0
    %1148 = vmatpush1.msra.mxu0 0.0
    %1149 = vmatprep.subr.mxu0 0.0
    %1150 = vmatpush1.msra.mxu0 0.0
    %1151 = vmatprep.subr.mxu0 0.0
    %1152 = vmatpush1.msra.mxu0 0.0
    %1153 = vmatprep.subr.mxu0 0.0
    %1154 = vmatpush1.msra.mxu0 0.0
    %1155 = vmatprep.subr.mxu0 0.0
    %1156 = vmatpush1.msra.mxu0 0.0
    %1157 = vmatprep.subr.mxu0 0.0
    %1158 = vmatpush1.msra.mxu0 0.0
    %1159 = vmatprep.subr.mxu0 0.0
    %1160 = vmatpush1.msra.mxu0 0.0
    %1161 = vmatprep.subr.mxu0 0.0
    %1162 = vmatpush1.msra.mxu0 0.0
    %1163 = vmatprep.subr.mxu0 0.0
    %1164 = vmatpush1.msra.mxu0 0.0
    %1165 = vmatprep.subr.mxu0 0.0
    %1166 = vmatpush1.msra.mxu0 0.0
    %1167 = vmatprep.subr.mxu0 0.0
    %1168 = vmatpush1.msra.mxu0 0.0
    %1169 = vmatprep.subr.mxu0 0.0
    %1170 = vmatpush1.msra.mxu0 0.0
    %1171 = vmatprep.subr.mxu0 0.0
    %1172 = vmatpush1.msra.mxu0 0.0
    %1173 = vmatprep.subr.mxu0 0.0
    %1174 = vmatpush1.msra.mxu0 0.0
    %1175 = vmatprep.subr.mxu0 0.0
    %1176 = vmatpush1.msra.mxu0 0.0
    %1177 = vmatprep.subr.mxu0 0.0
    %1178 = vmatpush1.msra.mxu0 0.0
    %1179 = vmatprep.subr.mxu0 0.0
    %1180 = vmatpush1.msra.mxu0 0.0
    %1181 = vmatprep.subr.mxu0 0.0
    %1182 = vmatpush1.msra.mxu0 0.0
    %1183 = vmatprep.subr.mxu0 0.0
    %1184 = vmatpush1.msra.mxu0 0.0
    %1185 = vmatprep.subr.mxu0 0.0
    %1186 = vmatpush1.msra.mxu0 0.0
    %1187 = vmatprep.subr.mxu0 0.0
    %1188 = vmatpush1.msra.mxu0 0.0
    %1189 = vmatprep.subr.mxu0 0.0
    %1190 = vmatpush1.msra.mxu0 0.0
    %1191 = vmatprep.subr.mxu0 0.0
    %1192 = vmatpush1.msra.mxu0 0.0
    %1193 = vmatprep.subr.mxu0 0.0
    %1194 = vmatpush1.msra.mxu0 0.0
    %1195 = vmatprep.subr.mxu0 0.0
    %1196 = vmatpush1.msra.mxu0 0.0
    %1197 = vmatprep.mubr.f32.mxu0 0.0
    %1198 = vmatmul.mubr.f32.gmra.mrb[0].mxu0 %v1131
    %v1199 = vpop.f32.mrb[0].mxu0
    %v1200 = vadd.f32 0.0, %v1199
    %v1201 = vpop.f32.mrb[0].mxu0
    %1202 = vdwg.mxu0
    %v1203 = vadd.f32 %v965, %v1200
    %s1204 = scalar_lea.vmem %s2, 8
    %v1205 = vld [vmem:[%s1204] sm:$0xff]
    %1207 = vrot.lane.b32.xlu0 %v215, 120
    %v1208 = vpop.permute.xlu0 %1207
    %v1211 = vsel %vm254, %v113, 0
    %1213 = vmatprep.subr.mxu0 0.0
    %1214 = vmatpush1.msra.mxu0 %v1208
    %1215 = vmatprep.subr.mxu0 0.0
    %1216 = vmatpush1.msra.mxu0 0.0
    %1217 = vmatprep.subr.mxu0 0.0
    %1218 = vmatpush1.msra.mxu0 0.0
    %1219 = vmatprep.subr.mxu0 0.0
    %1220 = vmatpush1.msra.mxu0 0.0
    %1221 = vmatprep.subr.mxu0 0.0
    %1222 = vmatpush1.msra.mxu0 0.0
    %1223 = vmatprep.subr.mxu0 0.0
    %1224 = vmatpush1.msra.mxu0 0.0
    %1225 = vmatprep.subr.mxu0 0.0
    %1226 = vmatpush1.msra.mxu0 0.0
    %1227 = vmatprep.subr.mxu0 0.0
    %1228 = vmatpush1.msra.mxu0 0.0
    %1229 = vmatprep.subr.mxu0 0.0
    %1230 = vmatpush1.msra.mxu0 0.0
    %1231 = vmatprep.subr.mxu0 0.0
    %1232 = vmatpush1.msra.mxu0 0.0
    %1233 = vmatprep.subr.mxu0 0.0
    %1234 = vmatpush1.msra.mxu0 0.0
    %1235 = vmatprep.subr.mxu0 0.0
    %1236 = vmatpush1.msra.mxu0 0.0
    %1237 = vmatprep.subr.mxu0 0.0
    %1238 = vmatpush1.msra.mxu0 0.0
    %1239 = vmatprep.subr.mxu0 0.0
    %1240 = vmatpush1.msra.mxu0 0.0
    %1241 = vmatprep.subr.mxu0 0.0
    %1242 = vmatpush1.msra.mxu0 0.0
    %1243 = vmatprep.subr.mxu0 0.0
    %1244 = vmatpush1.msra.mxu0 0.0
    %1245 = vmatprep.subr.mxu0 0.0
    %1246 = vmatpush1.msra.mxu0 0.0
    %1247 = vmatprep.subr.mxu0 0.0
    %1248 = vmatpush1.msra.mxu0 0.0
    %1249 = vmatprep.subr.mxu0 0.0
    %1250 = vmatpush1.msra.mxu0 0.0
    %1251 = vmatprep.subr.mxu0 0.0
    %1252 = vmatpush1.msra.mxu0 0.0
    %1253 = vmatprep.subr.mxu0 0.0
    %1254 = vmatpush1.msra.mxu0 0.0
    %1255 = vmatprep.subr.mxu0 0.0
    %1256 = vmatpush1.msra.mxu0 0.0
    %1257 = vmatprep.subr.mxu0 0.0
    %1258 = vmatpush1.msra.mxu0 0.0
    %1259 = vmatprep.subr.mxu0 0.0
    %1260 = vmatpush1.msra.mxu0 0.0
    %1261 = vmatprep.subr.mxu0 0.0
    %1262 = vmatpush1.msra.mxu0 0.0
    %1263 = vmatprep.subr.mxu0 0.0
    %1264 = vmatpush1.msra.mxu0 0.0
    %1265 = vmatprep.subr.mxu0 0.0
    %1266 = vmatpush1.msra.mxu0 0.0
    %1267 = vmatprep.subr.mxu0 0.0
    %1268 = vmatpush1.msra.mxu0 0.0
    %1269 = vmatprep.subr.mxu0 0.0
    %1270 = vmatpush1.msra.mxu0 0.0
    %1271 = vmatprep.subr.mxu0 0.0
    %1272 = vmatpush1.msra.mxu0 0.0
    %1273 = vmatprep.subr.mxu0 0.0
    %1274 = vmatpush1.msra.mxu0 0.0
    %1275 = vmatprep.subr.mxu0 0.0
    %1276 = vmatpush1.msra.mxu0 0.0
    %1277 = vmatprep.mubr.f32.mxu0 0.0
    %1278 = vmatmul.mubr.f32.gmra.mrb[0].mxu0 %v1211
    %v1279 = vpop.f32.mrb[0].mxu0
    %v1280 = vadd.f32 0.0, %v1279
    %v1281 = vpop.f32.mrb[0].mxu0
    %1282 = vdwg.mxu0
    %v1283 = vmul.f32 %v1280, 0.35355338
    %v1284 = vadd.f32 %v1283, %v1205
    %v1285 = vsel %vm254, %v1284, -inf
    %1286 = vmax.xlane.f32.xlu0 %v1285
    %v1287 = vpop.xlane.xlu0 %1286
    %v1288 = vsub.f32 %v1284, %v1287
    %v1289 = vmul.f32 %v1288, 1.442695
    %v1290 = vpow.pop %v1289
    %v1291 = vsel %vm254, %v1290, 0.0
    %1292 = vadd.xlane.f32.xlu0 %v1291
    %v1293 = vpop.xlane.xlu0 %1292
    %v1294 = vrcp.pop %v1293
    %v1295 = vmul.f32 %v1290, %v1294
    %1296 = vrot.lane.b32.xlu0 %v235, 120
    %v1297 = vpop.permute.xlu0 %1296
    %v1299 = vsel %vm254, %v1295, 0
    %v1301 = vsel %vm254, %v1297, 0
    %1303 = vmatprep.subr.mxu0 0.0
    %1304 = vmatpush1.xpose.msra.mxu0 %v1301
    %1305 = vmatprep.subr.mxu0 0.0
    %1306 = vmatpush1.xpose.msra.mxu0 0.0
    %1307 = vmatprep.subr.mxu0 0.0
    %1308 = vmatpush1.xpose.msra.mxu0 0.0
    %1309 = vmatprep.subr.mxu0 0.0
    %1310 = vmatpush1.xpose.msra.mxu0 0.0
    %1311 = vmatprep.subr.mxu0 0.0
    %1312 = vmatpush1.xpose.msra.mxu0 0.0
    %1313 = vmatprep.subr.mxu0 0.0
    %1314 = vmatpush1.xpose.msra.mxu0 0.0
    %1315 = vmatprep.subr.mxu0 0.0
    %1316 = vmatpush1.xpose.msra.mxu0 0.0
    %1317 = vmatprep.subr.mxu0 0.0
    %1318 = vmatpush1.xpose.msra.mxu0 0.0
    %1319 = vmatprep.subr.mxu0 0.0
    %1320 = vmatpush1.xpose.msra.mxu0 0.0
    %1321 = vmatprep.subr.mxu0 0.0
    %1322 = vmatpush1.xpose.msra.mxu0 0.0
    %1323 = vmatprep.subr.mxu0 0.0
    %1324 = vmatpush1.xpose.msra.mxu0 0.0
    %1325 = vmatprep.subr.mxu0 0.0
    %1326 = vmatpush1.xpose.msra.mxu0 0.0
    %1327 = vmatprep.subr.mxu0 0.0
    %1328 = vmatpush1.xpose.msra.mxu0 0.0
    %1329 = vmatprep.subr.mxu0 0.0
    %1330 = vmatpush1.xpose.msra.mxu0 0.0
    %1331 = vmatprep.subr.mxu0 0.0
    %1332 = vmatpush1.xpose.msra.mxu0 0.0
    %1333 = vmatprep.subr.mxu0 0.0
    %1334 = vmatpush1.xpose.msra.mxu0 0.0
    %1335 = vmatprep.subr.mxu0 0.0
    %1336 = vmatpush1.xpose.msra.mxu0 0.0
    %1337 = vmatprep.subr.mxu0 0.0
    %1338 = vmatpush1.xpose.msra.mxu0 0.0
    %1339 = vmatprep.subr.mxu0 0.0
    %1340 = vmatpush1.xpose.msra.mxu0 0.0
    %1341 = vmatprep.subr.mxu0 0.0
    %1342 = vmatpush1.xpose.msra.mxu0 0.0
    %1343 = vmatprep.subr.mxu0 0.0
    %1344 = vmatpush1.xpose.msra.mxu0 0.0
    %1345 = vmatprep.subr.mxu0 0.0
    %1346 = vmatpush1.xpose.msra.mxu0 0.0
    %1347 = vmatprep.subr.mxu0 0.0
    %1348 = vmatpush1.xpose.msra.mxu0 0.0
    %1349 = vmatprep.subr.mxu0 0.0
    %1350 = vmatpush1.xpose.msra.mxu0 0.0
    %1351 = vmatprep.subr.mxu0 0.0
    %1352 = vmatpush1.xpose.msra.mxu0 0.0
    %1353 = vmatprep.subr.mxu0 0.0
    %1354 = vmatpush1.xpose.msra.mxu0 0.0
    %1355 = vmatprep.subr.mxu0 0.0
    %1356 = vmatpush1.xpose.msra.mxu0 0.0
    %1357 = vmatprep.subr.mxu0 0.0
    %1358 = vmatpush1.xpose.msra.mxu0 0.0
    %1359 = vmatprep.subr.mxu0 0.0
    %1360 = vmatpush1.xpose.msra.mxu0 0.0
    %1361 = vmatprep.subr.mxu0 0.0
    %1362 = vmatpush1.xpose.msra.mxu0 0.0
    %1363 = vmatprep.subr.mxu0 0.0
    %1364 = vmatpush1.xpose.msra.mxu0 0.0
    %1365 = vmatprep.subr.mxu0 0.0
    %1366 = vmatpush1.xpose.msra.mxu0 0.0
    %1367 = vmatprep.mubr.f32.mxu0 0.0
    %1368 = vmatmul.mubr.f32.gmra.mrb[0].mxu0 %v1299
    %v1369 = vpop.f32.mrb[0].mxu0
    %v1370 = vadd.f32 0.0, %v1369
    %v1371 = vpop.f32.mrb[0].mxu0
    %1372 = vdwg.mxu0
    %1373 = vrot.lane.b32.xlu0 %v113, 120
    %v1374 = vpop.permute.xlu0 %1373
    %1376 = vrot.lane.b32.xlu0 %v220, 120
    %v1377 = vpop.permute.xlu0 %1376
    %v1379 = vsel %vm254, %v1374, 0
    %1381 = vmatprep.subr.mxu0 0.0
    %1382 = vmatpush1.msra.mxu0 %v1377
    %1383 = vmatprep.subr.mxu0 0.0
    %1384 = vmatpush1.msra.mxu0 0.0
    %1385 = vmatprep.subr.mxu0 0.0
    %1386 = vmatpush1.msra.mxu0 0.0
    %1387 = vmatprep.subr.mxu0 0.0
    %1388 = vmatpush1.msra.mxu0 0.0
    %1389 = vmatprep.subr.mxu0 0.0
    %1390 = vmatpush1.msra.mxu0 0.0
    %1391 = vmatprep.subr.mxu0 0.0
    %1392 = vmatpush1.msra.mxu0 0.0
    %1393 = vmatprep.subr.mxu0 0.0
    %1394 = vmatpush1.msra.mxu0 0.0
    %1395 = vmatprep.subr.mxu0 0.0
    %1396 = vmatpush1.msra.mxu0 0.0
    %1397 = vmatprep.subr.mxu0 0.0
    %1398 = vmatpush1.msra.mxu0 0.0
    %1399 = vmatprep.subr.mxu0 0.0
    %1400 = vmatpush1.msra.mxu0 0.0
    %1401 = vmatprep.subr.mxu0 0.0
    %1402 = vmatpush1.msra.mxu0 0.0
    %1403 = vmatprep.subr.mxu0 0.0
    %1404 = vmatpush1.msra.mxu0 0.0
    %1405 = vmatprep.subr.mxu0 0.0
    %1406 = vmatpush1.msra.mxu0 0.0
    %1407 = vmatprep.subr.mxu0 0.0
    %1408 = vmatpush1.msra.mxu0 0.0
    %1409 = vmatprep.subr.mxu0 0.0
    %1410 = vmatpush1.msra.mxu0 0.0
    %1411 = vmatprep.subr.mxu0 0.0
    %1412 = vmatpush1.msra.mxu0 0.0
    %1413 = vmatprep.subr.mxu0 0.0
    %1414 = vmatpush1.msra.mxu0 0.0
    %1415 = vmatprep.subr.mxu0 0.0
    %1416 = vmatpush1.msra.mxu0 0.0
    %1417 = vmatprep.subr.mxu0 0.0
    %1418 = vmatpush1.msra.mxu0 0.0
    %1419 = vmatprep.subr.mxu0 0.0
    %1420 = vmatpush1.msra.mxu0 0.0
    %1421 = vmatprep.subr.mxu0 0.0
    %1422 = vmatpush1.msra.mxu0 0.0
    %1423 = vmatprep.subr.mxu0 0.0
    %1424 = vmatpush1.msra.mxu0 0.0
    %1425 = vmatprep.subr.mxu0 0.0
    %1426 = vmatpush1.msra.mxu0 0.0
    %1427 = vmatprep.subr.mxu0 0.0
    %1428 = vmatpush1.msra.mxu0 0.0
    %1429 = vmatprep.subr.mxu0 0.0
    %1430 = vmatpush1.msra.mxu0 0.0
    %1431 = vmatprep.subr.mxu0 0.0
    %1432 = vmatpush1.msra.mxu0 0.0
    %1433 = vmatprep.subr.mxu0 0.0
    %1434 = vmatpush1.msra.mxu0 0.0
    %1435 = vmatprep.subr.mxu0 0.0
    %1436 = vmatpush1.msra.mxu0 0.0
    %1437 = vmatprep.subr.mxu0 0.0
    %1438 = vmatpush1.msra.mxu0 0.0
    %1439 = vmatprep.subr.mxu0 0.0
    %1440 = vmatpush1.msra.mxu0 0.0
    %1441 = vmatprep.subr.mxu0 0.0
    %1442 = vmatpush1.msra.mxu0 0.0
    %1443 = vmatprep.subr.mxu0 0.0
    %1444 = vmatpush1.msra.mxu0 0.0
    %1445 = vmatprep.mubr.f32.mxu0 0.0
    %1446 = vmatmul.mubr.f32.gmra.mrb[0].mxu0 %v1379
    %v1447 = vpop.f32.mrb[0].mxu0
    %v1448 = vadd.f32 0.0, %v1447
    %v1449 = vpop.f32.mrb[0].mxu0
    %1450 = vdwg.mxu0
    %v1451 = vmul.f32 %v1448, 0.35355338
    %v1452 = vadd.f32 %v1451, %v1205
    %v1453 = vsel %vm254, %v1452, -inf
    %1454 = vmax.xlane.f32.xlu0 %v1453
    %v1455 = vpop.xlane.xlu0 %1454
    %v1456 = vsub.f32 %v1452, %v1455
    %v1457 = vmul.f32 %v1456, 1.442695
    %v1458 = vpow.pop %v1457
    %v1459 = vsel %vm254, %v1458, 0.0
    %1460 = vadd.xlane.f32.xlu0 %v1459
    %v1461 = vpop.xlane.xlu0 %1460
    %v1462 = vrcp.pop %v1461
    %v1463 = vmul.f32 %v1458, %v1462
    %1464 = vrot.lane.b32.xlu0 %v240, 120
    %v1465 = vpop.permute.xlu0 %1464
    %v1467 = vsel %vm254, %v1463, 0
    %v1469 = vsel %vm254, %v1465, 0
    %1471 = vmatprep.subr.mxu0 0.0
    %1472 = vmatpush1.xpose.msra.mxu0 %v1469
    %1473 = vmatprep.subr.mxu0 0.0
    %1474 = vmatpush1.xpose.msra.mxu0 0.0
    %1475 = vmatprep.subr.mxu0 0.0
    %1476 = vmatpush1.xpose.msra.mxu0 0.0
    %1477 = vmatprep.subr.mxu0 0.0
    %1478 = vmatpush1.xpose.msra.mxu0 0.0
    %1479 = vmatprep.subr.mxu0 0.0
    %1480 = vmatpush1.xpose.msra.mxu0 0.0
    %1481 = vmatprep.subr.mxu0 0.0
    %1482 = vmatpush1.xpose.msra.mxu0 0.0
    %1483 = vmatprep.subr.mxu0 0.0
    %1484 = vmatpush1.xpose.msra.mxu0 0.0
    %1485 = vmatprep.subr.mxu0 0.0
    %1486 = vmatpush1.xpose.msra.mxu0 0.0
    %1487 = vmatprep.subr.mxu0 0.0
    %1488 = vmatpush1.xpose.msra.mxu0 0.0
    %1489 = vmatprep.subr.mxu0 0.0
    %1490 = vmatpush1.xpose.msra.mxu0 0.0
    %1491 = vmatprep.subr.mxu0 0.0
    %1492 = vmatpush1.xpose.msra.mxu0 0.0
    %1493 = vmatprep.subr.mxu0 0.0
    %1494 = vmatpush1.xpose.msra.mxu0 0.0
    %1495 = vmatprep.subr.mxu0 0.0
    %1496 = vmatpush1.xpose.msra.mxu0 0.0
    %1497 = vmatprep.subr.mxu0 0.0
    %1498 = vmatpush1.xpose.msra.mxu0 0.0
    %1499 = vmatprep.subr.mxu0 0.0
    %1500 = vmatpush1.xpose.msra.mxu0 0.0
    %1501 = vmatprep.subr.mxu0 0.0
    %1502 = vmatpush1.xpose.msra.mxu0 0.0
    %1503 = vmatprep.subr.mxu0 0.0
    %1504 = vmatpush1.xpose.msra.mxu0 0.0
    %1505 = vmatprep.subr.mxu0 0.0
    %1506 = vmatpush1.xpose.msra.mxu0 0.0
    %1507 = vmatprep.subr.mxu0 0.0
    %1508 = vmatpush1.xpose.msra.mxu0 0.0
    %1509 = vmatprep.subr.mxu0 0.0
    %1510 = vmatpush1.xpose.msra.mxu0 0.0
    %1511 = vmatprep.subr.mxu0 0.0
    %1512 = vmatpush1.xpose.msra.mxu0 0.0
    %1513 = vmatprep.subr.mxu0 0.0
    %1514 = vmatpush1.xpose.msra.mxu0 0.0
    %1515 = vmatprep.subr.mxu0 0.0
    %1516 = vmatpush1.xpose.msra.mxu0 0.0
    %1517 = vmatprep.subr.mxu0 0.0
    %1518 = vmatpush1.xpose.msra.mxu0 0.0
    %1519 = vmatprep.subr.mxu0 0.0
    %1520 = vmatpush1.xpose.msra.mxu0 0.0
    %1521 = vmatprep.subr.mxu0 0.0
    %1522 = vmatpush1.xpose.msra.mxu0 0.0
    %1523 = vmatprep.subr.mxu0 0.0
    %1524 = vmatpush1.xpose.msra.mxu0 0.0
    %1525 = vmatprep.subr.mxu0 0.0
    %1526 = vmatpush1.xpose.msra.mxu0 0.0
    %1527 = vmatprep.subr.mxu0 0.0
    %1528 = vmatpush1.xpose.msra.mxu0 0.0
    %1529 = vmatprep.subr.mxu0 0.0
    %1530 = vmatpush1.xpose.msra.mxu0 0.0
    %1531 = vmatprep.subr.mxu0 0.0
    %1532 = vmatpush1.xpose.msra.mxu0 0.0
    %1533 = vmatprep.subr.mxu0 0.0
    %1534 = vmatpush1.xpose.msra.mxu0 0.0
    %1535 = vmatprep.mubr.f32.mxu0 0.0
    %1536 = vmatmul.mubr.f32.gmra.mrb[0].mxu0 %v1467
    %v1537 = vpop.f32.mrb[0].mxu0
    %v1538 = vadd.f32 0.0, %v1537
    %v1539 = vpop.f32.mrb[0].mxu0
    %1540 = vdwg.mxu0
    %v1542 = vsel %vm254, %v1538, 0
    %1544 = vmatprep.subr.mxu0 0.0
    %1545 = vmatpush1.msra.mxu0 %v581
    %1546 = vmatprep.subr.mxu0 0.0
    %1547 = vmatpush1.msra.mxu0 0.0
    %1548 = vmatprep.subr.mxu0 0.0
    %1549 = vmatpush1.msra.mxu0 0.0
    %1550 = vmatprep.subr.mxu0 0.0
    %1551 = vmatpush1.msra.mxu0 0.0
    %1552 = vmatprep.subr.mxu0 0.0
    %1553 = vmatpush1.msra.mxu0 0.0
    %1554 = vmatprep.subr.mxu0 0.0
    %1555 = vmatpush1.msra.mxu0 0.0
    %1556 = vmatprep.subr.mxu0 0.0
    %1557 = vmatpush1.msra.mxu0 0.0
    %1558 = vmatprep.subr.mxu0 0.0
    %1559 = vmatpush1.msra.mxu0 0.0
    %1560 = vmatprep.subr.mxu0 0.0
    %1561 = vmatpush1.msra.mxu0 0.0
    %1562 = vmatprep.subr.mxu0 0.0
    %1563 = vmatpush1.msra.mxu0 0.0
    %1564 = vmatprep.subr.mxu0 0.0
    %1565 = vmatpush1.msra.mxu0 0.0
    %1566 = vmatprep.subr.mxu0 0.0
    %1567 = vmatpush1.msra.mxu0 0.0
    %1568 = vmatprep.subr.mxu0 0.0
    %1569 = vmatpush1.msra.mxu0 0.0
    %1570 = vmatprep.subr.mxu0 0.0
    %1571 = vmatpush1.msra.mxu0 0.0
    %1572 = vmatprep.subr.mxu0 0.0
    %1573 = vmatpush1.msra.mxu0 0.0
    %1574 = vmatprep.subr.mxu0 0.0
    %1575 = vmatpush1.msra.mxu0 0.0
    %1576 = vmatprep.subr.mxu0 0.0
    %1577 = vmatpush1.msra.mxu0 0.0
    %1578 = vmatprep.subr.mxu0 0.0
    %1579 = vmatpush1.msra.mxu0 0.0
    %1580 = vmatprep.subr.mxu0 0.0
    %1581 = vmatpush1.msra.mxu0 0.0
    %1582 = vmatprep.subr.mxu0 0.0
    %1583 = vmatpush1.msra.mxu0 0.0
    %1584 = vmatprep.subr.mxu0 0.0
    %1585 = vmatpush1.msra.mxu0 0.0
    %1586 = vmatprep.subr.mxu0 0.0
    %1587 = vmatpush1.msra.mxu0 0.0
    %1588 = vmatprep.subr.mxu0 0.0
    %1589 = vmatpush1.msra.mxu0 0.0
    %1590 = vmatprep.subr.mxu0 0.0
    %1591 = vmatpush1.msra.mxu0 0.0
    %1592 = vmatprep.subr.mxu0 0.0
    %1593 = vmatpush1.msra.mxu0 0.0
    %1594 = vmatprep.subr.mxu0 0.0
    %1595 = vmatpush1.msra.mxu0 0.0
    %1596 = vmatprep.subr.mxu0 0.0
    %1597 = vmatpush1.msra.mxu0 0.0
    %1598 = vmatprep.subr.mxu0 0.0
    %1599 = vmatpush1.msra.mxu0 0.0
    %1600 = vmatprep.subr.mxu0 0.0
    %1601 = vmatpush1.msra.mxu0 0.0
    %1602 = vmatprep.subr.mxu0 0.0
    %1603 = vmatpush1.msra.mxu0 0.0
    %1604 = vmatprep.subr.mxu0 0.0
    %1605 = vmatpush1.msra.mxu0 0.0
    %1606 = vmatprep.subr.mxu0 0.0
    %1607 = vmatpush1.msra.mxu0 0.0
    %1608 = vmatprep.mubr.f32.mxu0 0.0
    %1609 = vmatmul.mubr.f32.gmra.mrb[0].mxu0 %v1542
    %v1610 = vpop.f32.mrb[0].mxu0
    %v1611 = vadd.f32 0.0, %v1610
    %v1612 = vpop.f32.mrb[0].mxu0
    %1613 = vdwg.mxu0
    %v1615 = vsel %vm254, %v1370, 0
    %1617 = vmatprep.subr.mxu0 0.0
    %1618 = vmatpush1.msra.mxu0 %v417
    %1619 = vmatprep.subr.mxu0 0.0
    %1620 = vmatpush1.msra.mxu0 0.0
    %1621 = vmatprep.subr.mxu0 0.0
    %1622 = vmatpush1.msra.mxu0 0.0
    %1623 = vmatprep.subr.mxu0 0.0
    %1624 = vmatpush1.msra.mxu0 0.0
    %1625 = vmatprep.subr.mxu0 0.0
    %1626 = vmatpush1.msra.mxu0 0.0
    %1627 = vmatprep.subr.mxu0 0.0
    %1628 = vmatpush1.msra.mxu0 0.0
    %1629 = vmatprep.subr.mxu0 0.0
    %1630 = vmatpush1.msra.mxu0 0.0
    %1631 = vmatprep.subr.mxu0 0.0
    %1632 = vmatpush1.msra.mxu0 0.0
    %1633 = vmatprep.subr.mxu0 0.0
    %1634 = vmatpush1.msra.mxu0 0.0
    %1635 = vmatprep.subr.mxu0 0.0
    %1636 = vmatpush1.msra.mxu0 0.0
    %1637 = vmatprep.subr.mxu0 0.0
    %1638 = vmatpush1.msra.mxu0 0.0
    %1639 = vmatprep.subr.mxu0 0.0
    %1640 = vmatpush1.msra.mxu0 0.0
    %1641 = vmatprep.subr.mxu0 0.0
    %1642 = vmatpush1.msra.mxu0 0.0
    %1643 = vmatprep.subr.mxu0 0.0
    %1644 = vmatpush1.msra.mxu0 0.0
    %1645 = vmatprep.subr.mxu0 0.0
    %1646 = vmatpush1.msra.mxu0 0.0
    %1647 = vmatprep.subr.mxu0 0.0
    %1648 = vmatpush1.msra.mxu0 0.0
    %1649 = vmatprep.subr.mxu0 0.0
    %1650 = vmatpush1.msra.mxu0 0.0
    %1651 = vmatprep.subr.mxu0 0.0
    %1652 = vmatpush1.msra.mxu0 0.0
    %1653 = vmatprep.subr.mxu0 0.0
    %1654 = vmatpush1.msra.mxu0 0.0
    %1655 = vmatprep.subr.mxu0 0.0
    %1656 = vmatpush1.msra.mxu0 0.0
    %1657 = vmatprep.subr.mxu0 0.0
    %1658 = vmatpush1.msra.mxu0 0.0
    %1659 = vmatprep.subr.mxu0 0.0
    %1660 = vmatpush1.msra.mxu0 0.0
    %1661 = vmatprep.subr.mxu0 0.0
    %1662 = vmatpush1.msra.mxu0 0.0
    %1663 = vmatprep.subr.mxu0 0.0
    %1664 = vmatpush1.msra.mxu0 0.0
    %1665 = vmatprep.subr.mxu0 0.0
    %1666 = vmatpush1.msra.mxu0 0.0
    %1667 = vmatprep.subr.mxu0 0.0
    %1668 = vmatpush1.msra.mxu0 0.0
    %1669 = vmatprep.subr.mxu0 0.0
    %1670 = vmatpush1.msra.mxu0 0.0
    %1671 = vmatprep.subr.mxu0 0.0
    %1672 = vmatpush1.msra.mxu0 0.0
    %1673 = vmatprep.subr.mxu0 0.0
    %1674 = vmatpush1.msra.mxu0 0.0
    %1675 = vmatprep.subr.mxu0 0.0
    %1676 = vmatpush1.msra.mxu0 0.0
    %1677 = vmatprep.subr.mxu0 0.0
    %1678 = vmatpush1.msra.mxu0 0.0
    %1679 = vmatprep.subr.mxu0 0.0
    %1680 = vmatpush1.msra.mxu0 0.0
    %1681 = vmatprep.mubr.f32.mxu0 0.0
    %1682 = vmatmul.mubr.f32.gmra.mrb[0].mxu0 %v1615
    %v1683 = vpop.f32.mrb[0].mxu0
    %v1684 = vadd.f32 %v1611, %v1683
    %v1685 = vpop.f32.mrb[0].mxu0
    %1686 = vdwg.mxu0
    %1687 = vrot.lane.b32.xlu0 %v113, 112
    %v1688 = vpop.permute.xlu0 %1687
    %1690 = vrot.lane.b32.xlu0 %v225, 120
    %v1691 = vpop.permute.xlu0 %1690
    %v1693 = vsel %vm254, %v1688, 0
    %1695 = vmatprep.subr.mxu0 0.0
    %1696 = vmatpush1.msra.mxu0 %v1691
    %1697 = vmatprep.subr.mxu0 0.0
    %1698 = vmatpush1.msra.mxu0 0.0
    %1699 = vmatprep.subr.mxu0 0.0
    %1700 = vmatpush1.msra.mxu0 0.0
    %1701 = vmatprep.subr.mxu0 0.0
    %1702 = vmatpush1.msra.mxu0 0.0
    %1703 = vmatprep.subr.mxu0 0.0
    %1704 = vmatpush1.msra.mxu0 0.0
    %1705 = vmatprep.subr.mxu0 0.0
    %1706 = vmatpush1.msra.mxu0 0.0
    %1707 = vmatprep.subr.mxu0 0.0
    %1708 = vmatpush1.msra.mxu0 0.0
    %1709 = vmatprep.subr.mxu0 0.0
    %1710 = vmatpush1.msra.mxu0 0.0
    %1711 = vmatprep.subr.mxu0 0.0
    %1712 = vmatpush1.msra.mxu0 0.0
    %1713 = vmatprep.subr.mxu0 0.0
    %1714 = vmatpush1.msra.mxu0 0.0
    %1715 = vmatprep.subr.mxu0 0.0
    %1716 = vmatpush1.msra.mxu0 0.0
    %1717 = vmatprep.subr.mxu0 0.0
    %1718 = vmatpush1.msra.mxu0 0.0
    %1719 = vmatprep.subr.mxu0 0.0
    %1720 = vmatpush1.msra.mxu0 0.0
    %1721 = vmatprep.subr.mxu0 0.0
    %1722 = vmatpush1.msra.mxu0 0.0
    %1723 = vmatprep.subr.mxu0 0.0
    %1724 = vmatpush1.msra.mxu0 0.0
    %1725 = vmatprep.subr.mxu0 0.0
    %1726 = vmatpush1.msra.mxu0 0.0
    %1727 = vmatprep.subr.mxu0 0.0
    %1728 = vmatpush1.msra.mxu0 0.0
    %1729 = vmatprep.subr.mxu0 0.0
    %1730 = vmatpush1.msra.mxu0 0.0
    %1731 = vmatprep.subr.mxu0 0.0
    %1732 = vmatpush1.msra.mxu0 0.0
    %1733 = vmatprep.subr.mxu0 0.0
    %1734 = vmatpush1.msra.mxu0 0.0
    %1735 = vmatprep.subr.mxu0 0.0
    %1736 = vmatpush1.msra.mxu0 0.0
    %1737 = vmatprep.subr.mxu0 0.0
    %1738 = vmatpush1.msra.mxu0 0.0
    %1739 = vmatprep.subr.mxu0 0.0
    %1740 = vmatpush1.msra.mxu0 0.0
    %1741 = vmatprep.subr.mxu0 0.0
    %1742 = vmatpush1.msra.mxu0 0.0
    %1743 = vmatprep.subr.mxu0 0.0
    %1744 = vmatpush1.msra.mxu0 0.0
    %1745 = vmatprep.subr.mxu0 0.0
    %1746 = vmatpush1.msra.mxu0 0.0
    %1747 = vmatprep.subr.mxu0 0.0
    %1748 = vmatpush1.msra.mxu0 0.0
    %1749 = vmatprep.subr.mxu0 0.0
    %1750 = vmatpush1.msra.mxu0 0.0
    %1751 = vmatprep.subr.mxu0 0.0
    %1752 = vmatpush1.msra.mxu0 0.0
    %1753 = vmatprep.subr.mxu0 0.0
    %1754 = vmatpush1.msra.mxu0 0.0
    %1755 = vmatprep.subr.mxu0 0.0
    %1756 = vmatpush1.msra.mxu0 0.0
    %1757 = vmatprep.subr.mxu0 0.0
    %1758 = vmatpush1.msra.mxu0 0.0
    %1759 = vmatprep.mubr.f32.mxu0 0.0
    %1760 = vmatmul.mubr.f32.gmra.mrb[0].mxu0 %v1693
    %v1761 = vpop.f32.mrb[0].mxu0
    %v1762 = vadd.f32 0.0, %v1761
    %v1763 = vpop.f32.mrb[0].mxu0
    %1764 = vdwg.mxu0
    %v1765 = vmul.f32 %v1762, 0.35355338
    %v1766 = vadd.f32 %v1765, %v1205
    %v1767 = vsel %vm254, %v1766, -inf
    %1768 = vmax.xlane.f32.xlu0 %v1767
    %v1769 = vpop.xlane.xlu0 %1768
    %v1770 = vsub.f32 %v1766, %v1769
    %v1771 = vmul.f32 %v1770, 1.442695
    %v1772 = vpow.pop %v1771
    %v1773 = vsel %vm254, %v1772, 0.0
    %1774 = vadd.xlane.f32.xlu0 %v1773
    %v1775 = vpop.xlane.xlu0 %1774
    %v1776 = vrcp.pop %v1775
    %v1777 = vmul.f32 %v1772, %v1776
    %1778 = vrot.lane.b32.xlu0 %v245, 120
    %v1779 = vpop.permute.xlu0 %1778
    %v1781 = vsel %vm254, %v1777, 0
    %v1783 = vsel %vm254, %v1779, 0
    %1785 = vmatprep.subr.mxu0 0.0
    %1786 = vmatpush1.xpose.msra.mxu0 %v1783
    %1787 = vmatprep.subr.mxu0 0.0
    %1788 = vmatpush1.xpose.msra.mxu0 0.0
    %1789 = vmatprep.subr.mxu0 0.0
    %1790 = vmatpush1.xpose.msra.mxu0 0.0
    %1791 = vmatprep.subr.mxu0 0.0
    %1792 = vmatpush1.xpose.msra.mxu0 0.0
    %1793 = vmatprep.subr.mxu0 0.0
    %1794 = vmatpush1.xpose.msra.mxu0 0.0
    %1795 = vmatprep.subr.mxu0 0.0
    %1796 = vmatpush1.xpose.msra.mxu0 0.0
    %1797 = vmatprep.subr.mxu0 0.0
    %1798 = vmatpush1.xpose.msra.mxu0 0.0
    %1799 = vmatprep.subr.mxu0 0.0
    %1800 = vmatpush1.xpose.msra.mxu0 0.0
    %1801 = vmatprep.subr.mxu0 0.0
    %1802 = vmatpush1.xpose.msra.mxu0 0.0
    %1803 = vmatprep.subr.mxu0 0.0
    %1804 = vmatpush1.xpose.msra.mxu0 0.0
    %1805 = vmatprep.subr.mxu0 0.0
    %1806 = vmatpush1.xpose.msra.mxu0 0.0
    %1807 = vmatprep.subr.mxu0 0.0
    %1808 = vmatpush1.xpose.msra.mxu0 0.0
    %1809 = vmatprep.subr.mxu0 0.0
    %1810 = vmatpush1.xpose.msra.mxu0 0.0
    %1811 = vmatprep.subr.mxu0 0.0
    %1812 = vmatpush1.xpose.msra.mxu0 0.0
    %1813 = vmatprep.subr.mxu0 0.0
    %1814 = vmatpush1.xpose.msra.mxu0 0.0
    %1815 = vmatprep.subr.mxu0 0.0
    %1816 = vmatpush1.xpose.msra.mxu0 0.0
    %1817 = vmatprep.subr.mxu0 0.0
    %1818 = vmatpush1.xpose.msra.mxu0 0.0
    %1819 = vmatprep.subr.mxu0 0.0
    %1820 = vmatpush1.xpose.msra.mxu0 0.0
    %1821 = vmatprep.subr.mxu0 0.0
    %1822 = vmatpush1.xpose.msra.mxu0 0.0
    %1823 = vmatprep.subr.mxu0 0.0
    %1824 = vmatpush1.xpose.msra.mxu0 0.0
    %1825 = vmatprep.subr.mxu0 0.0
    %1826 = vmatpush1.xpose.msra.mxu0 0.0
    %1827 = vmatprep.subr.mxu0 0.0
    %1828 = vmatpush1.xpose.msra.mxu0 0.0
    %1829 = vmatprep.subr.mxu0 0.0
    %1830 = vmatpush1.xpose.msra.mxu0 0.0
    %1831 = vmatprep.subr.mxu0 0.0
    %1832 = vmatpush1.xpose.msra.mxu0 0.0
    %1833 = vmatprep.subr.mxu0 0.0
    %1834 = vmatpush1.xpose.msra.mxu0 0.0
    %1835 = vmatprep.subr.mxu0 0.0
    %1836 = vmatpush1.xpose.msra.mxu0 0.0
    %1837 = vmatprep.subr.mxu0 0.0
    %1838 = vmatpush1.xpose.msra.mxu0 0.0
    %1839 = vmatprep.subr.mxu0 0.0
    %1840 = vmatpush1.xpose.msra.mxu0 0.0
    %1841 = vmatprep.subr.mxu0 0.0
    %1842 = vmatpush1.xpose.msra.mxu0 0.0
    %1843 = vmatprep.subr.mxu0 0.0
    %1844 = vmatpush1.xpose.msra.mxu0 0.0
    %1845 = vmatprep.subr.mxu0 0.0
    %1846 = vmatpush1.xpose.msra.mxu0 0.0
    %1847 = vmatprep.subr.mxu0 0.0
    %1848 = vmatpush1.xpose.msra.mxu0 0.0
    %1849 = vmatprep.mubr.f32.mxu0 0.0
    %1850 = vmatmul.mubr.f32.gmra.mrb[0].mxu0 %v1781
    %v1851 = vpop.f32.mrb[0].mxu0
    %v1852 = vadd.f32 0.0, %v1851
    %v1853 = vpop.f32.mrb[0].mxu0
    %1854 = vdwg.mxu0
    %v1856 = vsel %vm254, %v1852, 0
    %1858 = vmatprep.subr.mxu0 0.0
    %1859 = vmatpush1.msra.mxu0 %v891
    %1860 = vmatprep.subr.mxu0 0.0
    %1861 = vmatpush1.msra.mxu0 0.0
    %1862 = vmatprep.subr.mxu0 0.0
    %1863 = vmatpush1.msra.mxu0 0.0
    %1864 = vmatprep.subr.mxu0 0.0
    %1865 = vmatpush1.msra.mxu0 0.0
    %1866 = vmatprep.subr.mxu0 0.0
    %1867 = vmatpush1.msra.mxu0 0.0
    %1868 = vmatprep.subr.mxu0 0.0
    %1869 = vmatpush1.msra.mxu0 0.0
    %1870 = vmatprep.subr.mxu0 0.0
    %1871 = vmatpush1.msra.mxu0 0.0
    %1872 = vmatprep.subr.mxu0 0.0
    %1873 = vmatpush1.msra.mxu0 0.0
    %1874 = vmatprep.subr.mxu0 0.0
    %1875 = vmatpush1.msra.mxu0 0.0
    %1876 = vmatprep.subr.mxu0 0.0
    %1877 = vmatpush1.msra.mxu0 0.0
    %1878 = vmatprep.subr.mxu0 0.0
    %1879 = vmatpush1.msra.mxu0 0.0
    %1880 = vmatprep.subr.mxu0 0.0
    %1881 = vmatpush1.msra.mxu0 0.0
    %1882 = vmatprep.subr.mxu0 0.0
    %1883 = vmatpush1.msra.mxu0 0.0
    %1884 = vmatprep.subr.mxu0 0.0
    %1885 = vmatpush1.msra.mxu0 0.0
    %1886 = vmatprep.subr.mxu0 0.0
    %1887 = vmatpush1.msra.mxu0 0.0
    %1888 = vmatprep.subr.mxu0 0.0
    %1889 = vmatpush1.msra.mxu0 0.0
    %1890 = vmatprep.subr.mxu0 0.0
    %1891 = vmatpush1.msra.mxu0 0.0
    %1892 = vmatprep.subr.mxu0 0.0
    %1893 = vmatpush1.msra.mxu0 0.0
    %1894 = vmatprep.subr.mxu0 0.0
    %1895 = vmatpush1.msra.mxu0 0.0
    %1896 = vmatprep.subr.mxu0 0.0
    %1897 = vmatpush1.msra.mxu0 0.0
    %1898 = vmatprep.subr.mxu0 0.0
    %1899 = vmatpush1.msra.mxu0 0.0
    %1900 = vmatprep.subr.mxu0 0.0
    %1901 = vmatpush1.msra.mxu0 0.0
    %1902 = vmatprep.subr.mxu0 0.0
    %1903 = vmatpush1.msra.mxu0 0.0
    %1904 = vmatprep.subr.mxu0 0.0
    %1905 = vmatpush1.msra.mxu0 0.0
    %1906 = vmatprep.subr.mxu0 0.0
    %1907 = vmatpush1.msra.mxu0 0.0
    %1908 = vmatprep.subr.mxu0 0.0
    %1909 = vmatpush1.msra.mxu0 0.0
    %1910 = vmatprep.subr.mxu0 0.0
    %1911 = vmatpush1.msra.mxu0 0.0
    %1912 = vmatprep.subr.mxu0 0.0
    %1913 = vmatpush1.msra.mxu0 0.0
    %1914 = vmatprep.subr.mxu0 0.0
    %1915 = vmatpush1.msra.mxu0 0.0
    %1916 = vmatprep.subr.mxu0 0.0
    %1917 = vmatpush1.msra.mxu0 0.0
    %1918 = vmatprep.subr.mxu0 0.0
    %1919 = vmatpush1.msra.mxu0 0.0
    %1920 = vmatprep.subr.mxu0 0.0
    %1921 = vmatpush1.msra.mxu0 0.0
    %1922 = vmatprep.mubr.f32.mxu0 0.0
    %1923 = vmatmul.mubr.f32.gmra.mrb[0].mxu0 %v1856
    %v1924 = vpop.f32.mrb[0].mxu0
    %v1925 = vadd.f32 0.0, %v1924
    %v1926 = vpop.f32.mrb[0].mxu0
    %1927 = vdwg.mxu0
    %v1928 = vadd.f32 %v1684, %v1925
    %1929 = vrot.lane.b32.xlu0 %v113, 104
    %v1930 = vpop.permute.xlu0 %1929
    %1932 = vrot.lane.b32.xlu0 %v230, 120
    %v1933 = vpop.permute.xlu0 %1932
    %v1935 = vsel %vm254, %v1930, 0
    %1937 = vmatprep.subr.mxu0 0.0
    %1938 = vmatpush1.msra.mxu0 %v1933
    %1939 = vmatprep.subr.mxu0 0.0
    %1940 = vmatpush1.msra.mxu0 0.0
    %1941 = vmatprep.subr.mxu0 0.0
    %1942 = vmatpush1.msra.mxu0 0.0
    %1943 = vmatprep.subr.mxu0 0.0
    %1944 = vmatpush1.msra.mxu0 0.0
    %1945 = vmatprep.subr.mxu0 0.0
    %1946 = vmatpush1.msra.mxu0 0.0
    %1947 = vmatprep.subr.mxu0 0.0
    %1948 = vmatpush1.msra.mxu0 0.0
    %1949 = vmatprep.subr.mxu0 0.0
    %1950 = vmatpush1.msra.mxu0 0.0
    %1951 = vmatprep.subr.mxu0 0.0
    %1952 = vmatpush1.msra.mxu0 0.0
    %1953 = vmatprep.subr.mxu0 0.0
    %1954 = vmatpush1.msra.mxu0 0.0
    %1955 = vmatprep.subr.mxu0 0.0
    %1956 = vmatpush1.msra.mxu0 0.0
    %1957 = vmatprep.subr.mxu0 0.0
    %1958 = vmatpush1.msra.mxu0 0.0
    %1959 = vmatprep.subr.mxu0 0.0
    %1960 = vmatpush1.msra.mxu0 0.0
    %1961 = vmatprep.subr.mxu0 0.0
    %1962 = vmatpush1.msra.mxu0 0.0
    %1963 = vmatprep.subr.mxu0 0.0
    %1964 = vmatpush1.msra.mxu0 0.0
    %1965 = vmatprep.subr.mxu0 0.0
    %1966 = vmatpush1.msra.mxu0 0.0
    %1967 = vmatprep.subr.mxu0 0.0
    %1968 = vmatpush1.msra.mxu0 0.0
    %1969 = vmatprep.subr.mxu0 0.0
    %1970 = vmatpush1.msra.mxu0 0.0
    %1971 = vmatprep.subr.mxu0 0.0
    %1972 = vmatpush1.msra.mxu0 0.0
    %1973 = vmatprep.subr.mxu0 0.0
    %1974 = vmatpush1.msra.mxu0 0.0
    %1975 = vmatprep.subr.mxu0 0.0
    %1976 = vmatpush1.msra.mxu0 0.0
    %1977 = vmatprep.subr.mxu0 0.0
    %1978 = vmatpush1.msra.mxu0 0.0
    %1979 = vmatprep.subr.mxu0 0.0
    %1980 = vmatpush1.msra.mxu0 0.0
    %1981 = vmatprep.subr.mxu0 0.0
    %1982 = vmatpush1.msra.mxu0 0.0
    %1983 = vmatprep.subr.mxu0 0.0
    %1984 = vmatpush1.msra.mxu0 0.0
    %1985 = vmatprep.subr.mxu0 0.0
    %1986 = vmatpush1.msra.mxu0 0.0
    %1987 = vmatprep.subr.mxu0 0.0
    %1988 = vmatpush1.msra.mxu0 0.0
    %1989 = vmatprep.subr.mxu0 0.0
    %1990 = vmatpush1.msra.mxu0 0.0
    %1991 = vmatprep.subr.mxu0 0.0
    %1992 = vmatpush1.msra.mxu0 0.0
    %1993 = vmatprep.subr.mxu0 0.0
    %1994 = vmatpush1.msra.mxu0 0.0
    %1995 = vmatprep.subr.mxu0 0.0
    %1996 = vmatpush1.msra.mxu0 0.0
    %1997 = vmatprep.subr.mxu0 0.0
    %1998 = vmatpush1.msra.mxu0 0.0
    %1999 = vmatprep.subr.mxu0 0.0
    %2000 = vmatpush1.msra.mxu0 0.0
    %2001 = vmatprep.mubr.f32.mxu0 0.0
    %2002 = vmatmul.mubr.f32.gmra.mrb[0].mxu0 %v1935
    %v2003 = vpop.f32.mrb[0].mxu0
    %v2004 = vadd.f32 0.0, %v2003
    %v2005 = vpop.f32.mrb[0].mxu0
    %2006 = vdwg.mxu0
    %v2007 = vmul.f32 %v2004, 0.35355338
    %v2008 = vadd.f32 %v2007, %v1205
    %v2009 = vsel %vm254, %v2008, -inf
    %2010 = vmax.xlane.f32.xlu0 %v2009
    %v2011 = vpop.xlane.xlu0 %2010
    %v2012 = vsub.f32 %v2008, %v2011
    %v2013 = vmul.f32 %v2012, 1.442695
    %v2014 = vpow.pop %v2013
    %v2015 = vsel %vm254, %v2014, 0.0
    %2016 = vadd.xlane.f32.xlu0 %v2015
    %v2017 = vpop.xlane.xlu0 %2016
    %v2018 = vrcp.pop %v2017
    %v2019 = vmul.f32 %v2014, %v2018
    %2020 = vrot.lane.b32.xlu0 %v250, 120
    %v2021 = vpop.permute.xlu0 %2020
    %v2023 = vsel %vm254, %v2019, 0
    %v2025 = vsel %vm254, %v2021, 0
    %2027 = vmatprep.subr.mxu0 0.0
    %2028 = vmatpush1.xpose.msra.mxu0 %v2025
    %2029 = vmatprep.subr.mxu0 0.0
    %2030 = vmatpush1.xpose.msra.mxu0 0.0
    %2031 = vmatprep.subr.mxu0 0.0
    %2032 = vmatpush1.xpose.msra.mxu0 0.0
    %2033 = vmatprep.subr.mxu0 0.0
    %2034 = vmatpush1.xpose.msra.mxu0 0.0
    %2035 = vmatprep.subr.mxu0 0.0
    %2036 = vmatpush1.xpose.msra.mxu0 0.0
    %2037 = vmatprep.subr.mxu0 0.0
    %2038 = vmatpush1.xpose.msra.mxu0 0.0
    %2039 = vmatprep.subr.mxu0 0.0
    %2040 = vmatpush1.xpose.msra.mxu0 0.0
    %2041 = vmatprep.subr.mxu0 0.0
    %2042 = vmatpush1.xpose.msra.mxu0 0.0
    %2043 = vmatprep.subr.mxu0 0.0
    %2044 = vmatpush1.xpose.msra.mxu0 0.0
    %2045 = vmatprep.subr.mxu0 0.0
    %2046 = vmatpush1.xpose.msra.mxu0 0.0
    %2047 = vmatprep.subr.mxu0 0.0
    %2048 = vmatpush1.xpose.msra.mxu0 0.0
    %2049 = vmatprep.subr.mxu0 0.0
    %2050 = vmatpush1.xpose.msra.mxu0 0.0
    %2051 = vmatprep.subr.mxu0 0.0
    %2052 = vmatpush1.xpose.msra.mxu0 0.0
    %2053 = vmatprep.subr.mxu0 0.0
    %2054 = vmatpush1.xpose.msra.mxu0 0.0
    %2055 = vmatprep.subr.mxu0 0.0
    %2056 = vmatpush1.xpose.msra.mxu0 0.0
    %2057 = vmatprep.subr.mxu0 0.0
    %2058 = vmatpush1.xpose.msra.mxu0 0.0
    %2059 = vmatprep.subr.mxu0 0.0
    %2060 = vmatpush1.xpose.msra.mxu0 0.0
    %2061 = vmatprep.subr.mxu0 0.0
    %2062 = vmatpush1.xpose.msra.mxu0 0.0
    %2063 = vmatprep.subr.mxu0 0.0
    %2064 = vmatpush1.xpose.msra.mxu0 0.0
    %2065 = vmatprep.subr.mxu0 0.0
    %2066 = vmatpush1.xpose.msra.mxu0 0.0
    %2067 = vmatprep.subr.mxu0 0.0
    %2068 = vmatpush1.xpose.msra.mxu0 0.0
    %2069 = vmatprep.subr.mxu0 0.0
    %2070 = vmatpush1.xpose.msra.mxu0 0.0
    %2071 = vmatprep.subr.mxu0 0.0
    %2072 = vmatpush1.xpose.msra.mxu0 0.0
    %2073 = vmatprep.subr.mxu0 0.0
    %2074 = vmatpush1.xpose.msra.mxu0 0.0
    %2075 = vmatprep.subr.mxu0 0.0
    %2076 = vmatpush1.xpose.msra.mxu0 0.0
    %2077 = vmatprep.subr.mxu0 0.0
    %2078 = vmatpush1.xpose.msra.mxu0 0.0
    %2079 = vmatprep.subr.mxu0 0.0
    %2080 = vmatpush1.xpose.msra.mxu0 0.0
    %2081 = vmatprep.subr.mxu0 0.0
    %2082 = vmatpush1.xpose.msra.mxu0 0.0
    %2083 = vmatprep.subr.mxu0 0.0
    %2084 = vmatpush1.xpose.msra.mxu0 0.0
    %2085 = vmatprep.subr.mxu0 0.0
    %2086 = vmatpush1.xpose.msra.mxu0 0.0
    %2087 = vmatprep.subr.mxu0 0.0
    %2088 = vmatpush1.xpose.msra.mxu0 0.0
    %2089 = vmatprep.subr.mxu0 0.0
    %2090 = vmatpush1.xpose.msra.mxu0 0.0
    %2091 = vmatprep.mubr.f32.mxu0 0.0
    %2092 = vmatmul.mubr.f32.gmra.mrb[0].mxu0 %v2023
    %v2093 = vpop.f32.mrb[0].mxu0
    %v2094 = vadd.f32 0.0, %v2093
    %v2095 = vpop.f32.mrb[0].mxu0
    %2096 = vdwg.mxu0
    %v2098 = vsel %vm254, %v2094, 0
    %2100 = vmatprep.subr.mxu0 0.0
    %2101 = vmatpush1.msra.mxu0 %v1129
    %2102 = vmatprep.subr.mxu0 0.0
    %2103 = vmatpush1.msra.mxu0 0.0
    %2104 = vmatprep.subr.mxu0 0.0
    %2105 = vmatpush1.msra.mxu0 0.0
    %2106 = vmatprep.subr.mxu0 0.0
    %2107 = vmatpush1.msra.mxu0 0.0
    %2108 = vmatprep.subr.mxu0 0.0
    %2109 = vmatpush1.msra.mxu0 0.0
    %2110 = vmatprep.subr.mxu0 0.0
    %2111 = vmatpush1.msra.mxu0 0.0
    %2112 = vmatprep.subr.mxu0 0.0
    %2113 = vmatpush1.msra.mxu0 0.0
    %2114 = vmatprep.subr.mxu0 0.0
    %2115 = vmatpush1.msra.mxu0 0.0
    %2116 = vmatprep.subr.mxu0 0.0
    %2117 = vmatpush1.msra.mxu0 0.0
    %2118 = vmatprep.subr.mxu0 0.0
    %2119 = vmatpush1.msra.mxu0 0.0
    %2120 = vmatprep.subr.mxu0 0.0
    %2121 = vmatpush1.msra.mxu0 0.0
    %2122 = vmatprep.subr.mxu0 0.0
    %2123 = vmatpush1.msra.mxu0 0.0
    %2124 = vmatprep.subr.mxu0 0.0
    %2125 = vmatpush1.msra.mxu0 0.0
    %2126 = vmatprep.subr.mxu0 0.0
    %2127 = vmatpush1.msra.mxu0 0.0
    %2128 = vmatprep.subr.mxu0 0.0
    %2129 = vmatpush1.msra.mxu0 0.0
    %2130 = vmatprep.subr.mxu0 0.0
    %2131 = vmatpush1.msra.mxu0 0.0
    %2132 = vmatprep.subr.mxu0 0.0
    %2133 = vmatpush1.msra.mxu0 0.0
    %2134 = vmatprep.subr.mxu0 0.0
    %2135 = vmatpush1.msra.mxu0 0.0
    %2136 = vmatprep.subr.mxu0 0.0
    %2137 = vmatpush1.msra.mxu0 0.0
    %2138 = vmatprep.subr.mxu0 0.0
    %2139 = vmatpush1.msra.mxu0 0.0
    %2140 = vmatprep.subr.mxu0 0.0
    %2141 = vmatpush1.msra.mxu0 0.0
    %2142 = vmatprep.subr.mxu0 0.0
    %2143 = vmatpush1.msra.mxu0 0.0
    %2144 = vmatprep.subr.mxu0 0.0
    %2145 = vmatpush1.msra.mxu0 0.0
    %2146 = vmatprep.subr.mxu0 0.0
    %2147 = vmatpush1.msra.mxu0 0.0
    %2148 = vmatprep.subr.mxu0 0.0
    %2149 = vmatpush1.msra.mxu0 0.0
    %2150 = vmatprep.subr.mxu0 0.0
    %2151 = vmatpush1.msra.mxu0 0.0
    %2152 = vmatprep.subr.mxu0 0.0
    %2153 = vmatpush1.msra.mxu0 0.0
    %2154 = vmatprep.subr.mxu0 0.0
    %2155 = vmatpush1.msra.mxu0 0.0
    %2156 = vmatprep.subr.mxu0 0.0
    %2157 = vmatpush1.msra.mxu0 0.0
    %2158 = vmatprep.subr.mxu0 0.0
    %2159 = vmatpush1.msra.mxu0 0.0
    %2160 = vmatprep.subr.mxu0 0.0
    %2161 = vmatpush1.msra.mxu0 0.0
    %2162 = vmatprep.subr.mxu0 0.0
    %2163 = vmatpush1.msra.mxu0 0.0
    %2164 = vmatprep.mubr.f32.mxu0 0.0
    %2165 = vmatmul.mubr.f32.gmra.mrb[0].mxu0 %v2098
    %v2166 = vpop.f32.mrb[0].mxu0
    %v2167 = vadd.f32 0.0, %v2166
    %v2168 = vpop.f32.mrb[0].mxu0
    %2169 = vdwg.mxu0
    %v2170 = vadd.f32 %v1928, %v2167
    %v2171 = vadd.f32 %v24, %v1203
    %v2172 = vadd.f32 %v25, %v2170
    %v2173 = vld [vmem:[%s5] sm:$0x1]
    %v2174 = vld [vmem:[%s5 + $0x1] sm:$0x1]
    %v2175 = vsel %vm34, %v2171, 0.0
    %2176 = vadd.xlane.f32.xlu0 %v2175
    %v2177 = vpop.xlane.xlu0 %2176
    %v2178 = vsel %vm34, %v2172, 0.0
    %2179 = vadd.xlane.f32.xlu0 %v2178
    %v2180 = vpop.xlane.xlu0 %2179
    %v2181 = vrcp.pop 32.0
    %v2182 = vmul.f32 %v2177, %v2181
    %v2183 = vmul.f32 %v2180, %v2181
    %v2184 = vsub.f32 %v2171, %v2182
    %v2185 = vsub.f32 %v2172, %v2183
    %v2186 = vmul.f32 %v2184, %v2184
    %v2187 = vmul.f32 %v2185, %v2185
    %v2188 = vsel %vm34, %v2186, 0.0
    %2189 = vadd.xlane.f32.xlu0 %v2188
    %v2190 = vpop.xlane.xlu0 %2189
    %v2191 = vsel %vm34, %v2187, 0.0
    %2192 = vadd.xlane.f32.xlu0 %v2191
    %v2193 = vpop.xlane.xlu0 %2192
    %v2194 = vmul.f32 %v2190, %v2181
    %v2195 = vmul.f32 %v2193, %v2181
    %v2196 = vadd.f32 %v2194, 1e-05
    %v2197 = vadd.f32 %v2195, 1e-05
    %v2198 = vrsqrt.pop %v2196
    %v2199 = vrsqrt.pop %v2197
    %v2200 = vmul.f32 %v2184, %v2198
    %v2201 = vmul.f32 %v2185, %v2199
    %v2202 = vlaneseq
    %v2203 = vshrl.u32 %v2202, 7
    %v2204 = vsub.s32 0, %v2203
    %v2205 = vrot.slane %v2173, %v2204
    %v2206 = vmul.f32 %v2200, %v2205
    %v2207 = vmul.f32 %v2201, %v2205
    %v2208 = vlaneseq
    %v2209 = vshrl.u32 %v2208, 7
    %v2210 = vsub.s32 0, %v2209
    %v2211 = vrot.slane %v2174, %v2210
    %v2212 = vadd.f32 %v2206, %v2211
    %v2213 = vadd.f32 %v2207, %v2211
    %v2214 = vld [vmem:[%s4 + $0x80] sm:$0xff]
    %v2215 = vld [vmem:[%s4 + $0x88] sm:$0xff]
    %v2216 = vld [vmem:[%s4 + $0x90] sm:$0xff]
    %v2217 = vld [vmem:[%s4 + $0x98] sm:$0xff]
    %v2219 = vsel %vm34, %v2212, 0
    %v2222 = vsel %vm34, %v2213, 0
    %2224 = vmatprep.subr.mxu0 0.0
    %2225 = vmatpush1.msra.mxu0 %v2214
    %2226 = vmatprep.subr.mxu0 0.0
    %2227 = vmatpush1.msra.mxu0 %v2215
    %2228 = vmatprep.subr.mxu0 0.0
    %2229 = vmatpush1.msra.mxu0 %v2216
    %2230 = vmatprep.subr.mxu0 0.0
    %2231 = vmatpush1.msra.mxu0 %v2217
    %2232 = vmatprep.subr.mxu0 0.0
    %2233 = vmatpush1.msra.mxu0 0.0
    %2234 = vmatprep.subr.mxu0 0.0
    %2235 = vmatpush1.msra.mxu0 0.0
    %2236 = vmatprep.subr.mxu0 0.0
    %2237 = vmatpush1.msra.mxu0 0.0
    %2238 = vmatprep.subr.mxu0 0.0
    %2239 = vmatpush1.msra.mxu0 0.0
    %2240 = vmatprep.subr.mxu0 0.0
    %2241 = vmatpush1.msra.mxu0 0.0
    %2242 = vmatprep.subr.mxu0 0.0
    %2243 = vmatpush1.msra.mxu0 0.0
    %2244 = vmatprep.subr.mxu0 0.0
    %2245 = vmatpush1.msra.mxu0 0.0
    %2246 = vmatprep.subr.mxu0 0.0
    %2247 = vmatpush1.msra.mxu0 0.0
    %2248 = vmatprep.subr.mxu0 0.0
    %2249 = vmatpush1.msra.mxu0 0.0
    %2250 = vmatprep.subr.mxu0 0.0
    %2251 = vmatpush1.msra.mxu0 0.0
    %2252 = vmatprep.subr.mxu0 0.0
    %2253 = vmatpush1.msra.mxu0 0.0
    %2254 = vmatprep.subr.mxu0 0.0
    %2255 = vmatpush1.msra.mxu0 0.0
    %2256 = vmatprep.subr.mxu0 0.0
    %2257 = vmatpush1.msra.mxu0 0.0
    %2258 = vmatprep.subr.mxu0 0.0
    %2259 = vmatpush1.msra.mxu0 0.0
    %2260 = vmatprep.subr.mxu0 0.0
    %2261 = vmatpush1.msra.mxu0 0.0
    %2262 = vmatprep.subr.mxu0 0.0
    %2263 = vmatpush1.msra.mxu0 0.0
    %2264 = vmatprep.subr.mxu0 0.0
    %2265 = vmatpush1.msra.mxu0 0.0
    %2266 = vmatprep.subr.mxu0 0.0
    %2267 = vmatpush1.msra.mxu0 0.0
    %2268 = vmatprep.subr.mxu0 0.0
    %2269 = vmatpush1.msra.mxu0 0.0
    %2270 = vmatprep.subr.mxu0 0.0
    %2271 = vmatpush1.msra.mxu0 0.0
    %2272 = vmatprep.subr.mxu0 0.0
    %2273 = vmatpush1.msra.mxu0 0.0
    %2274 = vmatprep.subr.mxu0 0.0
    %2275 = vmatpush1.msra.mxu0 0.0
    %2276 = vmatprep.subr.mxu0 0.0
    %2277 = vmatpush1.msra.mxu0 0.0
    %2278 = vmatprep.subr.mxu0 0.0
    %2279 = vmatpush1.msra.mxu0 0.0
    %2280 = vmatprep.subr.mxu0 0.0
    %2281 = vmatpush1.msra.mxu0 0.0
    %2282 = vmatprep.subr.mxu0 0.0
    %2283 = vmatpush1.msra.mxu0 0.0
    %2284 = vmatprep.subr.mxu0 0.0
    %2285 = vmatpush1.msra.mxu0 0.0
    %2286 = vmatprep.subr.mxu0 0.0
    %2287 = vmatpush1.msra.mxu0 0.0
    %2288 = vmatprep.mubr.f32.mxu0 0.0
    %2289 = vmatmul.mubr.f32.gmra.mrb[0].mxu0 %v2219
    %v2290 = vpop.f32.mrb[0].mxu0
    %v2291 = vadd.f32 0.0, %v2290
    %v2292 = vpop.f32.mrb[0].mxu0
    %2293 = vmatprep.mubr.f32.mxu0 0.0
    %2294 = vmatmul.mubr.f32.gmra.mrb[0].mxu0 %v2222
    %v2295 = vpop.f32.mrb[0].mxu0
    %v2296 = vadd.f32 0.0, %v2295
    %v2297 = vpop.f32.mrb[0].mxu0
    %2298 = vdwg.mxu0
    %v2299 = vld [vmem:[%s4 + $0xa0] sm:$0xff]
    %v2300 = vld [vmem:[%s4 + $0xa8] sm:$0xff]
    %v2301 = vld [vmem:[%s4 + $0xb0] sm:$0xff]
    %v2302 = vld [vmem:[%s4 + $0xb8] sm:$0xff]
    %v2303 = vld [vmem:[%s4 + $0xc0] sm:$0xff]
    %v2304 = vld [vmem:[%s4 + $0xc8] sm:$0xff]
    %v2305 = vld [vmem:[%s4 + $0xd0] sm:$0xff]
    %v2306 = vld [vmem:[%s4 + $0xd8] sm:$0xff]
    %v2308 = vsel %vm34, %v2299, 0
    %v2311 = vsel %vm34, %v2300, 0
    %v2314 = vsel %vm34, %v2301, 0
    %v2317 = vsel %vm34, %v2302, 0
    %v2320 = vsel %vm34, %v2303, 0
    %v2323 = vsel %vm34, %v2304, 0
    %v2326 = vsel %vm34, %v2305, 0
    %v2329 = vsel %vm34, %v2306, 0
    %v2332 = vsel %vm34, %v26, 0
    %v2335 = vsel %vm34, %v27, 0
    %v2338 = vsel %vm34, %v28, 0
    %v2341 = vsel %vm34, %v29, 0
    %2343 = vmatprep.subr.mxu0 0.0
    %2344 = vmatpush1.xpose.msra.mxu0 %v2332
    %2345 = vmatprep.subr.mxu0 0.0
    %2346 = vmatpush1.xpose.msra.mxu0 %v2335
    %2347 = vmatprep.subr.mxu0 0.0
    %2348 = vmatpush1.xpose.msra.mxu0 %v2338
    %2349 = vmatprep.subr.mxu0 0.0
    %2350 = vmatpush1.xpose.msra.mxu0 %v2341
    %2351 = vmatprep.subr.mxu0 0.0
    %2352 = vmatpush1.xpose.msra.mxu0 0.0
    %2353 = vmatprep.subr.mxu0 0.0
    %2354 = vmatpush1.xpose.msra.mxu0 0.0
    %2355 = vmatprep.subr.mxu0 0.0
    %2356 = vmatpush1.xpose.msra.mxu0 0.0
    %2357 = vmatprep.subr.mxu0 0.0
    %2358 = vmatpush1.xpose.msra.mxu0 0.0
    %2359 = vmatprep.subr.mxu0 0.0
    %2360 = vmatpush1.xpose.msra.mxu0 0.0
    %2361 = vmatprep.subr.mxu0 0.0
    %2362 = vmatpush1.xpose.msra.mxu0 0.0
    %2363 = vmatprep.subr.mxu0 0.0
    %2364 = vmatpush1.xpose.msra.mxu0 0.0
    %2365 = vmatprep.subr.mxu0 0.0
    %2366 = vmatpush1.xpose.msra.mxu0 0.0
    %2367 = vmatprep.subr.mxu0 0.0
    %2368 = vmatpush1.xpose.msra.mxu0 0.0
    %2369 = vmatprep.subr.mxu0 0.0
    %2370 = vmatpush1.xpose.msra.mxu0 0.0
    %2371 = vmatprep.subr.mxu0 0.0
    %2372 = vmatpush1.xpose.msra.mxu0 0.0
    %2373 = vmatprep.subr.mxu0 0.0
    %2374 = vmatpush1.xpose.msra.mxu0 0.0
    %2375 = vmatprep.subr.mxu0 0.0
    %2376 = vmatpush1.xpose.msra.mxu0 0.0
    %2377 = vmatprep.subr.mxu0 0.0
    %2378 = vmatpush1.xpose.msra.mxu0 0.0
    %2379 = vmatprep.subr.mxu0 0.0
    %2380 = vmatpush1.xpose.msra.mxu0 0.0
    %2381 = vmatprep.subr.mxu0 0.0
    %2382 = vmatpush1.xpose.msra.mxu0 0.0
    %2383 = vmatprep.subr.mxu0 0.0
    %2384 = vmatpush1.xpose.msra.mxu0 0.0
    %2385 = vmatprep.subr.mxu0 0.0
    %2386 = vmatpush1.xpose.msra.mxu0 0.0
    %2387 = vmatprep.subr.mxu0 0.0
    %2388 = vmatpush1.xpose.msra.mxu0 0.0
    %2389 = vmatprep.subr.mxu0 0.0
    %2390 = vmatpush1.xpose.msra.mxu0 0.0
    %2391 = vmatprep.subr.mxu0 0.0
    %2392 = vmatpush1.xpose.msra.mxu0 0.0
    %2393 = vmatprep.subr.mxu0 0.0
    %2394 = vmatpush1.xpose.msra.mxu0 0.0
    %2395 = vmatprep.subr.mxu0 0.0
    %2396 = vmatpush1.xpose.msra.mxu0 0.0
    %2397 = vmatprep.subr.mxu0 0.0
    %2398 = vmatpush1.xpose.msra.mxu0 0.0
    %2399 = vmatprep.subr.mxu0 0.0
    %2400 = vmatpush1.xpose.msra.mxu0 0.0
    %2401 = vmatprep.subr.mxu0 0.0
    %2402 = vmatpush1.xpose.msra.mxu0 0.0
    %2403 = vmatprep.subr.mxu0 0.0
    %2404 = vmatpush1.xpose.msra.mxu0 0.0
    %2405 = vmatprep.subr.mxu0 0.0
    %2406 = vmatpush1.xpose.msra.mxu0 0.0
    %2407 = vmatprep.mubr.f32.mxu0 0.0
    %2408 = vmatmul.mubr.f32.gmra.mrb[0].mxu0 %v2308
    %v2409 = vpop.f32.mrb[0].mxu0
    %v2410 = vadd.f32 0.0, %v2409
    %v2411 = vpop.f32.mrb[0].mxu0
    %2412 = vmatprep.mubr.f32.mxu0 0.0
    %2413 = vmatmul.mubr.f32.gmra.mrb[0].mxu0 %v2311
    %v2414 = vpop.f32.mrb[0].mxu0
    %v2415 = vadd.f32 0.0, %v2414
    %v2416 = vpop.f32.mrb[0].mxu0
    %2417 = vmatprep.mubr.f32.mxu0 0.0
    %2418 = vmatmul.mubr.f32.gmra.mrb[0].mxu0 %v2314
    %v2419 = vpop.f32.mrb[0].mxu0
    %v2420 = vadd.f32 0.0, %v2419
    %v2421 = vpop.f32.mrb[0].mxu0
    %2422 = vmatprep.mubr.f32.mxu0 0.0
    %2423 = vmatmul.mubr.f32.gmra.mrb[0].mxu0 %v2317
    %v2424 = vpop.f32.mrb[0].mxu0
    %v2425 = vadd.f32 0.0, %v2424
    %v2426 = vpop.f32.mrb[0].mxu0
    %2427 = vmatprep.mubr.f32.mxu0 0.0
    %2428 = vmatmul.mubr.f32.gmra.mrb[0].mxu0 %v2320
    %v2429 = vpop.f32.mrb[0].mxu0
    %v2430 = vadd.f32 0.0, %v2429
    %v2431 = vpop.f32.mrb[0].mxu0
    %2432 = vmatprep.mubr.f32.mxu0 0.0
    %2433 = vmatmul.mubr.f32.gmra.mrb[0].mxu0 %v2323
    %v2434 = vpop.f32.mrb[0].mxu0
    %v2435 = vadd.f32 0.0, %v2434
    %v2436 = vpop.f32.mrb[0].mxu0
    %2437 = vmatprep.mubr.f32.mxu0 0.0
    %2438 = vmatmul.mubr.f32.gmra.mrb[0].mxu0 %v2326
    %v2439 = vpop.f32.mrb[0].mxu0
    %v2440 = vadd.f32 0.0, %v2439
    %v2441 = vpop.f32.mrb[0].mxu0
    %2442 = vmatprep.mubr.f32.mxu0 0.0
    %2443 = vmatmul.mubr.f32.gmra.mrb[0].mxu0 %v2329
    %v2444 = vpop.f32.mrb[0].mxu0
    %v2445 = vadd.f32 0.0, %v2444
    %v2446 = vpop.f32.mrb[0].mxu0
    %2447 = vdwg.mxu0
    %v2448 = vld [vmem:[%s3] sm:$0xff]
    %v2450 = vsel %vm254, %v2291, 0
    %2452 = vmatprep.subr.mxu0 0.0
    %2453 = vmatpush1.msra.mxu0 %v2410
    %2454 = vmatprep.subr.mxu0 0.0
    %2455 = vmatpush1.msra.mxu0 0.0
    %2456 = vmatprep.subr.mxu0 0.0
    %2457 = vmatpush1.msra.mxu0 0.0
    %2458 = vmatprep.subr.mxu0 0.0
    %2459 = vmatpush1.msra.mxu0 0.0
    %2460 = vmatprep.subr.mxu0 0.0
    %2461 = vmatpush1.msra.mxu0 0.0
    %2462 = vmatprep.subr.mxu0 0.0
    %2463 = vmatpush1.msra.mxu0 0.0
    %2464 = vmatprep.subr.mxu0 0.0
    %2465 = vmatpush1.msra.mxu0 0.0
    %2466 = vmatprep.subr.mxu0 0.0
    %2467 = vmatpush1.msra.mxu0 0.0
    %2468 = vmatprep.subr.mxu0 0.0
    %2469 = vmatpush1.msra.mxu0 0.0
    %2470 = vmatprep.subr.mxu0 0.0
    %2471 = vmatpush1.msra.mxu0 0.0
    %2472 = vmatprep.subr.mxu0 0.0
    %2473 = vmatpush1.msra.mxu0 0.0
    %2474 = vmatprep.subr.mxu0 0.0
    %2475 = vmatpush1.msra.mxu0 0.0
    %2476 = vmatprep.subr.mxu0 0.0
    %2477 = vmatpush1.msra.mxu0 0.0
    %2478 = vmatprep.subr.mxu0 0.0
    %2479 = vmatpush1.msra.mxu0 0.0
    %2480 = vmatprep.subr.mxu0 0.0
    %2481 = vmatpush1.msra.mxu0 0.0
    %2482 = vmatprep.subr.mxu0 0.0
    %2483 = vmatpush1.msra.mxu0 0.0
    %2484 = vmatprep.subr.mxu0 0.0
    %2485 = vmatpush1.msra.mxu0 0.0
    %2486 = vmatprep.subr.mxu0 0.0
    %2487 = vmatpush1.msra.mxu0 0.0
    %2488 = vmatprep.subr.mxu0 0.0
    %2489 = vmatpush1.msra.mxu0 0.0
    %2490 = vmatprep.subr.mxu0 0.0
    %2491 = vmatpush1.msra.mxu0 0.0
    %2492 = vmatprep.subr.mxu0 0.0
    %2493 = vmatpush1.msra.mxu0 0.0
    %2494 = vmatprep.subr.mxu0 0.0
    %2495 = vmatpush1.msra.mxu0 0.0
    %2496 = vmatprep.subr.mxu0 0.0
    %2497 = vmatpush1.msra.mxu0 0.0
    %2498 = vmatprep.subr.mxu0 0.0
    %2499 = vmatpush1.msra.mxu0 0.0
    %2500 = vmatprep.subr.mxu0 0.0
    %2501 = vmatpush1.msra.mxu0 0.0
    %2502 = vmatprep.subr.mxu0 0.0
    %2503 = vmatpush1.msra.mxu0 0.0
    %2504 = vmatprep.subr.mxu0 0.0
    %2505 = vmatpush1.msra.mxu0 0.0
    %2506 = vmatprep.subr.mxu0 0.0
    %2507 = vmatpush1.msra.mxu0 0.0
    %2508 = vmatprep.subr.mxu0 0.0
    %2509 = vmatpush1.msra.mxu0 0.0
    %2510 = vmatprep.subr.mxu0 0.0
    %2511 = vmatpush1.msra.mxu0 0.0
    %2512 = vmatprep.subr.mxu0 0.0
    %2513 = vmatpush1.msra.mxu0 0.0
    %2514 = vmatprep.subr.mxu0 0.0
    %2515 = vmatpush1.msra.mxu0 0.0
    %2516 = vmatprep.mubr.f32.mxu0 0.0
    %2517 = vmatmul.mubr.f32.gmra.mrb[0].mxu0 %v2450
    %v2518 = vpop.f32.mrb[0].mxu0
    %v2519 = vadd.f32 0.0, %v2518
    %v2520 = vpop.f32.mrb[0].mxu0
    %2521 = vdwg.mxu0
    %v2522 = vmul.f32 %v2519, 0.35355338
    %v2523 = vadd.f32 %v2522, %v2448
    %vm2524 = vcmask 130048
    %v2525 = vsel %vm2524, %v2523, -inf
    %2526 = vmax.xlane.f32.xlu0 %v2525
    %v2527 = vpop.xlane.xlu0 %2526
    %v2528 = vsub.f32 %v2523, %v2527
    %v2529 = vmul.f32 %v2528, 1.442695
    %v2530 = vpow.pop %v2529
    %v2531 = vsel %vm2524, %v2530, 0.0
    %2532 = vadd.xlane.f32.xlu0 %v2531
    %v2533 = vpop.xlane.xlu0 %2532
    %v2534 = vrcp.pop %v2533
    %v2535 = vmul.f32 %v2530, %v2534
    %v2537 = vsel %vm2524, %v2535, 0
    %v2540 = vsel %vm2524, %v2430, 0
    %2542 = vmatprep.subr.mxu0 0.0
    %2543 = vmatpush1.xpose.msra.mxu0 %v2540
    %2544 = vmatprep.subr.mxu0 0.0
    %2545 = vmatpush1.xpose.msra.mxu0 0.0
    %2546 = vmatprep.subr.mxu0 0.0
    %2547 = vmatpush1.xpose.msra.mxu0 0.0
    %2548 = vmatprep.subr.mxu0 0.0
    %2549 = vmatpush1.xpose.msra.mxu0 0.0
    %2550 = vmatprep.subr.mxu0 0.0
    %2551 = vmatpush1.xpose.msra.mxu0 0.0
    %2552 = vmatprep.subr.mxu0 0.0
    %2553 = vmatpush1.xpose.msra.mxu0 0.0
    %2554 = vmatprep.subr.mxu0 0.0
    %2555 = vmatpush1.xpose.msra.mxu0 0.0
    %2556 = vmatprep.subr.mxu0 0.0
    %2557 = vmatpush1.xpose.msra.mxu0 0.0
    %2558 = vmatprep.subr.mxu0 0.0
    %2559 = vmatpush1.xpose.msra.mxu0 0.0
    %2560 = vmatprep.subr.mxu0 0.0
    %2561 = vmatpush1.xpose.msra.mxu0 0.0
    %2562 = vmatprep.subr.mxu0 0.0
    %2563 = vmatpush1.xpose.msra.mxu0 0.0
    %2564 = vmatprep.subr.mxu0 0.0
    %2565 = vmatpush1.xpose.msra.mxu0 0.0
    %2566 = vmatprep.subr.mxu0 0.0
    %2567 = vmatpush1.xpose.msra.mxu0 0.0
    %2568 = vmatprep.subr.mxu0 0.0
    %2569 = vmatpush1.xpose.msra.mxu0 0.0
    %2570 = vmatprep.subr.mxu0 0.0
    %2571 = vmatpush1.xpose.msra.mxu0 0.0
    %2572 = vmatprep.subr.mxu0 0.0
    %2573 = vmatpush1.xpose.msra.mxu0 0.0
    %2574 = vmatprep.subr.mxu0 0.0
    %2575 = vmatpush1.xpose.msra.mxu0 0.0
    %2576 = vmatprep.subr.mxu0 0.0
    %2577 = vmatpush1.xpose.msra.mxu0 0.0
    %2578 = vmatprep.subr.mxu0 0.0
    %2579 = vmatpush1.xpose.msra.mxu0 0.0
    %2580 = vmatprep.subr.mxu0 0.0
    %2581 = vmatpush1.xpose.msra.mxu0 0.0
    %2582 = vmatprep.subr.mxu0 0.0
    %2583 = vmatpush1.xpose.msra.mxu0 0.0
    %2584 = vmatprep.subr.mxu0 0.0
    %2585 = vmatpush1.xpose.msra.mxu0 0.0
    %2586 = vmatprep.subr.mxu0 0.0
    %2587 = vmatpush1.xpose.msra.mxu0 0.0
    %2588 = vmatprep.subr.mxu0 0.0
    %2589 = vmatpush1.xpose.msra.mxu0 0.0
    %2590 = vmatprep.subr.mxu0 0.0
    %2591 = vmatpush1.xpose.msra.mxu0 0.0
    %2592 = vmatprep.subr.mxu0 0.0
    %2593 = vmatpush1.xpose.msra.mxu0 0.0
    %2594 = vmatprep.subr.mxu0 0.0
    %2595 = vmatpush1.xpose.msra.mxu0 0.0
    %2596 = vmatprep.subr.mxu0 0.0
    %2597 = vmatpush1.xpose.msra.mxu0 0.0
    %2598 = vmatprep.subr.mxu0 0.0
    %2599 = vmatpush1.xpose.msra.mxu0 0.0
    %2600 = vmatprep.subr.mxu0 0.0
    %2601 = vmatpush1.xpose.msra.mxu0 0.0
    %2602 = vmatprep.subr.mxu0 0.0
    %2603 = vmatpush1.xpose.msra.mxu0 0.0
    %2604 = vmatprep.subr.mxu0 0.0
    %2605 = vmatpush1.xpose.msra.mxu0 0.0
    %2606 = vmatprep.mubr.f32.mxu0 0.0
    %2607 = vmatmul.mubr.f32.gmra.mrb[0].mxu0 %v2537
    %v2608 = vpop.f32.mrb[0].mxu0
    %v2609 = vadd.f32 0.0, %v2608
    %v2610 = vpop.f32.mrb[0].mxu0
    %2611 = vdwg.mxu0
    %v2612 = vld [vmem:[%s4 + $0xe0] sm:$0xff]
    %2613 = vrot.lane.b32.xlu0 %v2291, 120
    %v2614 = vpop.permute.xlu0 %2613
    %v2615 = vsel %vm254, %v2614, 0
    %2617 = vmatprep.subr.mxu0 0.0
    %2618 = vmatpush1.msra.mxu0 %v2415
    %2619 = vmatprep.subr.mxu0 0.0
    %2620 = vmatpush1.msra.mxu0 0.0
    %2621 = vmatprep.subr.mxu0 0.0
    %2622 = vmatpush1.msra.mxu0 0.0
    %2623 = vmatprep.subr.mxu0 0.0
    %2624 = vmatpush1.msra.mxu0 0.0
    %2625 = vmatprep.subr.mxu0 0.0
    %2626 = vmatpush1.msra.mxu0 0.0
    %2627 = vmatprep.subr.mxu0 0.0
    %2628 = vmatpush1.msra.mxu0 0.0
    %2629 = vmatprep.subr.mxu0 0.0
    %2630 = vmatpush1.msra.mxu0 0.0
    %2631 = vmatprep.subr.mxu0 0.0
    %2632 = vmatpush1.msra.mxu0 0.0
    %2633 = vmatprep.subr.mxu0 0.0
    %2634 = vmatpush1.msra.mxu0 0.0
    %2635 = vmatprep.subr.mxu0 0.0
    %2636 = vmatpush1.msra.mxu0 0.0
    %2637 = vmatprep.subr.mxu0 0.0
    %2638 = vmatpush1.msra.mxu0 0.0
    %2639 = vmatprep.subr.mxu0 0.0
    %2640 = vmatpush1.msra.mxu0 0.0
    %2641 = vmatprep.subr.mxu0 0.0
    %2642 = vmatpush1.msra.mxu0 0.0
    %2643 = vmatprep.subr.mxu0 0.0
    %2644 = vmatpush1.msra.mxu0 0.0
    %2645 = vmatprep.subr.mxu0 0.0
    %2646 = vmatpush1.msra.mxu0 0.0
    %2647 = vmatprep.subr.mxu0 0.0
    %2648 = vmatpush1.msra.mxu0 0.0
    %2649 = vmatprep.subr.mxu0 0.0
    %2650 = vmatpush1.msra.mxu0 0.0
    %2651 = vmatprep.subr.mxu0 0.0
    %2652 = vmatpush1.msra.mxu0 0.0
    %2653 = vmatprep.subr.mxu0 0.0
    %2654 = vmatpush1.msra.mxu0 0.0
    %2655 = vmatprep.subr.mxu0 0.0
    %2656 = vmatpush1.msra.mxu0 0.0
    %2657 = vmatprep.subr.mxu0 0.0
    %2658 = vmatpush1.msra.mxu0 0.0
    %2659 = vmatprep.subr.mxu0 0.0
    %2660 = vmatpush1.msra.mxu0 0.0
    %2661 = vmatprep.subr.mxu0 0.0
    %2662 = vmatpush1.msra.mxu0 0.0
    %2663 = vmatprep.subr.mxu0 0.0
    %2664 = vmatpush1.msra.mxu0 0.0
    %2665 = vmatprep.subr.mxu0 0.0
    %2666 = vmatpush1.msra.mxu0 0.0
    %2667 = vmatprep.subr.mxu0 0.0
    %2668 = vmatpush1.msra.mxu0 0.0
    %2669 = vmatprep.subr.mxu0 0.0
    %2670 = vmatpush1.msra.mxu0 0.0
    %2671 = vmatprep.subr.mxu0 0.0
    %2672 = vmatpush1.msra.mxu0 0.0
    %2673 = vmatprep.subr.mxu0 0.0
    %2674 = vmatpush1.msra.mxu0 0.0
    %2675 = vmatprep.subr.mxu0 0.0
    %2676 = vmatpush1.msra.mxu0 0.0
    %2677 = vmatprep.subr.mxu0 0.0
    %2678 = vmatpush1.msra.mxu0 0.0
    %2679 = vmatprep.subr.mxu0 0.0
    %2680 = vmatpush1.msra.mxu0 0.0
    %2681 = vmatprep.mubr.f32.mxu0 0.0
    %2682 = vmatmul.mubr.f32.gmra.mrb[0].mxu0 %v2615
    %v2683 = vpop.f32.mrb[0].mxu0
    %v2684 = vadd.f32 0.0, %v2683
    %v2685 = vpop.f32.mrb[0].mxu0
    %2686 = vdwg.mxu0
    %v2687 = vmul.f32 %v2684, 0.35355338
    %v2688 = vadd.f32 %v2687, %v2448
    %v2689 = vsel %vm2524, %v2688, -inf
    %2690 = vmax.xlane.f32.xlu0 %v2689
    %v2691 = vpop.xlane.xlu0 %2690
    %v2692 = vsub.f32 %v2688, %v2691
    %v2693 = vmul.f32 %v2692, 1.442695
    %v2694 = vpow.pop %v2693
    %v2695 = vsel %vm2524, %v2694, 0.0
    %2696 = vadd.xlane.f32.xlu0 %v2695
    %v2697 = vpop.xlane.xlu0 %2696
    %v2698 = vrcp.pop %v2697
    %v2699 = vmul.f32 %v2694, %v2698
    %v2701 = vsel %vm2524, %v2699, 0
    %v2704 = vsel %vm2524, %v2435, 0
    %2706 = vmatprep.subr.mxu0 0.0
    %2707 = vmatpush1.xpose.msra.mxu0 %v2704
    %2708 = vmatprep.subr.mxu0 0.0
    %2709 = vmatpush1.xpose.msra.mxu0 0.0
    %2710 = vmatprep.subr.mxu0 0.0
    %2711 = vmatpush1.xpose.msra.mxu0 0.0
    %2712 = vmatprep.subr.mxu0 0.0
    %2713 = vmatpush1.xpose.msra.mxu0 0.0
    %2714 = vmatprep.subr.mxu0 0.0
    %2715 = vmatpush1.xpose.msra.mxu0 0.0
    %2716 = vmatprep.subr.mxu0 0.0
    %2717 = vmatpush1.xpose.msra.mxu0 0.0
    %2718 = vmatprep.subr.mxu0 0.0
    %2719 = vmatpush1.xpose.msra.mxu0 0.0
    %2720 = vmatprep.subr.mxu0 0.0
    %2721 = vmatpush1.xpose.msra.mxu0 0.0
    %2722 = vmatprep.subr.mxu0 0.0
    %2723 = vmatpush1.xpose.msra.mxu0 0.0
    %2724 = vmatprep.subr.mxu0 0.0
    %2725 = vmatpush1.xpose.msra.mxu0 0.0
    %2726 = vmatprep.subr.mxu0 0.0
    %2727 = vmatpush1.xpose.msra.mxu0 0.0
    %2728 = vmatprep.subr.mxu0 0.0
    %2729 = vmatpush1.xpose.msra.mxu0 0.0
    %2730 = vmatprep.subr.mxu0 0.0
    %2731 = vmatpush1.xpose.msra.mxu0 0.0
    %2732 = vmatprep.subr.mxu0 0.0
    %2733 = vmatpush1.xpose.msra.mxu0 0.0
    %2734 = vmatprep.subr.mxu0 0.0
    %2735 = vmatpush1.xpose.msra.mxu0 0.0
    %2736 = vmatprep.subr.mxu0 0.0
    %2737 = vmatpush1.xpose.msra.mxu0 0.0
    %2738 = vmatprep.subr.mxu0 0.0
    %2739 = vmatpush1.xpose.msra.mxu0 0.0
    %2740 = vmatprep.subr.mxu0 0.0
    %2741 = vmatpush1.xpose.msra.mxu0 0.0
    %2742 = vmatprep.subr.mxu0 0.0
    %2743 = vmatpush1.xpose.msra.mxu0 0.0
    %2744 = vmatprep.subr.mxu0 0.0
    %2745 = vmatpush1.xpose.msra.mxu0 0.0
    %2746 = vmatprep.subr.mxu0 0.0
    %2747 = vmatpush1.xpose.msra.mxu0 0.0
    %2748 = vmatprep.subr.mxu0 0.0
    %2749 = vmatpush1.xpose.msra.mxu0 0.0
    %2750 = vmatprep.subr.mxu0 0.0
    %2751 = vmatpush1.xpose.msra.mxu0 0.0
    %2752 = vmatprep.subr.mxu0 0.0
    %2753 = vmatpush1.xpose.msra.mxu0 0.0
    %2754 = vmatprep.subr.mxu0 0.0
    %2755 = vmatpush1.xpose.msra.mxu0 0.0
    %2756 = vmatprep.subr.mxu0 0.0
    %2757 = vmatpush1.xpose.msra.mxu0 0.0
    %2758 = vmatprep.subr.mxu0 0.0
    %2759 = vmatpush1.xpose.msra.mxu0 0.0
    %2760 = vmatprep.subr.mxu0 0.0
    %2761 = vmatpush1.xpose.msra.mxu0 0.0
    %2762 = vmatprep.subr.mxu0 0.0
    %2763 = vmatpush1.xpose.msra.mxu0 0.0
    %2764 = vmatprep.subr.mxu0 0.0
    %2765 = vmatpush1.xpose.msra.mxu0 0.0
    %2766 = vmatprep.subr.mxu0 0.0
    %2767 = vmatpush1.xpose.msra.mxu0 0.0
    %2768 = vmatprep.subr.mxu0 0.0
    %2769 = vmatpush1.xpose.msra.mxu0 0.0
    %2770 = vmatprep.mubr.f32.mxu0 0.0
    %2771 = vmatmul.mubr.f32.gmra.mrb[0].mxu0 %v2701
    %v2772 = vpop.f32.mrb[0].mxu0
    %v2773 = vadd.f32 0.0, %v2772
    %v2774 = vpop.f32.mrb[0].mxu0
    %2775 = vdwg.mxu0
    %v2776 = vld [vmem:[%s4 + $0xe8] sm:$0xff]
    %v2778 = vsel %vm254, %v2773, 0
    %2780 = vmatprep.subr.mxu0 0.0
    %2781 = vmatpush1.msra.mxu0 %v2776
    %2782 = vmatprep.subr.mxu0 0.0
    %2783 = vmatpush1.msra.mxu0 0.0
    %2784 = vmatprep.subr.mxu0 0.0
    %2785 = vmatpush1.msra.mxu0 0.0
    %2786 = vmatprep.subr.mxu0 0.0
    %2787 = vmatpush1.msra.mxu0 0.0
    %2788 = vmatprep.subr.mxu0 0.0
    %2789 = vmatpush1.msra.mxu0 0.0
    %2790 = vmatprep.subr.mxu0 0.0
    %2791 = vmatpush1.msra.mxu0 0.0
    %2792 = vmatprep.subr.mxu0 0.0
    %2793 = vmatpush1.msra.mxu0 0.0
    %2794 = vmatprep.subr.mxu0 0.0
    %2795 = vmatpush1.msra.mxu0 0.0
    %2796 = vmatprep.subr.mxu0 0.0
    %2797 = vmatpush1.msra.mxu0 0.0
    %2798 = vmatprep.subr.mxu0 0.0
    %2799 = vmatpush1.msra.mxu0 0.0
    %2800 = vmatprep.subr.mxu0 0.0
    %2801 = vmatpush1.msra.mxu0 0.0
    %2802 = vmatprep.subr.mxu0 0.0
    %2803 = vmatpush1.msra.mxu0 0.0
    %2804 = vmatprep.subr.mxu0 0.0
    %2805 = vmatpush1.msra.mxu0 0.0
    %2806 = vmatprep.subr.mxu0 0.0
    %2807 = vmatpush1.msra.mxu0 0.0
    %2808 = vmatprep.subr.mxu0 0.0
    %2809 = vmatpush1.msra.mxu0 0.0
    %2810 = vmatprep.subr.mxu0 0.0
    %2811 = vmatpush1.msra.mxu0 0.0
    %2812 = vmatprep.subr.mxu0 0.0
    %2813 = vmatpush1.msra.mxu0 0.0
    %2814 = vmatprep.subr.mxu0 0.0
    %2815 = vmatpush1.msra.mxu0 0.0
    %2816 = vmatprep.subr.mxu0 0.0
    %2817 = vmatpush1.msra.mxu0 0.0
    %2818 = vmatprep.subr.mxu0 0.0
    %2819 = vmatpush1.msra.mxu0 0.0
    %2820 = vmatprep.subr.mxu0 0.0
    %2821 = vmatpush1.msra.mxu0 0.0
    %2822 = vmatprep.subr.mxu0 0.0
    %2823 = vmatpush1.msra.mxu0 0.0
    %2824 = vmatprep.subr.mxu0 0.0
    %2825 = vmatpush1.msra.mxu0 0.0
    %2826 = vmatprep.subr.mxu0 0.0
    %2827 = vmatpush1.msra.mxu0 0.0
    %2828 = vmatprep.subr.mxu0 0.0
    %2829 = vmatpush1.msra.mxu0 0.0
    %2830 = vmatprep.subr.mxu0 0.0
    %2831 = vmatpush1.msra.mxu0 0.0
    %2832 = vmatprep.subr.mxu0 0.0
    %2833 = vmatpush1.msra.mxu0 0.0
    %2834 = vmatprep.subr.mxu0 0.0
    %2835 = vmatpush1.msra.mxu0 0.0
    %2836 = vmatprep.subr.mxu0 0.0
    %2837 = vmatpush1.msra.mxu0 0.0
    %2838 = vmatprep.subr.mxu0 0.0
    %2839 = vmatpush1.msra.mxu0 0.0
    %2840 = vmatprep.subr.mxu0 0.0
    %2841 = vmatpush1.msra.mxu0 0.0
    %2842 = vmatprep.subr.mxu0 0.0
    %2843 = vmatpush1.msra.mxu0 0.0
    %2844 = vmatprep.mubr.f32.mxu0 0.0
    %2845 = vmatmul.mubr.f32.gmra.mrb[0].mxu0 %v2778
    %v2846 = vpop.f32.mrb[0].mxu0
    %v2847 = vadd.f32 0.0, %v2846
    %v2848 = vpop.f32.mrb[0].mxu0
    %2849 = vdwg.mxu0
    %v2851 = vsel %vm254, %v2609, 0
    %2853 = vmatprep.subr.mxu0 0.0
    %2854 = vmatpush1.msra.mxu0 %v2612
    %2855 = vmatprep.subr.mxu0 0.0
    %2856 = vmatpush1.msra.mxu0 0.0
    %2857 = vmatprep.subr.mxu0 0.0
    %2858 = vmatpush1.msra.mxu0 0.0
    %2859 = vmatprep.subr.mxu0 0.0
    %2860 = vmatpush1.msra.mxu0 0.0
    %2861 = vmatprep.subr.mxu0 0.0
    %2862 = vmatpush1.msra.mxu0 0.0
    %2863 = vmatprep.subr.mxu0 0.0
    %2864 = vmatpush1.msra.mxu0 0.0
    %2865 = vmatprep.subr.mxu0 0.0
    %2866 = vmatpush1.msra.mxu0 0.0
    %2867 = vmatprep.subr.mxu0 0.0
    %2868 = vmatpush1.msra.mxu0 0.0
    %2869 = vmatprep.subr.mxu0 0.0
    %2870 = vmatpush1.msra.mxu0 0.0
    %2871 = vmatprep.subr.mxu0 0.0
    %2872 = vmatpush1.msra.mxu0 0.0
    %2873 = vmatprep.subr.mxu0 0.0
    %2874 = vmatpush1.msra.mxu0 0.0
    %2875 = vmatprep.subr.mxu0 0.0
    %2876 = vmatpush1.msra.mxu0 0.0
    %2877 = vmatprep.subr.mxu0 0.0
    %2878 = vmatpush1.msra.mxu0 0.0
    %2879 = vmatprep.subr.mxu0 0.0
    %2880 = vmatpush1.msra.mxu0 0.0
    %2881 = vmatprep.subr.mxu0 0.0
    %2882 = vmatpush1.msra.mxu0 0.0
    %2883 = vmatprep.subr.mxu0 0.0
    %2884 = vmatpush1.msra.mxu0 0.0
    %2885 = vmatprep.subr.mxu0 0.0
    %2886 = vmatpush1.msra.mxu0 0.0
    %2887 = vmatprep.subr.mxu0 0.0
    %2888 = vmatpush1.msra.mxu0 0.0
    %2889 = vmatprep.subr.mxu0 0.0
    %2890 = vmatpush1.msra.mxu0 0.0
    %2891 = vmatprep.subr.mxu0 0.0
    %2892 = vmatpush1.msra.mxu0 0.0
    %2893 = vmatprep.subr.mxu0 0.0
    %2894 = vmatpush1.msra.mxu0 0.0
    %2895 = vmatprep.subr.mxu0 0.0
    %2896 = vmatpush1.msra.mxu0 0.0
    %2897 = vmatprep.subr.mxu0 0.0
    %2898 = vmatpush1.msra.mxu0 0.0
    %2899 = vmatprep.subr.mxu0 0.0
    %2900 = vmatpush1.msra.mxu0 0.0
    %2901 = vmatprep.subr.mxu0 0.0
    %2902 = vmatpush1.msra.mxu0 0.0
    %2903 = vmatprep.subr.mxu0 0.0
    %2904 = vmatpush1.msra.mxu0 0.0
    %2905 = vmatprep.subr.mxu0 0.0
    %2906 = vmatpush1.msra.mxu0 0.0
    %2907 = vmatprep.subr.mxu0 0.0
    %2908 = vmatpush1.msra.mxu0 0.0
    %2909 = vmatprep.subr.mxu0 0.0
    %2910 = vmatpush1.msra.mxu0 0.0
    %2911 = vmatprep.subr.mxu0 0.0
    %2912 = vmatpush1.msra.mxu0 0.0
    %2913 = vmatprep.subr.mxu0 0.0
    %2914 = vmatpush1.msra.mxu0 0.0
    %2915 = vmatprep.subr.mxu0 0.0
    %2916 = vmatpush1.msra.mxu0 0.0
    %2917 = vmatprep.mubr.f32.mxu0 0.0
    %2918 = vmatmul.mubr.f32.gmra.mrb[0].mxu0 %v2851
    %v2919 = vpop.f32.mrb[0].mxu0
    %v2920 = vadd.f32 %v2847, %v2919
    %v2921 = vpop.f32.mrb[0].mxu0
    %2922 = vdwg.mxu0
    %2923 = vrot.lane.b32.xlu0 %v2291, 112
    %v2924 = vpop.permute.xlu0 %2923
    %v2925 = vsel %vm254, %v2924, 0
    %2927 = vmatprep.subr.mxu0 0.0
    %2928 = vmatpush1.msra.mxu0 %v2420
    %2929 = vmatprep.subr.mxu0 0.0
    %2930 = vmatpush1.msra.mxu0 0.0
    %2931 = vmatprep.subr.mxu0 0.0
    %2932 = vmatpush1.msra.mxu0 0.0
    %2933 = vmatprep.subr.mxu0 0.0
    %2934 = vmatpush1.msra.mxu0 0.0
    %2935 = vmatprep.subr.mxu0 0.0
    %2936 = vmatpush1.msra.mxu0 0.0
    %2937 = vmatprep.subr.mxu0 0.0
    %2938 = vmatpush1.msra.mxu0 0.0
    %2939 = vmatprep.subr.mxu0 0.0
    %2940 = vmatpush1.msra.mxu0 0.0
    %2941 = vmatprep.subr.mxu0 0.0
    %2942 = vmatpush1.msra.mxu0 0.0
    %2943 = vmatprep.subr.mxu0 0.0
    %2944 = vmatpush1.msra.mxu0 0.0
    %2945 = vmatprep.subr.mxu0 0.0
    %2946 = vmatpush1.msra.mxu0 0.0
    %2947 = vmatprep.subr.mxu0 0.0
    %2948 = vmatpush1.msra.mxu0 0.0
    %2949 = vmatprep.subr.mxu0 0.0
    %2950 = vmatpush1.msra.mxu0 0.0
    %2951 = vmatprep.subr.mxu0 0.0
    %2952 = vmatpush1.msra.mxu0 0.0
    %2953 = vmatprep.subr.mxu0 0.0
    %2954 = vmatpush1.msra.mxu0 0.0
    %2955 = vmatprep.subr.mxu0 0.0
    %2956 = vmatpush1.msra.mxu0 0.0
    %2957 = vmatprep.subr.mxu0 0.0
    %2958 = vmatpush1.msra.mxu0 0.0
    %2959 = vmatprep.subr.mxu0 0.0
    %2960 = vmatpush1.msra.mxu0 0.0
    %2961 = vmatprep.subr.mxu0 0.0
    %2962 = vmatpush1.msra.mxu0 0.0
    %2963 = vmatprep.subr.mxu0 0.0
    %2964 = vmatpush1.msra.mxu0 0.0
    %2965 = vmatprep.subr.mxu0 0.0
    %2966 = vmatpush1.msra.mxu0 0.0
    %2967 = vmatprep.subr.mxu0 0.0
    %2968 = vmatpush1.msra.mxu0 0.0
    %2969 = vmatprep.subr.mxu0 0.0
    %2970 = vmatpush1.msra.mxu0 0.0
    %2971 = vmatprep.subr.mxu0 0.0
    %2972 = vmatpush1.msra.mxu0 0.0
    %2973 = vmatprep.subr.mxu0 0.0
    %2974 = vmatpush1.msra.mxu0 0.0
    %2975 = vmatprep.subr.mxu0 0.0
    %2976 = vmatpush1.msra.mxu0 0.0
    %2977 = vmatprep.subr.mxu0 0.0
    %2978 = vmatpush1.msra.mxu0 0.0
    %2979 = vmatprep.subr.mxu0 0.0
    %2980 = vmatpush1.msra.mxu0 0.0
    %2981 = vmatprep.subr.mxu0 0.0
    %2982 = vmatpush1.msra.mxu0 0.0
    %2983 = vmatprep.subr.mxu0 0.0
    %2984 = vmatpush1.msra.mxu0 0.0
    %2985 = vmatprep.subr.mxu0 0.0
    %2986 = vmatpush1.msra.mxu0 0.0
    %2987 = vmatprep.subr.mxu0 0.0
    %2988 = vmatpush1.msra.mxu0 0.0
    %2989 = vmatprep.subr.mxu0 0.0
    %2990 = vmatpush1.msra.mxu0 0.0
    %2991 = vmatprep.mubr.f32.mxu0 0.0
    %2992 = vmatmul.mubr.f32.gmra.mrb[0].mxu0 %v2925
    %v2993 = vpop.f32.mrb[0].mxu0
    %v2994 = vadd.f32 0.0, %v2993
    %v2995 = vpop.f32.mrb[0].mxu0
    %2996 = vdwg.mxu0
    %v2997 = vmul.f32 %v2994, 0.35355338
    %v2998 = vadd.f32 %v2997, %v2448
    %v2999 = vsel %vm2524, %v2998, -inf
    %3000 = vmax.xlane.f32.xlu0 %v2999
    %v3001 = vpop.xlane.xlu0 %3000
    %v3002 = vsub.f32 %v2998, %v3001
    %v3003 = vmul.f32 %v3002, 1.442695
    %v3004 = vpow.pop %v3003
    %v3005 = vsel %vm2524, %v3004, 0.0
    %3006 = vadd.xlane.f32.xlu0 %v3005
    %v3007 = vpop.xlane.xlu0 %3006
    %v3008 = vrcp.pop %v3007
    %v3009 = vmul.f32 %v3004, %v3008
    %v3011 = vsel %vm2524, %v3009, 0
    %v3014 = vsel %vm2524, %v2440, 0
    %3016 = vmatprep.subr.mxu0 0.0
    %3017 = vmatpush1.xpose.msra.mxu0 %v3014
    %3018 = vmatprep.subr.mxu0 0.0
    %3019 = vmatpush1.xpose.msra.mxu0 0.0
    %3020 = vmatprep.subr.mxu0 0.0
    %3021 = vmatpush1.xpose.msra.mxu0 0.0
    %3022 = vmatprep.subr.mxu0 0.0
    %3023 = vmatpush1.xpose.msra.mxu0 0.0
    %3024 = vmatprep.subr.mxu0 0.0
    %3025 = vmatpush1.xpose.msra.mxu0 0.0
    %3026 = vmatprep.subr.mxu0 0.0
    %3027 = vmatpush1.xpose.msra.mxu0 0.0
    %3028 = vmatprep.subr.mxu0 0.0
    %3029 = vmatpush1.xpose.msra.mxu0 0.0
    %3030 = vmatprep.subr.mxu0 0.0
    %3031 = vmatpush1.xpose.msra.mxu0 0.0
    %3032 = vmatprep.subr.mxu0 0.0
    %3033 = vmatpush1.xpose.msra.mxu0 0.0
    %3034 = vmatprep.subr.mxu0 0.0
    %3035 = vmatpush1.xpose.msra.mxu0 0.0
    %3036 = vmatprep.subr.mxu0 0.0
    %3037 = vmatpush1.xpose.msra.mxu0 0.0
    %3038 = vmatprep.subr.mxu0 0.0
    %3039 = vmatpush1.xpose.msra.mxu0 0.0
    %3040 = vmatprep.subr.mxu0 0.0
    %3041 = vmatpush1.xpose.msra.mxu0 0.0
    %3042 = vmatprep.subr.mxu0 0.0
    %3043 = vmatpush1.xpose.msra.mxu0 0.0
    %3044 = vmatprep.subr.mxu0 0.0
    %3045 = vmatpush1.xpose.msra.mxu0 0.0
    %3046 = vmatprep.subr.mxu0 0.0
    %3047 = vmatpush1.xpose.msra.mxu0 0.0
    %3048 = vmatprep.subr.mxu0 0.0
    %3049 = vmatpush1.xpose.msra.mxu0 0.0
    %3050 = vmatprep.subr.mxu0 0.0
    %3051 = vmatpush1.xpose.msra.mxu0 0.0
    %3052 = vmatprep.subr.mxu0 0.0
    %3053 = vmatpush1.xpose.msra.mxu0 0.0
    %3054 = vmatprep.subr.mxu0 0.0
    %3055 = vmatpush1.xpose.msra.mxu0 0.0
    %3056 = vmatprep.subr.mxu0 0.0
    %3057 = vmatpush1.xpose.msra.mxu0 0.0
    %3058 = vmatprep.subr.mxu0 0.0
    %3059 = vmatpush1.xpose.msra.mxu0 0.0
    %3060 = vmatprep.subr.mxu0 0.0
    %3061 = vmatpush1.xpose.msra.mxu0 0.0
    %3062 = vmatprep.subr.mxu0 0.0
    %3063 = vmatpush1.xpose.msra.mxu0 0.0
    %3064 = vmatprep.subr.mxu0 0.0
    %3065 = vmatpush1.xpose.msra.mxu0 0.0
    %3066 = vmatprep.subr.mxu0 0.0
    %3067 = vmatpush1.xpose.msra.mxu0 0.0
    %3068 = vmatprep.subr.mxu0 0.0
    %3069 = vmatpush1.xpose.msra.mxu0 0.0
    %3070 = vmatprep.subr.mxu0 0.0
    %3071 = vmatpush1.xpose.msra.mxu0 0.0
    %3072 = vmatprep.subr.mxu0 0.0
    %3073 = vmatpush1.xpose.msra.mxu0 0.0
    %3074 = vmatprep.subr.mxu0 0.0
    %3075 = vmatpush1.xpose.msra.mxu0 0.0
    %3076 = vmatprep.subr.mxu0 0.0
    %3077 = vmatpush1.xpose.msra.mxu0 0.0
    %3078 = vmatprep.subr.mxu0 0.0
    %3079 = vmatpush1.xpose.msra.mxu0 0.0
    %3080 = vmatprep.mubr.f32.mxu0 0.0
    %3081 = vmatmul.mubr.f32.gmra.mrb[0].mxu0 %v3011
    %v3082 = vpop.f32.mrb[0].mxu0
    %v3083 = vadd.f32 0.0, %v3082
    %v3084 = vpop.f32.mrb[0].mxu0
    %3085 = vdwg.mxu0
    %v3086 = vld [vmem:[%s4 + $0xf0] sm:$0xff]
    %v3088 = vsel %vm254, %v3083, 0
    %3090 = vmatprep.subr.mxu0 0.0
    %3091 = vmatpush1.msra.mxu0 %v3086
    %3092 = vmatprep.subr.mxu0 0.0
    %3093 = vmatpush1.msra.mxu0 0.0
    %3094 = vmatprep.subr.mxu0 0.0
    %3095 = vmatpush1.msra.mxu0 0.0
    %3096 = vmatprep.subr.mxu0 0.0
    %3097 = vmatpush1.msra.mxu0 0.0
    %3098 = vmatprep.subr.mxu0 0.0
    %3099 = vmatpush1.msra.mxu0 0.0
    %3100 = vmatprep.subr.mxu0 0.0
    %3101 = vmatpush1.msra.mxu0 0.0
    %3102 = vmatprep.subr.mxu0 0.0
    %3103 = vmatpush1.msra.mxu0 0.0
    %3104 = vmatprep.subr.mxu0 0.0
    %3105 = vmatpush1.msra.mxu0 0.0
    %3106 = vmatprep.subr.mxu0 0.0
    %3107 = vmatpush1.msra.mxu0 0.0
    %3108 = vmatprep.subr.mxu0 0.0
    %3109 = vmatpush1.msra.mxu0 0.0
    %3110 = vmatprep.subr.mxu0 0.0
    %3111 = vmatpush1.msra.mxu0 0.0
    %3112 = vmatprep.subr.mxu0 0.0
    %3113 = vmatpush1.msra.mxu0 0.0
    %3114 = vmatprep.subr.mxu0 0.0
    %3115 = vmatpush1.msra.mxu0 0.0
    %3116 = vmatprep.subr.mxu0 0.0
    %3117 = vmatpush1.msra.mxu0 0.0
    %3118 = vmatprep.subr.mxu0 0.0
    %3119 = vmatpush1.msra.mxu0 0.0
    %3120 = vmatprep.subr.mxu0 0.0
    %3121 = vmatpush1.msra.mxu0 0.0
    %3122 = vmatprep.subr.mxu0 0.0
    %3123 = vmatpush1.msra.mxu0 0.0
    %3124 = vmatprep.subr.mxu0 0.0
    %3125 = vmatpush1.msra.mxu0 0.0
    %3126 = vmatprep.subr.mxu0 0.0
    %3127 = vmatpush1.msra.mxu0 0.0
    %3128 = vmatprep.subr.mxu0 0.0
    %3129 = vmatpush1.msra.mxu0 0.0
    %3130 = vmatprep.subr.mxu0 0.0
    %3131 = vmatpush1.msra.mxu0 0.0
    %3132 = vmatprep.subr.mxu0 0.0
    %3133 = vmatpush1.msra.mxu0 0.0
    %3134 = vmatprep.subr.mxu0 0.0
    %3135 = vmatpush1.msra.mxu0 0.0
    %3136 = vmatprep.subr.mxu0 0.0
    %3137 = vmatpush1.msra.mxu0 0.0
    %3138 = vmatprep.subr.mxu0 0.0
    %3139 = vmatpush1.msra.mxu0 0.0
    %3140 = vmatprep.subr.mxu0 0.0
    %3141 = vmatpush1.msra.mxu0 0.0
    %3142 = vmatprep.subr.mxu0 0.0
    %3143 = vmatpush1.msra.mxu0 0.0
    %3144 = vmatprep.subr.mxu0 0.0
    %3145 = vmatpush1.msra.mxu0 0.0
    %3146 = vmatprep.subr.mxu0 0.0
    %3147 = vmatpush1.msra.mxu0 0.0
    %3148 = vmatprep.subr.mxu0 0.0
    %3149 = vmatpush1.msra.mxu0 0.0
    %3150 = vmatprep.subr.mxu0 0.0
    %3151 = vmatpush1.msra.mxu0 0.0
    %3152 = vmatprep.subr.mxu0 0.0
    %3153 = vmatpush1.msra.mxu0 0.0
    %3154 = vmatprep.mubr.f32.mxu0 0.0
    %3155 = vmatmul.mubr.f32.gmra.mrb[0].mxu0 %v3088
    %v3156 = vpop.f32.mrb[0].mxu0
    %v3157 = vadd.f32 0.0, %v3156
    %v3158 = vpop.f32.mrb[0].mxu0
    %3159 = vdwg.mxu0
    %v3160 = vadd.f32 %v2920, %v3157
    %3161 = vrot.lane.b32.xlu0 %v2291, 104
    %v3162 = vpop.permute.xlu0 %3161
    %v3163 = vsel %vm254, %v3162, 0
    %3165 = vmatprep.subr.mxu0 0.0
    %3166 = vmatpush1.msra.mxu0 %v2425
    %3167 = vmatprep.subr.mxu0 0.0
    %3168 = vmatpush1.msra.mxu0 0.0
    %3169 = vmatprep.subr.mxu0 0.0
    %3170 = vmatpush1.msra.mxu0 0.0
    %3171 = vmatprep.subr.mxu0 0.0
    %3172 = vmatpush1.msra.mxu0 0.0
    %3173 = vmatprep.subr.mxu0 0.0
    %3174 = vmatpush1.msra.mxu0 0.0
    %3175 = vmatprep.subr.mxu0 0.0
    %3176 = vmatpush1.msra.mxu0 0.0
    %3177 = vmatprep.subr.mxu0 0.0
    %3178 = vmatpush1.msra.mxu0 0.0
    %3179 = vmatprep.subr.mxu0 0.0
    %3180 = vmatpush1.msra.mxu0 0.0
    %3181 = vmatprep.subr.mxu0 0.0
    %3182 = vmatpush1.msra.mxu0 0.0
    %3183 = vmatprep.subr.mxu0 0.0
    %3184 = vmatpush1.msra.mxu0 0.0
    %3185 = vmatprep.subr.mxu0 0.0
    %3186 = vmatpush1.msra.mxu0 0.0
    %3187 = vmatprep.subr.mxu0 0.0
    %3188 = vmatpush1.msra.mxu0 0.0
    %3189 = vmatprep.subr.mxu0 0.0
    %3190 = vmatpush1.msra.mxu0 0.0
    %3191 = vmatprep.subr.mxu0 0.0
    %3192 = vmatpush1.msra.mxu0 0.0
    %3193 = vmatprep.subr.mxu0 0.0
    %3194 = vmatpush1.msra.mxu0 0.0
    %3195 = vmatprep.subr.mxu0 0.0
    %3196 = vmatpush1.msra.mxu0 0.0
    %3197 = vmatprep.subr.mxu0 0.0
    %3198 = vmatpush1.msra.mxu0 0.0
    %3199 = vmatprep.subr.mxu0 0.0
    %3200 = vmatpush1.msra.mxu0 0.0
    %3201 = vmatprep.subr.mxu0 0.0
    %3202 = vmatpush1.msra.mxu0 0.0
    %3203 = vmatprep.subr.mxu0 0.0
    %3204 = vmatpush1.msra.mxu0 0.0
    %3205 = vmatprep.subr.mxu0 0.0
    %3206 = vmatpush1.msra.mxu0 0.0
    %3207 = vmatprep.subr.mxu0 0.0
    %3208 = vmatpush1.msra.mxu0 0.0
    %3209 = vmatprep.subr.mxu0 0.0
    %3210 = vmatpush1.msra.mxu0 0.0
    %3211 = vmatprep.subr.mxu0 0.0
    %3212 = vmatpush1.msra.mxu0 0.0
    %3213 = vmatprep.subr.mxu0 0.0
    %3214 = vmatpush1.msra.mxu0 0.0
    %3215 = vmatprep.subr.mxu0 0.0
    %3216 = vmatpush1.msra.mxu0 0.0
    %3217 = vmatprep.subr.mxu0 0.0
    %3218 = vmatpush1.msra.mxu0 0.0
    %3219 = vmatprep.subr.mxu0 0.0
    %3220 = vmatpush1.msra.mxu0 0.0
    %3221 = vmatprep.subr.mxu0 0.0
    %3222 = vmatpush1.msra.mxu0 0.0
    %3223 = vmatprep.subr.mxu0 0.0
    %3224 = vmatpush1.msra.mxu0 0.0
    %3225 = vmatprep.subr.mxu0 0.0
    %3226 = vmatpush1.msra.mxu0 0.0
    %3227 = vmatprep.subr.mxu0 0.0
    %3228 = vmatpush1.msra.mxu0 0.0
    %3229 = vmatprep.mubr.f32.mxu0 0.0
    %3230 = vmatmul.mubr.f32.gmra.mrb[0].mxu0 %v3163
    %v3231 = vpop.f32.mrb[0].mxu0
    %v3232 = vadd.f32 0.0, %v3231
    %v3233 = vpop.f32.mrb[0].mxu0
    %3234 = vdwg.mxu0
    %v3235 = vmul.f32 %v3232, 0.35355338
    %v3236 = vadd.f32 %v3235, %v2448
    %v3237 = vsel %vm2524, %v3236, -inf
    %3238 = vmax.xlane.f32.xlu0 %v3237
    %v3239 = vpop.xlane.xlu0 %3238
    %v3240 = vsub.f32 %v3236, %v3239
    %v3241 = vmul.f32 %v3240, 1.442695
    %v3242 = vpow.pop %v3241
    %v3243 = vsel %vm2524, %v3242, 0.0
    %3244 = vadd.xlane.f32.xlu0 %v3243
    %v3245 = vpop.xlane.xlu0 %3244
    %v3246 = vrcp.pop %v3245
    %v3247 = vmul.f32 %v3242, %v3246
    %v3249 = vsel %vm2524, %v3247, 0
    %v3252 = vsel %vm2524, %v2445, 0
    %3254 = vmatprep.subr.mxu0 0.0
    %3255 = vmatpush1.xpose.msra.mxu0 %v3252
    %3256 = vmatprep.subr.mxu0 0.0
    %3257 = vmatpush1.xpose.msra.mxu0 0.0
    %3258 = vmatprep.subr.mxu0 0.0
    %3259 = vmatpush1.xpose.msra.mxu0 0.0
    %3260 = vmatprep.subr.mxu0 0.0
    %3261 = vmatpush1.xpose.msra.mxu0 0.0
    %3262 = vmatprep.subr.mxu0 0.0
    %3263 = vmatpush1.xpose.msra.mxu0 0.0
    %3264 = vmatprep.subr.mxu0 0.0
    %3265 = vmatpush1.xpose.msra.mxu0 0.0
    %3266 = vmatprep.subr.mxu0 0.0
    %3267 = vmatpush1.xpose.msra.mxu0 0.0
    %3268 = vmatprep.subr.mxu0 0.0
    %3269 = vmatpush1.xpose.msra.mxu0 0.0
    %3270 = vmatprep.subr.mxu0 0.0
    %3271 = vmatpush1.xpose.msra.mxu0 0.0
    %3272 = vmatprep.subr.mxu0 0.0
    %3273 = vmatpush1.xpose.msra.mxu0 0.0
    %3274 = vmatprep.subr.mxu0 0.0
    %3275 = vmatpush1.xpose.msra.mxu0 0.0
    %3276 = vmatprep.subr.mxu0 0.0
    %3277 = vmatpush1.xpose.msra.mxu0 0.0
    %3278 = vmatprep.subr.mxu0 0.0
    %3279 = vmatpush1.xpose.msra.mxu0 0.0
    %3280 = vmatprep.subr.mxu0 0.0
    %3281 = vmatpush1.xpose.msra.mxu0 0.0
    %3282 = vmatprep.subr.mxu0 0.0
    %3283 = vmatpush1.xpose.msra.mxu0 0.0
    %3284 = vmatprep.subr.mxu0 0.0
    %3285 = vmatpush1.xpose.msra.mxu0 0.0
    %3286 = vmatprep.subr.mxu0 0.0
    %3287 = vmatpush1.xpose.msra.mxu0 0.0
    %3288 = vmatprep.subr.mxu0 0.0
    %3289 = vmatpush1.xpose.msra.mxu0 0.0
    %3290 = vmatprep.subr.mxu0 0.0
    %3291 = vmatpush1.xpose.msra.mxu0 0.0
    %3292 = vmatprep.subr.mxu0 0.0
    %3293 = vmatpush1.xpose.msra.mxu0 0.0
    %3294 = vmatprep.subr.mxu0 0.0
    %3295 = vmatpush1.xpose.msra.mxu0 0.0
    %3296 = vmatprep.subr.mxu0 0.0
    %3297 = vmatpush1.xpose.msra.mxu0 0.0
    %3298 = vmatprep.subr.mxu0 0.0
    %3299 = vmatpush1.xpose.msra.mxu0 0.0
    %3300 = vmatprep.subr.mxu0 0.0
    %3301 = vmatpush1.xpose.msra.mxu0 0.0
    %3302 = vmatprep.subr.mxu0 0.0
    %3303 = vmatpush1.xpose.msra.mxu0 0.0
    %3304 = vmatprep.subr.mxu0 0.0
    %3305 = vmatpush1.xpose.msra.mxu0 0.0
    %3306 = vmatprep.subr.mxu0 0.0
    %3307 = vmatpush1.xpose.msra.mxu0 0.0
    %3308 = vmatprep.subr.mxu0 0.0
    %3309 = vmatpush1.xpose.msra.mxu0 0.0
    %3310 = vmatprep.subr.mxu0 0.0
    %3311 = vmatpush1.xpose.msra.mxu0 0.0
    %3312 = vmatprep.subr.mxu0 0.0
    %3313 = vmatpush1.xpose.msra.mxu0 0.0
    %3314 = vmatprep.subr.mxu0 0.0
    %3315 = vmatpush1.xpose.msra.mxu0 0.0
    %3316 = vmatprep.subr.mxu0 0.0
    %3317 = vmatpush1.xpose.msra.mxu0 0.0
    %3318 = vmatprep.mubr.f32.mxu0 0.0
    %3319 = vmatmul.mubr.f32.gmra.mrb[0].mxu0 %v3249
    %v3320 = vpop.f32.mrb[0].mxu0
    %v3321 = vadd.f32 0.0, %v3320
    %v3322 = vpop.f32.mrb[0].mxu0
    %3323 = vdwg.mxu0
    %v3324 = vld [vmem:[%s4 + $0xf8] sm:$0xff]
    %v3326 = vsel %vm254, %v3321, 0
    %3328 = vmatprep.subr.mxu0 0.0
    %3329 = vmatpush1.msra.mxu0 %v3324
    %3330 = vmatprep.subr.mxu0 0.0
    %3331 = vmatpush1.msra.mxu0 0.0
    %3332 = vmatprep.subr.mxu0 0.0
    %3333 = vmatpush1.msra.mxu0 0.0
    %3334 = vmatprep.subr.mxu0 0.0
    %3335 = vmatpush1.msra.mxu0 0.0
    %3336 = vmatprep.subr.mxu0 0.0
    %3337 = vmatpush1.msra.mxu0 0.0
    %3338 = vmatprep.subr.mxu0 0.0
    %3339 = vmatpush1.msra.mxu0 0.0
    %3340 = vmatprep.subr.mxu0 0.0
    %3341 = vmatpush1.msra.mxu0 0.0
    %3342 = vmatprep.subr.mxu0 0.0
    %3343 = vmatpush1.msra.mxu0 0.0
    %3344 = vmatprep.subr.mxu0 0.0
    %3345 = vmatpush1.msra.mxu0 0.0
    %3346 = vmatprep.subr.mxu0 0.0
    %3347 = vmatpush1.msra.mxu0 0.0
    %3348 = vmatprep.subr.mxu0 0.0
    %3349 = vmatpush1.msra.mxu0 0.0
    %3350 = vmatprep.subr.mxu0 0.0
    %3351 = vmatpush1.msra.mxu0 0.0
    %3352 = vmatprep.subr.mxu0 0.0
    %3353 = vmatpush1.msra.mxu0 0.0
    %3354 = vmatprep.subr.mxu0 0.0
    %3355 = vmatpush1.msra.mxu0 0.0
    %3356 = vmatprep.subr.mxu0 0.0
    %3357 = vmatpush1.msra.mxu0 0.0
    %3358 = vmatprep.subr.mxu0 0.0
    %3359 = vmatpush1.msra.mxu0 0.0
    %3360 = vmatprep.subr.mxu0 0.0
    %3361 = vmatpush1.msra.mxu0 0.0
    %3362 = vmatprep.subr.mxu0 0.0
    %3363 = vmatpush1.msra.mxu0 0.0
    %3364 = vmatprep.subr.mxu0 0.0
    %3365 = vmatpush1.msra.mxu0 0.0
    %3366 = vmatprep.subr.mxu0 0.0
    %3367 = vmatpush1.msra.mxu0 0.0
    %3368 = vmatprep.subr.mxu0 0.0
    %3369 = vmatpush1.msra.mxu0 0.0
    %3370 = vmatprep.subr.mxu0 0.0
    %3371 = vmatpush1.msra.mxu0 0.0
    %3372 = vmatprep.subr.mxu0 0.0
    %3373 = vmatpush1.msra.mxu0 0.0
    %3374 = vmatprep.subr.mxu0 0.0
    %3375 = vmatpush1.msra.mxu0 0.0
    %3376 = vmatprep.subr.mxu0 0.0
    %3377 = vmatpush1.msra.mxu0 0.0
    %3378 = vmatprep.subr.mxu0 0.0
    %3379 = vmatpush1.msra.mxu0 0.0
    %3380 = vmatprep.subr.mxu0 0.0
    %3381 = vmatpush1.msra.mxu0 0.0
    %3382 = vmatprep.subr.mxu0 0.0
    %3383 = vmatpush1.msra.mxu0 0.0
    %3384 = vmatprep.subr.mxu0 0.0
    %3385 = vmatpush1.msra.mxu0 0.0
    %3386 = vmatprep.subr.mxu0 0.0
    %3387 = vmatpush1.msra.mxu0 0.0
    %3388 = vmatprep.subr.mxu0 0.0
    %3389 = vmatpush1.msra.mxu0 0.0
    %3390 = vmatprep.subr.mxu0 0.0
    %3391 = vmatpush1.msra.mxu0 0.0
    %3392 = vmatprep.mubr.f32.mxu0 0.0
    %3393 = vmatmul.mubr.f32.gmra.mrb[0].mxu0 %v3326
    %v3394 = vpop.f32.mrb[0].mxu0
    %v3395 = vadd.f32 0.0, %v3394
    %v3396 = vpop.f32.mrb[0].mxu0
    %3397 = vdwg.mxu0
    %v3398 = vadd.f32 %v3160, %v3395
    %s3399 = scalar_lea.vmem %s3, 8
    %v3400 = vld [vmem:[%s3399] sm:$0xff]
    %3402 = vrot.lane.b32.xlu0 %v2410, 112
    %v3403 = vpop.permute.xlu0 %3402
    %v3406 = vsel %vm254, %v2296, 0
    %3408 = vmatprep.subr.mxu0 0.0
    %3409 = vmatpush1.msra.mxu0 %v3403
    %3410 = vmatprep.subr.mxu0 0.0
    %3411 = vmatpush1.msra.mxu0 0.0
    %3412 = vmatprep.subr.mxu0 0.0
    %3413 = vmatpush1.msra.mxu0 0.0
    %3414 = vmatprep.subr.mxu0 0.0
    %3415 = vmatpush1.msra.mxu0 0.0
    %3416 = vmatprep.subr.mxu0 0.0
    %3417 = vmatpush1.msra.mxu0 0.0
    %3418 = vmatprep.subr.mxu0 0.0
    %3419 = vmatpush1.msra.mxu0 0.0
    %3420 = vmatprep.subr.mxu0 0.0
    %3421 = vmatpush1.msra.mxu0 0.0
    %3422 = vmatprep.subr.mxu0 0.0
    %3423 = vmatpush1.msra.mxu0 0.0
    %3424 = vmatprep.subr.mxu0 0.0
    %3425 = vmatpush1.msra.mxu0 0.0
    %3426 = vmatprep.subr.mxu0 0.0
    %3427 = vmatpush1.msra.mxu0 0.0
    %3428 = vmatprep.subr.mxu0 0.0
    %3429 = vmatpush1.msra.mxu0 0.0
    %3430 = vmatprep.subr.mxu0 0.0
    %3431 = vmatpush1.msra.mxu0 0.0
    %3432 = vmatprep.subr.mxu0 0.0
    %3433 = vmatpush1.msra.mxu0 0.0
    %3434 = vmatprep.subr.mxu0 0.0
    %3435 = vmatpush1.msra.mxu0 0.0
    %3436 = vmatprep.subr.mxu0 0.0
    %3437 = vmatpush1.msra.mxu0 0.0
    %3438 = vmatprep.subr.mxu0 0.0
    %3439 = vmatpush1.msra.mxu0 0.0
    %3440 = vmatprep.subr.mxu0 0.0
    %3441 = vmatpush1.msra.mxu0 0.0
    %3442 = vmatprep.subr.mxu0 0.0
    %3443 = vmatpush1.msra.mxu0 0.0
    %3444 = vmatprep.subr.mxu0 0.0
    %3445 = vmatpush1.msra.mxu0 0.0
    %3446 = vmatprep.subr.mxu0 0.0
    %3447 = vmatpush1.msra.mxu0 0.0
    %3448 = vmatprep.subr.mxu0 0.0
    %3449 = vmatpush1.msra.mxu0 0.0
    %3450 = vmatprep.subr.mxu0 0.0
    %3451 = vmatpush1.msra.mxu0 0.0
    %3452 = vmatprep.subr.mxu0 0.0
    %3453 = vmatpush1.msra.mxu0 0.0
    %3454 = vmatprep.subr.mxu0 0.0
    %3455 = vmatpush1.msra.mxu0 0.0
    %3456 = vmatprep.subr.mxu0 0.0
    %3457 = vmatpush1.msra.mxu0 0.0
    %3458 = vmatprep.subr.mxu0 0.0
    %3459 = vmatpush1.msra.mxu0 0.0
    %3460 = vmatprep.subr.mxu0 0.0
    %3461 = vmatpush1.msra.mxu0 0.0
    %3462 = vmatprep.subr.mxu0 0.0
    %3463 = vmatpush1.msra.mxu0 0.0
    %3464 = vmatprep.subr.mxu0 0.0
    %3465 = vmatpush1.msra.mxu0 0.0
    %3466 = vmatprep.subr.mxu0 0.0
    %3467 = vmatpush1.msra.mxu0 0.0
    %3468 = vmatprep.subr.mxu0 0.0
    %3469 = vmatpush1.msra.mxu0 0.0
    %3470 = vmatprep.subr.mxu0 0.0
    %3471 = vmatpush1.msra.mxu0 0.0
    %3472 = vmatprep.mubr.f32.mxu0 0.0
    %3473 = vmatmul.mubr.f32.gmra.mrb[0].mxu0 %v3406
    %v3474 = vpop.f32.mrb[0].mxu0
    %v3475 = vadd.f32 0.0, %v3474
    %v3476 = vpop.f32.mrb[0].mxu0
    %3477 = vdwg.mxu0
    %v3478 = vmul.f32 %v3475, 0.35355338
    %v3479 = vadd.f32 %v3478, %v3400
    %v3480 = vsel %vm2524, %v3479, -inf
    %3481 = vmax.xlane.f32.xlu0 %v3480
    %v3482 = vpop.xlane.xlu0 %3481
    %v3483 = vsub.f32 %v3479, %v3482
    %v3484 = vmul.f32 %v3483, 1.442695
    %v3485 = vpow.pop %v3484
    %v3486 = vsel %vm2524, %v3485, 0.0
    %3487 = vadd.xlane.f32.xlu0 %v3486
    %v3488 = vpop.xlane.xlu0 %3487
    %v3489 = vrcp.pop %v3488
    %v3490 = vmul.f32 %v3485, %v3489
    %3491 = vrot.lane.b32.xlu0 %v2430, 112
    %v3492 = vpop.permute.xlu0 %3491
    %v3494 = vsel %vm2524, %v3490, 0
    %v3496 = vsel %vm2524, %v3492, 0
    %3498 = vmatprep.subr.mxu0 0.0
    %3499 = vmatpush1.xpose.msra.mxu0 %v3496
    %3500 = vmatprep.subr.mxu0 0.0
    %3501 = vmatpush1.xpose.msra.mxu0 0.0
    %3502 = vmatprep.subr.mxu0 0.0
    %3503 = vmatpush1.xpose.msra.mxu0 0.0
    %3504 = vmatprep.subr.mxu0 0.0
    %3505 = vmatpush1.xpose.msra.mxu0 0.0
    %3506 = vmatprep.subr.mxu0 0.0
    %3507 = vmatpush1.xpose.msra.mxu0 0.0
    %3508 = vmatprep.subr.mxu0 0.0
    %3509 = vmatpush1.xpose.msra.mxu0 0.0
    %3510 = vmatprep.subr.mxu0 0.0
    %3511 = vmatpush1.xpose.msra.mxu0 0.0
    %3512 = vmatprep.subr.mxu0 0.0
    %3513 = vmatpush1.xpose.msra.mxu0 0.0
    %3514 = vmatprep.subr.mxu0 0.0
    %3515 = vmatpush1.xpose.msra.mxu0 0.0
    %3516 = vmatprep.subr.mxu0 0.0
    %3517 = vmatpush1.xpose.msra.mxu0 0.0
    %3518 = vmatprep.subr.mxu0 0.0
    %3519 = vmatpush1.xpose.msra.mxu0 0.0
    %3520 = vmatprep.subr.mxu0 0.0
    %3521 = vmatpush1.xpose.msra.mxu0 0.0
    %3522 = vmatprep.subr.mxu0 0.0
    %3523 = vmatpush1.xpose.msra.mxu0 0.0
    %3524 = vmatprep.subr.mxu0 0.0
    %3525 = vmatpush1.xpose.msra.mxu0 0.0
    %3526 = vmatprep.subr.mxu0 0.0
    %3527 = vmatpush1.xpose.msra.mxu0 0.0
    %3528 = vmatprep.subr.mxu0 0.0
    %3529 = vmatpush1.xpose.msra.mxu0 0.0
    %3530 = vmatprep.subr.mxu0 0.0
    %3531 = vmatpush1.xpose.msra.mxu0 0.0
    %3532 = vmatprep.subr.mxu0 0.0
    %3533 = vmatpush1.xpose.msra.mxu0 0.0
    %3534 = vmatprep.subr.mxu0 0.0
    %3535 = vmatpush1.xpose.msra.mxu0 0.0
    %3536 = vmatprep.subr.mxu0 0.0
    %3537 = vmatpush1.xpose.msra.mxu0 0.0
    %3538 = vmatprep.subr.mxu0 0.0
    %3539 = vmatpush1.xpose.msra.mxu0 0.0
    %3540 = vmatprep.subr.mxu0 0.0
    %3541 = vmatpush1.xpose.msra.mxu0 0.0
    %3542 = vmatprep.subr.mxu0 0.0
    %3543 = vmatpush1.xpose.msra.mxu0 0.0
    %3544 = vmatprep.subr.mxu0 0.0
    %3545 = vmatpush1.xpose.msra.mxu0 0.0
    %3546 = vmatprep.subr.mxu0 0.0
    %3547 = vmatpush1.xpose.msra.mxu0 0.0
    %3548 = vmatprep.subr.mxu0 0.0
    %3549 = vmatpush1.xpose.msra.mxu0 0.0
    %3550 = vmatprep.subr.mxu0 0.0
    %3551 = vmatpush1.xpose.msra.mxu0 0.0
    %3552 = vmatprep.subr.mxu0 0.0
    %3553 = vmatpush1.xpose.msra.mxu0 0.0
    %3554 = vmatprep.subr.mxu0 0.0
    %3555 = vmatpush1.xpose.msra.mxu0 0.0
    %3556 = vmatprep.subr.mxu0 0.0
    %3557 = vmatpush1.xpose.msra.mxu0 0.0
    %3558 = vmatprep.subr.mxu0 0.0
    %3559 = vmatpush1.xpose.msra.mxu0 0.0
    %3560 = vmatprep.subr.mxu0 0.0
    %3561 = vmatpush1.xpose.msra.mxu0 0.0
    %3562 = vmatprep.mubr.f32.mxu0 0.0
    %3563 = vmatmul.mubr.f32.gmra.mrb[0].mxu0 %v3494
    %v3564 = vpop.f32.mrb[0].mxu0
    %v3565 = vadd.f32 0.0, %v3564
    %v3566 = vpop.f32.mrb[0].mxu0
    %3567 = vdwg.mxu0
    %3568 = vrot.lane.b32.xlu0 %v2296, 120
    %v3569 = vpop.permute.xlu0 %3568
    %3571 = vrot.lane.b32.xlu0 %v2415, 112
    %v3572 = vpop.permute.xlu0 %3571
    %v3574 = vsel %vm254, %v3569, 0
    %3576 = vmatprep.subr.mxu0 0.0
    %3577 = vmatpush1.msra.mxu0 %v3572
    %3578 = vmatprep.subr.mxu0 0.0
    %3579 = vmatpush1.msra.mxu0 0.0
    %3580 = vmatprep.subr.mxu0 0.0
    %3581 = vmatpush1.msra.mxu0 0.0
    %3582 = vmatprep.subr.mxu0 0.0
    %3583 = vmatpush1.msra.mxu0 0.0
    %3584 = vmatprep.subr.mxu0 0.0
    %3585 = vmatpush1.msra.mxu0 0.0
    %3586 = vmatprep.subr.mxu0 0.0
    %3587 = vmatpush1.msra.mxu0 0.0
    %3588 = vmatprep.subr.mxu0 0.0
    %3589 = vmatpush1.msra.mxu0 0.0
    %3590 = vmatprep.subr.mxu0 0.0
    %3591 = vmatpush1.msra.mxu0 0.0
    %3592 = vmatprep.subr.mxu0 0.0
    %3593 = vmatpush1.msra.mxu0 0.0
    %3594 = vmatprep.subr.mxu0 0.0
    %3595 = vmatpush1.msra.mxu0 0.0
    %3596 = vmatprep.subr.mxu0 0.0
    %3597 = vmatpush1.msra.mxu0 0.0
    %3598 = vmatprep.subr.mxu0 0.0
    %3599 = vmatpush1.msra.mxu0 0.0
    %3600 = vmatprep.subr.mxu0 0.0
    %3601 = vmatpush1.msra.mxu0 0.0
    %3602 = vmatprep.subr.mxu0 0.0
    %3603 = vmatpush1.msra.mxu0 0.0
    %3604 = vmatprep.subr.mxu0 0.0
    %3605 = vmatpush1.msra.mxu0 0.0
    %3606 = vmatprep.subr.mxu0 0.0
    %3607 = vmatpush1.msra.mxu0 0.0
    %3608 = vmatprep.subr.mxu0 0.0
    %3609 = vmatpush1.msra.mxu0 0.0
    %3610 = vmatprep.subr.mxu0 0.0
    %3611 = vmatpush1.msra.mxu0 0.0
    %3612 = vmatprep.subr.mxu0 0.0
    %3613 = vmatpush1.msra.mxu0 0.0
    %3614 = vmatprep.subr.mxu0 0.0
    %3615 = vmatpush1.msra.mxu0 0.0
    %3616 = vmatprep.subr.mxu0 0.0
    %3617 = vmatpush1.msra.mxu0 0.0
    %3618 = vmatprep.subr.mxu0 0.0
    %3619 = vmatpush1.msra.mxu0 0.0
    %3620 = vmatprep.subr.mxu0 0.0
    %3621 = vmatpush1.msra.mxu0 0.0
    %3622 = vmatprep.subr.mxu0 0.0
    %3623 = vmatpush1.msra.mxu0 0.0
    %3624 = vmatprep.subr.mxu0 0.0
    %3625 = vmatpush1.msra.mxu0 0.0
    %3626 = vmatprep.subr.mxu0 0.0
    %3627 = vmatpush1.msra.mxu0 0.0
    %3628 = vmatprep.subr.mxu0 0.0
    %3629 = vmatpush1.msra.mxu0 0.0
    %3630 = vmatprep.subr.mxu0 0.0
    %3631 = vmatpush1.msra.mxu0 0.0
    %3632 = vmatprep.subr.mxu0 0.0
    %3633 = vmatpush1.msra.mxu0 0.0
    %3634 = vmatprep.subr.mxu0 0.0
    %3635 = vmatpush1.msra.mxu0 0.0
    %3636 = vmatprep.subr.mxu0 0.0
    %3637 = vmatpush1.msra.mxu0 0.0
    %3638 = vmatprep.subr.mxu0 0.0
    %3639 = vmatpush1.msra.mxu0 0.0
    %3640 = vmatprep.mubr.f32.mxu0 0.0
    %3641 = vmatmul.mubr.f32.gmra.mrb[0].mxu0 %v3574
    %v3642 = vpop.f32.mrb[0].mxu0
    %v3643 = vadd.f32 0.0, %v3642
    %v3644 = vpop.f32.mrb[0].mxu0
    %3645 = vdwg.mxu0
    %v3646 = vmul.f32 %v3643, 0.35355338
    %v3647 = vadd.f32 %v3646, %v3400
    %v3648 = vsel %vm2524, %v3647, -inf
    %3649 = vmax.xlane.f32.xlu0 %v3648
    %v3650 = vpop.xlane.xlu0 %3649
    %v3651 = vsub.f32 %v3647, %v3650
    %v3652 = vmul.f32 %v3651, 1.442695
    %v3653 = vpow.pop %v3652
    %v3654 = vsel %vm2524, %v3653, 0.0
    %3655 = vadd.xlane.f32.xlu0 %v3654
    %v3656 = vpop.xlane.xlu0 %3655
    %v3657 = vrcp.pop %v3656
    %v3658 = vmul.f32 %v3653, %v3657
    %3659 = vrot.lane.b32.xlu0 %v2435, 112
    %v3660 = vpop.permute.xlu0 %3659
    %v3662 = vsel %vm2524, %v3658, 0
    %v3664 = vsel %vm2524, %v3660, 0
    %3666 = vmatprep.subr.mxu0 0.0
    %3667 = vmatpush1.xpose.msra.mxu0 %v3664
    %3668 = vmatprep.subr.mxu0 0.0
    %3669 = vmatpush1.xpose.msra.mxu0 0.0
    %3670 = vmatprep.subr.mxu0 0.0
    %3671 = vmatpush1.xpose.msra.mxu0 0.0
    %3672 = vmatprep.subr.mxu0 0.0
    %3673 = vmatpush1.xpose.msra.mxu0 0.0
    %3674 = vmatprep.subr.mxu0 0.0
    %3675 = vmatpush1.xpose.msra.mxu0 0.0
    %3676 = vmatprep.subr.mxu0 0.0
    %3677 = vmatpush1.xpose.msra.mxu0 0.0
    %3678 = vmatprep.subr.mxu0 0.0
    %3679 = vmatpush1.xpose.msra.mxu0 0.0
    %3680 = vmatprep.subr.mxu0 0.0
    %3681 = vmatpush1.xpose.msra.mxu0 0.0
    %3682 = vmatprep.subr.mxu0 0.0
    %3683 = vmatpush1.xpose.msra.mxu0 0.0
    %3684 = vmatprep.subr.mxu0 0.0
    %3685 = vmatpush1.xpose.msra.mxu0 0.0
    %3686 = vmatprep.subr.mxu0 0.0
    %3687 = vmatpush1.xpose.msra.mxu0 0.0
    %3688 = vmatprep.subr.mxu0 0.0
    %3689 = vmatpush1.xpose.msra.mxu0 0.0
    %3690 = vmatprep.subr.mxu0 0.0
    %3691 = vmatpush1.xpose.msra.mxu0 0.0
    %3692 = vmatprep.subr.mxu0 0.0
    %3693 = vmatpush1.xpose.msra.mxu0 0.0
    %3694 = vmatprep.subr.mxu0 0.0
    %3695 = vmatpush1.xpose.msra.mxu0 0.0
    %3696 = vmatprep.subr.mxu0 0.0
    %3697 = vmatpush1.xpose.msra.mxu0 0.0
    %3698 = vmatprep.subr.mxu0 0.0
    %3699 = vmatpush1.xpose.msra.mxu0 0.0
    %3700 = vmatprep.subr.mxu0 0.0
    %3701 = vmatpush1.xpose.msra.mxu0 0.0
    %3702 = vmatprep.subr.mxu0 0.0
    %3703 = vmatpush1.xpose.msra.mxu0 0.0
    %3704 = vmatprep.subr.mxu0 0.0
    %3705 = vmatpush1.xpose.msra.mxu0 0.0
    %3706 = vmatprep.subr.mxu0 0.0
    %3707 = vmatpush1.xpose.msra.mxu0 0.0
    %3708 = vmatprep.subr.mxu0 0.0
    %3709 = vmatpush1.xpose.msra.mxu0 0.0
    %3710 = vmatprep.subr.mxu0 0.0
    %3711 = vmatpush1.xpose.msra.mxu0 0.0
    %3712 = vmatprep.subr.mxu0 0.0
    %3713 = vmatpush1.xpose.msra.mxu0 0.0
    %3714 = vmatprep.subr.mxu0 0.0
    %3715 = vmatpush1.xpose.msra.mxu0 0.0
    %3716 = vmatprep.subr.mxu0 0.0
    %3717 = vmatpush1.xpose.msra.mxu0 0.0
    %3718 = vmatprep.subr.mxu0 0.0
    %3719 = vmatpush1.xpose.msra.mxu0 0.0
    %3720 = vmatprep.subr.mxu0 0.0
    %3721 = vmatpush1.xpose.msra.mxu0 0.0
    %3722 = vmatprep.subr.mxu0 0.0
    %3723 = vmatpush1.xpose.msra.mxu0 0.0
    %3724 = vmatprep.subr.mxu0 0.0
    %3725 = vmatpush1.xpose.msra.mxu0 0.0
    %3726 = vmatprep.subr.mxu0 0.0
    %3727 = vmatpush1.xpose.msra.mxu0 0.0
    %3728 = vmatprep.subr.mxu0 0.0
    %3729 = vmatpush1.xpose.msra.mxu0 0.0
    %3730 = vmatprep.mubr.f32.mxu0 0.0
    %3731 = vmatmul.mubr.f32.gmra.mrb[0].mxu0 %v3662
    %v3732 = vpop.f32.mrb[0].mxu0
    %v3733 = vadd.f32 0.0, %v3732
    %v3734 = vpop.f32.mrb[0].mxu0
    %3735 = vdwg.mxu0
    %v3737 = vsel %vm254, %v3733, 0
    %3739 = vmatprep.subr.mxu0 0.0
    %3740 = vmatpush1.msra.mxu0 %v2776
    %3741 = vmatprep.subr.mxu0 0.0
    %3742 = vmatpush1.msra.mxu0 0.0
    %3743 = vmatprep.subr.mxu0 0.0
    %3744 = vmatpush1.msra.mxu0 0.0
    %3745 = vmatprep.subr.mxu0 0.0
    %3746 = vmatpush1.msra.mxu0 0.0
    %3747 = vmatprep.subr.mxu0 0.0
    %3748 = vmatpush1.msra.mxu0 0.0
    %3749 = vmatprep.subr.mxu0 0.0
    %3750 = vmatpush1.msra.mxu0 0.0
    %3751 = vmatprep.subr.mxu0 0.0
    %3752 = vmatpush1.msra.mxu0 0.0
    %3753 = vmatprep.subr.mxu0 0.0
    %3754 = vmatpush1.msra.mxu0 0.0
    %3755 = vmatprep.subr.mxu0 0.0
    %3756 = vmatpush1.msra.mxu0 0.0
    %3757 = vmatprep.subr.mxu0 0.0
    %3758 = vmatpush1.msra.mxu0 0.0
    %3759 = vmatprep.subr.mxu0 0.0
    %3760 = vmatpush1.msra.mxu0 0.0
    %3761 = vmatprep.subr.mxu0 0.0
    %3762 = vmatpush1.msra.mxu0 0.0
    %3763 = vmatprep.subr.mxu0 0.0
    %3764 = vmatpush1.msra.mxu0 0.0
    %3765 = vmatprep.subr.mxu0 0.0
    %3766 = vmatpush1.msra.mxu0 0.0
    %3767 = vmatprep.subr.mxu0 0.0
    %3768 = vmatpush1.msra.mxu0 0.0
    %3769 = vmatprep.subr.mxu0 0.0
    %3770 = vmatpush1.msra.mxu0 0.0
    %3771 = vmatprep.subr.mxu0 0.0
    %3772 = vmatpush1.msra.mxu0 0.0
    %3773 = vmatprep.subr.mxu0 0.0
    %3774 = vmatpush1.msra.mxu0 0.0
    %3775 = vmatprep.subr.mxu0 0.0
    %3776 = vmatpush1.msra.mxu0 0.0
    %3777 = vmatprep.subr.mxu0 0.0
    %3778 = vmatpush1.msra.mxu0 0.0
    %3779 = vmatprep.subr.mxu0 0.0
    %3780 = vmatpush1.msra.mxu0 0.0
    %3781 = vmatprep.subr.mxu0 0.0
    %3782 = vmatpush1.msra.mxu0 0.0
    %3783 = vmatprep.subr.mxu0 0.0
    %3784 = vmatpush1.msra.mxu0 0.0
    %3785 = vmatprep.subr.mxu0 0.0
    %3786 = vmatpush1.msra.mxu0 0.0
    %3787 = vmatprep.subr.mxu0 0.0
    %3788 = vmatpush1.msra.mxu0 0.0
    %3789 = vmatprep.subr.mxu0 0.0
    %3790 = vmatpush1.msra.mxu0 0.0
    %3791 = vmatprep.subr.mxu0 0.0
    %3792 = vmatpush1.msra.mxu0 0.0
    %3793 = vmatprep.subr.mxu0 0.0
    %3794 = vmatpush1.msra.mxu0 0.0
    %3795 = vmatprep.subr.mxu0 0.0
    %3796 = vmatpush1.msra.mxu0 0.0
    %3797 = vmatprep.subr.mxu0 0.0
    %3798 = vmatpush1.msra.mxu0 0.0
    %3799 = vmatprep.subr.mxu0 0.0
    %3800 = vmatpush1.msra.mxu0 0.0
    %3801 = vmatprep.subr.mxu0 0.0
    %3802 = vmatpush1.msra.mxu0 0.0
    %3803 = vmatprep.mubr.f32.mxu0 0.0
    %3804 = vmatmul.mubr.f32.gmra.mrb[0].mxu0 %v3737
    %v3805 = vpop.f32.mrb[0].mxu0
    %v3806 = vadd.f32 0.0, %v3805
    %v3807 = vpop.f32.mrb[0].mxu0
    %3808 = vdwg.mxu0
    %v3810 = vsel %vm254, %v3565, 0
    %3812 = vmatprep.subr.mxu0 0.0
    %3813 = vmatpush1.msra.mxu0 %v2612
    %3814 = vmatprep.subr.mxu0 0.0
    %3815 = vmatpush1.msra.mxu0 0.0
    %3816 = vmatprep.subr.mxu0 0.0
    %3817 = vmatpush1.msra.mxu0 0.0
    %3818 = vmatprep.subr.mxu0 0.0
    %3819 = vmatpush1.msra.mxu0 0.0
    %3820 = vmatprep.subr.mxu0 0.0
    %3821 = vmatpush1.msra.mxu0 0.0
    %3822 = vmatprep.subr.mxu0 0.0
    %3823 = vmatpush1.msra.mxu0 0.0
    %3824 = vmatprep.subr.mxu0 0.0
    %3825 = vmatpush1.msra.mxu0 0.0
    %3826 = vmatprep.subr.mxu0 0.0
    %3827 = vmatpush1.msra.mxu0 0.0
    %3828 = vmatprep.subr.mxu0 0.0
    %3829 = vmatpush1.msra.mxu0 0.0
    %3830 = vmatprep.subr.mxu0 0.0
    %3831 = vmatpush1.msra.mxu0 0.0
    %3832 = vmatprep.subr.mxu0 0.0
    %3833 = vmatpush1.msra.mxu0 0.0
    %3834 = vmatprep.subr.mxu0 0.0
    %3835 = vmatpush1.msra.mxu0 0.0
    %3836 = vmatprep.subr.mxu0 0.0
    %3837 = vmatpush1.msra.mxu0 0.0
    %3838 = vmatprep.subr.mxu0 0.0
    %3839 = vmatpush1.msra.mxu0 0.0
    %3840 = vmatprep.subr.mxu0 0.0
    %3841 = vmatpush1.msra.mxu0 0.0
    %3842 = vmatprep.subr.mxu0 0.0
    %3843 = vmatpush1.msra.mxu0 0.0
    %3844 = vmatprep.subr.mxu0 0.0
    %3845 = vmatpush1.msra.mxu0 0.0
    %3846 = vmatprep.subr.mxu0 0.0
    %3847 = vmatpush1.msra.mxu0 0.0
    %3848 = vmatprep.subr.mxu0 0.0
    %3849 = vmatpush1.msra.mxu0 0.0
    %3850 = vmatprep.subr.mxu0 0.0
    %3851 = vmatpush1.msra.mxu0 0.0
    %3852 = vmatprep.subr.mxu0 0.0
    %3853 = vmatpush1.msra.mxu0 0.0
    %3854 = vmatprep.subr.mxu0 0.0
    %3855 = vmatpush1.msra.mxu0 0.0
    %3856 = vmatprep.subr.mxu0 0.0
    %3857 = vmatpush1.msra.mxu0 0.0
    %3858 = vmatprep.subr.mxu0 0.0
    %3859 = vmatpush1.msra.mxu0 0.0
    %3860 = vmatprep.subr.mxu0 0.0
    %3861 = vmatpush1.msra.mxu0 0.0
    %3862 = vmatprep.subr.mxu0 0.0
    %3863 = vmatpush1.msra.mxu0 0.0
    %3864 = vmatprep.subr.mxu0 0.0
    %3865 = vmatpush1.msra.mxu0 0.0
    %3866 = vmatprep.subr.mxu0 0.0
    %3867 = vmatpush1.msra.mxu0 0.0
    %3868 = vmatprep.subr.mxu0 0.0
    %3869 = vmatpush1.msra.mxu0 0.0
    %3870 = vmatprep.subr.mxu0 0.0
    %3871 = vmatpush1.msra.mxu0 0.0
    %3872 = vmatprep.subr.mxu0 0.0
    %3873 = vmatpush1.msra.mxu0 0.0
    %3874 = vmatprep.subr.mxu0 0.0
    %3875 = vmatpush1.msra.mxu0 0.0
    %3876 = vmatprep.mubr.f32.mxu0 0.0
    %3877 = vmatmul.mubr.f32.gmra.mrb[0].mxu0 %v3810
    %v3878 = vpop.f32.mrb[0].mxu0
    %v3879 = vadd.f32 %v3806, %v3878
    %v3880 = vpop.f32.mrb[0].mxu0
    %3881 = vdwg.mxu0
    %3882 = vrot.lane.b32.xlu0 %v2296, 112
    %v3883 = vpop.permute.xlu0 %3882
    %3885 = vrot.lane.b32.xlu0 %v2420, 112
    %v3886 = vpop.permute.xlu0 %3885
    %v3888 = vsel %vm254, %v3883, 0
    %3890 = vmatprep.subr.mxu0 0.0
    %3891 = vmatpush1.msra.mxu0 %v3886
    %3892 = vmatprep.subr.mxu0 0.0
    %3893 = vmatpush1.msra.mxu0 0.0
    %3894 = vmatprep.subr.mxu0 0.0
    %3895 = vmatpush1.msra.mxu0 0.0
    %3896 = vmatprep.subr.mxu0 0.0
    %3897 = vmatpush1.msra.mxu0 0.0
    %3898 = vmatprep.subr.mxu0 0.0
    %3899 = vmatpush1.msra.mxu0 0.0
    %3900 = vmatprep.subr.mxu0 0.0
    %3901 = vmatpush1.msra.mxu0 0.0
    %3902 = vmatprep.subr.mxu0 0.0
    %3903 = vmatpush1.msra.mxu0 0.0
    %3904 = vmatprep.subr.mxu0 0.0
    %3905 = vmatpush1.msra.mxu0 0.0
    %3906 = vmatprep.subr.mxu0 0.0
    %3907 = vmatpush1.msra.mxu0 0.0
    %3908 = vmatprep.subr.mxu0 0.0
    %3909 = vmatpush1.msra.mxu0 0.0
    %3910 = vmatprep.subr.mxu0 0.0
    %3911 = vmatpush1.msra.mxu0 0.0
    %3912 = vmatprep.subr.mxu0 0.0
    %3913 = vmatpush1.msra.mxu0 0.0
    %3914 = vmatprep.subr.mxu0 0.0
    %3915 = vmatpush1.msra.mxu0 0.0
    %3916 = vmatprep.subr.mxu0 0.0
    %3917 = vmatpush1.msra.mxu0 0.0
    %3918 = vmatprep.subr.mxu0 0.0
    %3919 = vmatpush1.msra.mxu0 0.0
    %3920 = vmatprep.subr.mxu0 0.0
    %3921 = vmatpush1.msra.mxu0 0.0
    %3922 = vmatprep.subr.mxu0 0.0
    %3923 = vmatpush1.msra.mxu0 0.0
    %3924 = vmatprep.subr.mxu0 0.0
    %3925 = vmatpush1.msra.mxu0 0.0
    %3926 = vmatprep.subr.mxu0 0.0
    %3927 = vmatpush1.msra.mxu0 0.0
    %3928 = vmatprep.subr.mxu0 0.0
    %3929 = vmatpush1.msra.mxu0 0.0
    %3930 = vmatprep.subr.mxu0 0.0
    %3931 = vmatpush1.msra.mxu0 0.0
    %3932 = vmatprep.subr.mxu0 0.0
    %3933 = vmatpush1.msra.mxu0 0.0
    %3934 = vmatprep.subr.mxu0 0.0
    %3935 = vmatpush1.msra.mxu0 0.0
    %3936 = vmatprep.subr.mxu0 0.0
    %3937 = vmatpush1.msra.mxu0 0.0
    %3938 = vmatprep.subr.mxu0 0.0
    %3939 = vmatpush1.msra.mxu0 0.0
    %3940 = vmatprep.subr.mxu0 0.0
    %3941 = vmatpush1.msra.mxu0 0.0
    %3942 = vmatprep.subr.mxu0 0.0
    %3943 = vmatpush1.msra.mxu0 0.0
    %3944 = vmatprep.subr.mxu0 0.0
    %3945 = vmatpush1.msra.mxu0 0.0
    %3946 = vmatprep.subr.mxu0 0.0
    %3947 = vmatpush1.msra.mxu0 0.0
    %3948 = vmatprep.subr.mxu0 0.0
    %3949 = vmatpush1.msra.mxu0 0.0
    %3950 = vmatprep.subr.mxu0 0.0
    %3951 = vmatpush1.msra.mxu0 0.0
    %3952 = vmatprep.subr.mxu0 0.0
    %3953 = vmatpush1.msra.mxu0 0.0
    %3954 = vmatprep.mubr.f32.mxu0 0.0
    %3955 = vmatmul.mubr.f32.gmra.mrb[0].mxu0 %v3888
    %v3956 = vpop.f32.mrb[0].mxu0
    %v3957 = vadd.f32 0.0, %v3956
    %v3958 = vpop.f32.mrb[0].mxu0
    %3959 = vdwg.mxu0
    %v3960 = vmul.f32 %v3957, 0.35355338
    %v3961 = vadd.f32 %v3960, %v3400
    %v3962 = vsel %vm2524, %v3961, -inf
    %3963 = vmax.xlane.f32.xlu0 %v3962
    %v3964 = vpop.xlane.xlu0 %3963
    %v3965 = vsub.f32 %v3961, %v3964
    %v3966 = vmul.f32 %v3965, 1.442695
    %v3967 = vpow.pop %v3966
    %v3968 = vsel %vm2524, %v3967, 0.0
    %3969 = vadd.xlane.f32.xlu0 %v3968
    %v3970 = vpop.xlane.xlu0 %3969
    %v3971 = vrcp.pop %v3970
    %v3972 = vmul.f32 %v3967, %v3971
    %3973 = vrot.lane.b32.xlu0 %v2440, 112
    %v3974 = vpop.permute.xlu0 %3973
    %v3976 = vsel %vm2524, %v3972, 0
    %v3978 = vsel %vm2524, %v3974, 0
    %3980 = vmatprep.subr.mxu0 0.0
    %3981 = vmatpush1.xpose.msra.mxu0 %v3978
    %3982 = vmatprep.subr.mxu0 0.0
    %3983 = vmatpush1.xpose.msra.mxu0 0.0
    %3984 = vmatprep.subr.mxu0 0.0
    %3985 = vmatpush1.xpose.msra.mxu0 0.0
    %3986 = vmatprep.subr.mxu0 0.0
    %3987 = vmatpush1.xpose.msra.mxu0 0.0
    %3988 = vmatprep.subr.mxu0 0.0
    %3989 = vmatpush1.xpose.msra.mxu0 0.0
    %3990 = vmatprep.subr.mxu0 0.0
    %3991 = vmatpush1.xpose.msra.mxu0 0.0
    %3992 = vmatprep.subr.mxu0 0.0
    %3993 = vmatpush1.xpose.msra.mxu0 0.0
    %3994 = vmatprep.subr.mxu0 0.0
    %3995 = vmatpush1.xpose.msra.mxu0 0.0
    %3996 = vmatprep.subr.mxu0 0.0
    %3997 = vmatpush1.xpose.msra.mxu0 0.0
    %3998 = vmatprep.subr.mxu0 0.0
    %3999 = vmatpush1.xpose.msra.mxu0 0.0
    %4000 = vmatprep.subr.mxu0 0.0
    %4001 = vmatpush1.xpose.msra.mxu0 0.0
    %4002 = vmatprep.subr.mxu0 0.0
    %4003 = vmatpush1.xpose.msra.mxu0 0.0
    %4004 = vmatprep.subr.mxu0 0.0
    %4005 = vmatpush1.xpose.msra.mxu0 0.0
    %4006 = vmatprep.subr.mxu0 0.0
    %4007 = vmatpush1.xpose.msra.mxu0 0.0
    %4008 = vmatprep.subr.mxu0 0.0
    %4009 = vmatpush1.xpose.msra.mxu0 0.0
    %4010 = vmatprep.subr.mxu0 0.0
    %4011 = vmatpush1.xpose.msra.mxu0 0.0
    %4012 = vmatprep.subr.mxu0 0.0
    %4013 = vmatpush1.xpose.msra.mxu0 0.0
    %4014 = vmatprep.subr.mxu0 0.0
    %4015 = vmatpush1.xpose.msra.mxu0 0.0
    %4016 = vmatprep.subr.mxu0 0.0
    %4017 = vmatpush1.xpose.msra.mxu0 0.0
    %4018 = vmatprep.subr.mxu0 0.0
    %4019 = vmatpush1.xpose.msra.mxu0 0.0
    %4020 = vmatprep.subr.mxu0 0.0
    %4021 = vmatpush1.xpose.msra.mxu0 0.0
    %4022 = vmatprep.subr.mxu0 0.0
    %4023 = vmatpush1.xpose.msra.mxu0 0.0
    %4024 = vmatprep.subr.mxu0 0.0
    %4025 = vmatpush1.xpose.msra.mxu0 0.0
    %4026 = vmatprep.subr.mxu0 0.0
    %4027 = vmatpush1.xpose.msra.mxu0 0.0
    %4028 = vmatprep.subr.mxu0 0.0
    %4029 = vmatpush1.xpose.msra.mxu0 0.0
    %4030 = vmatprep.subr.mxu0 0.0
    %4031 = vmatpush1.xpose.msra.mxu0 0.0
    %4032 = vmatprep.subr.mxu0 0.0
    %4033 = vmatpush1.xpose.msra.mxu0 0.0
    %4034 = vmatprep.subr.mxu0 0.0
    %4035 = vmatpush1.xpose.msra.mxu0 0.0
    %4036 = vmatprep.subr.mxu0 0.0
    %4037 = vmatpush1.xpose.msra.mxu0 0.0
    %4038 = vmatprep.subr.mxu0 0.0
    %4039 = vmatpush1.xpose.msra.mxu0 0.0
    %4040 = vmatprep.subr.mxu0 0.0
    %4041 = vmatpush1.xpose.msra.mxu0 0.0
    %4042 = vmatprep.subr.mxu0 0.0
    %4043 = vmatpush1.xpose.msra.mxu0 0.0
    %4044 = vmatprep.mubr.f32.mxu0 0.0
    %4045 = vmatmul.mubr.f32.gmra.mrb[0].mxu0 %v3976
    %v4046 = vpop.f32.mrb[0].mxu0
    %v4047 = vadd.f32 0.0, %v4046
    %v4048 = vpop.f32.mrb[0].mxu0
    %4049 = vdwg.mxu0
    %v4051 = vsel %vm254, %v4047, 0
    %4053 = vmatprep.subr.mxu0 0.0
    %4054 = vmatpush1.msra.mxu0 %v3086
    %4055 = vmatprep.subr.mxu0 0.0
    %4056 = vmatpush1.msra.mxu0 0.0
    %4057 = vmatprep.subr.mxu0 0.0
    %4058 = vmatpush1.msra.mxu0 0.0
    %4059 = vmatprep.subr.mxu0 0.0
    %4060 = vmatpush1.msra.mxu0 0.0
    %4061 = vmatprep.subr.mxu0 0.0
    %4062 = vmatpush1.msra.mxu0 0.0
    %4063 = vmatprep.subr.mxu0 0.0
    %4064 = vmatpush1.msra.mxu0 0.0
    %4065 = vmatprep.subr.mxu0 0.0
    %4066 = vmatpush1.msra.mxu0 0.0
    %4067 = vmatprep.subr.mxu0 0.0
    %4068 = vmatpush1.msra.mxu0 0.0
    %4069 = vmatprep.subr.mxu0 0.0
    %4070 = vmatpush1.msra.mxu0 0.0
    %4071 = vmatprep.subr.mxu0 0.0
    %4072 = vmatpush1.msra.mxu0 0.0
    %4073 = vmatprep.subr.mxu0 0.0
    %4074 = vmatpush1.msra.mxu0 0.0
    %4075 = vmatprep.subr.mxu0 0.0
    %4076 = vmatpush1.msra.mxu0 0.0
    %4077 = vmatprep.subr.mxu0 0.0
    %4078 = vmatpush1.msra.mxu0 0.0
    %4079 = vmatprep.subr.mxu0 0.0
    %4080 = vmatpush1.msra.mxu0 0.0
    %4081 = vmatprep.subr.mxu0 0.0
    %4082 = vmatpush1.msra.mxu0 0.0
    %4083 = vmatprep.subr.mxu0 0.0
    %4084 = vmatpush1.msra.mxu0 0.0
    %4085 = vmatprep.subr.mxu0 0.0
    %4086 = vmatpush1.msra.mxu0 0.0
    %4087 = vmatprep.subr.mxu0 0.0
    %4088 = vmatpush1.msra.mxu0 0.0
    %4089 = vmatprep.subr.mxu0 0.0
    %4090 = vmatpush1.msra.mxu0 0.0
    %4091 = vmatprep.subr.mxu0 0.0
    %4092 = vmatpush1.msra.mxu0 0.0
    %4093 = vmatprep.subr.mxu0 0.0
    %4094 = vmatpush1.msra.mxu0 0.0
    %4095 = vmatprep.subr.mxu0 0.0
    %4096 = vmatpush1.msra.mxu0 0.0
    %4097 = vmatprep.subr.mxu0 0.0
    %4098 = vmatpush1.msra.mxu0 0.0
    %4099 = vmatprep.subr.mxu0 0.0
    %4100 = vmatpush1.msra.mxu0 0.0
    %4101 = vmatprep.subr.mxu0 0.0
    %4102 = vmatpush1.msra.mxu0 0.0
    %4103 = vmatprep.subr.mxu0 0.0
    %4104 = vmatpush1.msra.mxu0 0.0
    %4105 = vmatprep.subr.mxu0 0.0
    %4106 = vmatpush1.msra.mxu0 0.0
    %4107 = vmatprep.subr.mxu0 0.0
    %4108 = vmatpush1.msra.mxu0 0.0
    %4109 = vmatprep.subr.mxu0 0.0
    %4110 = vmatpush1.msra.mxu0 0.0
    %4111 = vmatprep.subr.mxu0 0.0
    %4112 = vmatpush1.msra.mxu0 0.0
    %4113 = vmatprep.subr.mxu0 0.0
    %4114 = vmatpush1.msra.mxu0 0.0
    %4115 = vmatprep.subr.mxu0 0.0
    %4116 = vmatpush1.msra.mxu0 0.0
    %4117 = vmatprep.mubr.f32.mxu0 0.0
    %4118 = vmatmul.mubr.f32.gmra.mrb[0].mxu0 %v4051
    %v4119 = vpop.f32.mrb[0].mxu0
    %v4120 = vadd.f32 0.0, %v4119
    %v4121 = vpop.f32.mrb[0].mxu0
    %4122 = vdwg.mxu0
    %v4123 = vadd.f32 %v3879, %v4120
    %4124 = vrot.lane.b32.xlu0 %v2296, 104
    %v4125 = vpop.permute.xlu0 %4124
    %4127 = vrot.lane.b32.xlu0 %v2425, 112
    %v4128 = vpop.permute.xlu0 %4127
    %v4130 = vsel %vm254, %v4125, 0
    %4132 = vmatprep.subr.mxu0 0.0
    %4133 = vmatpush1.msra.mxu0 %v4128
    %4134 = vmatprep.subr.mxu0 0.0
    %4135 = vmatpush1.msra.mxu0 0.0
    %4136 = vmatprep.subr.mxu0 0.0
    %4137 = vmatpush1.msra.mxu0 0.0
    %4138 = vmatprep.subr.mxu0 0.0
    %4139 = vmatpush1.msra.mxu0 0.0
    %4140 = vmatprep.subr.mxu0 0.0
    %4141 = vmatpush1.msra.mxu0 0.0
    %4142 = vmatprep.subr.mxu0 0.0
    %4143 = vmatpush1.msra.mxu0 0.0
    %4144 = vmatprep.subr.mxu0 0.0
    %4145 = vmatpush1.msra.mxu0 0.0
    %4146 = vmatprep.subr.mxu0 0.0
    %4147 = vmatpush1.msra.mxu0 0.0
    %4148 = vmatprep.subr.mxu0 0.0
    %4149 = vmatpush1.msra.mxu0 0.0
    %4150 = vmatprep.subr.mxu0 0.0
    %4151 = vmatpush1.msra.mxu0 0.0
    %4152 = vmatprep.subr.mxu0 0.0
    %4153 = vmatpush1.msra.mxu0 0.0
    %4154 = vmatprep.subr.mxu0 0.0
    %4155 = vmatpush1.msra.mxu0 0.0
    %4156 = vmatprep.subr.mxu0 0.0
    %4157 = vmatpush1.msra.mxu0 0.0
    %4158 = vmatprep.subr.mxu0 0.0
    %4159 = vmatpush1.msra.mxu0 0.0
    %4160 = vmatprep.subr.mxu0 0.0
    %4161 = vmatpush1.msra.mxu0 0.0
    %4162 = vmatprep.subr.mxu0 0.0
    %4163 = vmatpush1.msra.mxu0 0.0
    %4164 = vmatprep.subr.mxu0 0.0
    %4165 = vmatpush1.msra.mxu0 0.0
    %4166 = vmatprep.subr.mxu0 0.0
    %4167 = vmatpush1.msra.mxu0 0.0
    %4168 = vmatprep.subr.mxu0 0.0
    %4169 = vmatpush1.msra.mxu0 0.0
    %4170 = vmatprep.subr.mxu0 0.0
    %4171 = vmatpush1.msra.mxu0 0.0
    %4172 = vmatprep.subr.mxu0 0.0
    %4173 = vmatpush1.msra.mxu0 0.0
    %4174 = vmatprep.subr.mxu0 0.0
    %4175 = vmatpush1.msra.mxu0 0.0
    %4176 = vmatprep.subr.mxu0 0.0
    %4177 = vmatpush1.msra.mxu0 0.0
    %4178 = vmatprep.subr.mxu0 0.0
    %4179 = vmatpush1.msra.mxu0 0.0
    %4180 = vmatprep.subr.mxu0 0.0
    %4181 = vmatpush1.msra.mxu0 0.0
    %4182 = vmatprep.subr.mxu0 0.0
    %4183 = vmatpush1.msra.mxu0 0.0
    %4184 = vmatprep.subr.mxu0 0.0
    %4185 = vmatpush1.msra.mxu0 0.0
    %4186 = vmatprep.subr.mxu0 0.0
    %4187 = vmatpush1.msra.mxu0 0.0
    %4188 = vmatprep.subr.mxu0 0.0
    %4189 = vmatpush1.msra.mxu0 0.0
    %4190 = vmatprep.subr.mxu0 0.0
    %4191 = vmatpush1.msra.mxu0 0.0
    %4192 = vmatprep.subr.mxu0 0.0
    %4193 = vmatpush1.msra.mxu0 0.0
    %4194 = vmatprep.subr.mxu0 0.0
    %4195 = vmatpush1.msra.mxu0 0.0
    %4196 = vmatprep.mubr.f32.mxu0 0.0
    %4197 = vmatmul.mubr.f32.gmra.mrb[0].mxu0 %v4130
    %v4198 = vpop.f32.mrb[0].mxu0
    %v4199 = vadd.f32 0.0, %v4198
    %v4200 = vpop.f32.mrb[0].mxu0
    %4201 = vdwg.mxu0
    %v4202 = vmul.f32 %v4199, 0.35355338
    %v4203 = vadd.f32 %v4202, %v3400
    %v4204 = vsel %vm2524, %v4203, -inf
    %4205 = vmax.xlane.f32.xlu0 %v4204
    %v4206 = vpop.xlane.xlu0 %4205
    %v4207 = vsub.f32 %v4203, %v4206
    %v4208 = vmul.f32 %v4207, 1.442695
    %v4209 = vpow.pop %v4208
    %v4210 = vsel %vm2524, %v4209, 0.0
    %4211 = vadd.xlane.f32.xlu0 %v4210
    %v4212 = vpop.xlane.xlu0 %4211
    %v4213 = vrcp.pop %v4212
    %v4214 = vmul.f32 %v4209, %v4213
    %4215 = vrot.lane.b32.xlu0 %v2445, 112
    %v4216 = vpop.permute.xlu0 %4215
    %v4218 = vsel %vm2524, %v4214, 0
    %v4220 = vsel %vm2524, %v4216, 0
    %4222 = vmatprep.subr.mxu0 0.0
    %4223 = vmatpush1.xpose.msra.mxu0 %v4220
    %4224 = vmatprep.subr.mxu0 0.0
    %4225 = vmatpush1.xpose.msra.mxu0 0.0
    %4226 = vmatprep.subr.mxu0 0.0
    %4227 = vmatpush1.xpose.msra.mxu0 0.0
    %4228 = vmatprep.subr.mxu0 0.0
    %4229 = vmatpush1.xpose.msra.mxu0 0.0
    %4230 = vmatprep.subr.mxu0 0.0
    %4231 = vmatpush1.xpose.msra.mxu0 0.0
    %4232 = vmatprep.subr.mxu0 0.0
    %4233 = vmatpush1.xpose.msra.mxu0 0.0
    %4234 = vmatprep.subr.mxu0 0.0
    %4235 = vmatpush1.xpose.msra.mxu0 0.0
    %4236 = vmatprep.subr.mxu0 0.0
    %4237 = vmatpush1.xpose.msra.mxu0 0.0
    %4238 = vmatprep.subr.mxu0 0.0
    %4239 = vmatpush1.xpose.msra.mxu0 0.0
    %4240 = vmatprep.subr.mxu0 0.0
    %4241 = vmatpush1.xpose.msra.mxu0 0.0
    %4242 = vmatprep.subr.mxu0 0.0
    %4243 = vmatpush1.xpose.msra.mxu0 0.0
    %4244 = vmatprep.subr.mxu0 0.0
    %4245 = vmatpush1.xpose.msra.mxu0 0.0
    %4246 = vmatprep.subr.mxu0 0.0
    %4247 = vmatpush1.xpose.msra.mxu0 0.0
    %4248 = vmatprep.subr.mxu0 0.0
    %4249 = vmatpush1.xpose.msra.mxu0 0.0
    %4250 = vmatprep.subr.mxu0 0.0
    %4251 = vmatpush1.xpose.msra.mxu0 0.0
    %4252 = vmatprep.subr.mxu0 0.0
    %4253 = vmatpush1.xpose.msra.mxu0 0.0
    %4254 = vmatprep.subr.mxu0 0.0
    %4255 = vmatpush1.xpose.msra.mxu0 0.0
    %4256 = vmatprep.subr.mxu0 0.0
    %4257 = vmatpush1.xpose.msra.mxu0 0.0
    %4258 = vmatprep.subr.mxu0 0.0
    %4259 = vmatpush1.xpose.msra.mxu0 0.0
    %4260 = vmatprep.subr.mxu0 0.0
    %4261 = vmatpush1.xpose.msra.mxu0 0.0
    %4262 = vmatprep.subr.mxu0 0.0
    %4263 = vmatpush1.xpose.msra.mxu0 0.0
    %4264 = vmatprep.subr.mxu0 0.0
    %4265 = vmatpush1.xpose.msra.mxu0 0.0
    %4266 = vmatprep.subr.mxu0 0.0
    %4267 = vmatpush1.xpose.msra.mxu0 0.0
    %4268 = vmatprep.subr.mxu0 0.0
    %4269 = vmatpush1.xpose.msra.mxu0 0.0
    %4270 = vmatprep.subr.mxu0 0.0
    %4271 = vmatpush1.xpose.msra.mxu0 0.0
    %4272 = vmatprep.subr.mxu0 0.0
    %4273 = vmatpush1.xpose.msra.mxu0 0.0
    %4274 = vmatprep.subr.mxu0 0.0
    %4275 = vmatpush1.xpose.msra.mxu0 0.0
    %4276 = vmatprep.subr.mxu0 0.0
    %4277 = vmatpush1.xpose.msra.mxu0 0.0
    %4278 = vmatprep.subr.mxu0 0.0
    %4279 = vmatpush1.xpose.msra.mxu0 0.0
    %4280 = vmatprep.subr.mxu0 0.0
    %4281 = vmatpush1.xpose.msra.mxu0 0.0
    %4282 = vmatprep.subr.mxu0 0.0
    %4283 = vmatpush1.xpose.msra.mxu0 0.0
    %4284 = vmatprep.subr.mxu0 0.0
    %4285 = vmatpush1.xpose.msra.mxu0 0.0
    %4286 = vmatprep.mubr.f32.mxu0 0.0
    %4287 = vmatmul.mubr.f32.gmra.mrb[0].mxu0 %v4218
    %v4288 = vpop.f32.mrb[0].mxu0
    %v4289 = vadd.f32 0.0, %v4288
    %v4290 = vpop.f32.mrb[0].mxu0
    %4291 = vdwg.mxu0
    %v4293 = vsel %vm254, %v4289, 0
    %4295 = vmatprep.subr.mxu0 0.0
    %4296 = vmatpush1.msra.mxu0 %v3324
    %4297 = vmatprep.subr.mxu0 0.0
    %4298 = vmatpush1.msra.mxu0 0.0
    %4299 = vmatprep.subr.mxu0 0.0
    %4300 = vmatpush1.msra.mxu0 0.0
    %4301 = vmatprep.subr.mxu0 0.0
    %4302 = vmatpush1.msra.mxu0 0.0
    %4303 = vmatprep.subr.mxu0 0.0
    %4304 = vmatpush1.msra.mxu0 0.0
    %4305 = vmatprep.subr.mxu0 0.0
    %4306 = vmatpush1.msra.mxu0 0.0
    %4307 = vmatprep.subr.mxu0 0.0
    %4308 = vmatpush1.msra.mxu0 0.0
    %4309 = vmatprep.subr.mxu0 0.0
    %4310 = vmatpush1.msra.mxu0 0.0
    %4311 = vmatprep.subr.mxu0 0.0
    %4312 = vmatpush1.msra.mxu0 0.0
    %4313 = vmatprep.subr.mxu0 0.0
    %4314 = vmatpush1.msra.mxu0 0.0
    %4315 = vmatprep.subr.mxu0 0.0
    %4316 = vmatpush1.msra.mxu0 0.0
    %4317 = vmatprep.subr.mxu0 0.0
    %4318 = vmatpush1.msra.mxu0 0.0
    %4319 = vmatprep.subr.mxu0 0.0
    %4320 = vmatpush1.msra.mxu0 0.0
    %4321 = vmatprep.subr.mxu0 0.0
    %4322 = vmatpush1.msra.mxu0 0.0
    %4323 = vmatprep.subr.mxu0 0.0
    %4324 = vmatpush1.msra.mxu0 0.0
    %4325 = vmatprep.subr.mxu0 0.0
    %4326 = vmatpush1.msra.mxu0 0.0
    %4327 = vmatprep.subr.mxu0 0.0
    %4328 = vmatpush1.msra.mxu0 0.0
    %4329 = vmatprep.subr.mxu0 0.0
    %4330 = vmatpush1.msra.mxu0 0.0
    %4331 = vmatprep.subr.mxu0 0.0
    %4332 = vmatpush1.msra.mxu0 0.0
    %4333 = vmatprep.subr.mxu0 0.0
    %4334 = vmatpush1.msra.mxu0 0.0
    %4335 = vmatprep.subr.mxu0 0.0
    %4336 = vmatpush1.msra.mxu0 0.0
    %4337 = vmatprep.subr.mxu0 0.0
    %4338 = vmatpush1.msra.mxu0 0.0
    %4339 = vmatprep.subr.mxu0 0.0
    %4340 = vmatpush1.msra.mxu0 0.0
    %4341 = vmatprep.subr.mxu0 0.0
    %4342 = vmatpush1.msra.mxu0 0.0
    %4343 = vmatprep.subr.mxu0 0.0
    %4344 = vmatpush1.msra.mxu0 0.0
    %4345 = vmatprep.subr.mxu0 0.0
    %4346 = vmatpush1.msra.mxu0 0.0
    %4347 = vmatprep.subr.mxu0 0.0
    %4348 = vmatpush1.msra.mxu0 0.0
    %4349 = vmatprep.subr.mxu0 0.0
    %4350 = vmatpush1.msra.mxu0 0.0
    %4351 = vmatprep.subr.mxu0 0.0
    %4352 = vmatpush1.msra.mxu0 0.0
    %4353 = vmatprep.subr.mxu0 0.0
    %4354 = vmatpush1.msra.mxu0 0.0
    %4355 = vmatprep.subr.mxu0 0.0
    %4356 = vmatpush1.msra.mxu0 0.0
    %4357 = vmatprep.subr.mxu0 0.0
    %4358 = vmatpush1.msra.mxu0 0.0
    %4359 = vmatprep.mubr.f32.mxu0 0.0
    %4360 = vmatmul.mubr.f32.gmra.mrb[0].mxu0 %v4293
    %v4361 = vpop.f32.mrb[0].mxu0
    %v4362 = vadd.f32 0.0, %v4361
    %v4363 = vpop.f32.mrb[0].mxu0
    %4364 = vdwg.mxu0
    %v4365 = vadd.f32 %v4123, %v4362
    %v4366 = vadd.f32 %v2212, %v3398
    %v4367 = vadd.f32 %v2213, %v4365
    %v4368 = vld [vmem:[%s5 + $0x2] sm:$0x1]
    %v4369 = vld [vmem:[%s5 + $0x3] sm:$0x1]
    %v4370 = vsel %vm34, %v4366, 0.0
    %4371 = vadd.xlane.f32.xlu0 %v4370
    %v4372 = vpop.xlane.xlu0 %4371
    %v4373 = vsel %vm34, %v4367, 0.0
    %4374 = vadd.xlane.f32.xlu0 %v4373
    %v4375 = vpop.xlane.xlu0 %4374
    %v4376 = vmul.f32 %v4372, %v2181
    %v4377 = vmul.f32 %v4375, %v2181
    %v4378 = vsub.f32 %v4366, %v4376
    %v4379 = vsub.f32 %v4367, %v4377
    %v4380 = vmul.f32 %v4378, %v4378
    %v4381 = vmul.f32 %v4379, %v4379
    %v4382 = vsel %vm34, %v4380, 0.0
    %4383 = vadd.xlane.f32.xlu0 %v4382
    %v4384 = vpop.xlane.xlu0 %4383
    %v4385 = vsel %vm34, %v4381, 0.0
    %4386 = vadd.xlane.f32.xlu0 %v4385
    %v4387 = vpop.xlane.xlu0 %4386
    %v4388 = vmul.f32 %v4384, %v2181
    %v4389 = vmul.f32 %v4387, %v2181
    %v4390 = vadd.f32 %v4388, 1e-05
    %v4391 = vadd.f32 %v4389, 1e-05
    %v4392 = vrsqrt.pop %v4390
    %v4393 = vrsqrt.pop %v4391
    %v4394 = vmul.f32 %v4378, %v4392
    %v4395 = vmul.f32 %v4379, %v4393
    %v4396 = vlaneseq
    %v4397 = vshrl.u32 %v4396, 7
    %v4398 = vsub.s32 0, %v4397
    %v4399 = vrot.slane %v4368, %v4398
    %v4400 = vmul.f32 %v4394, %v4399
    %v4401 = vmul.f32 %v4395, %v4399
    %v4402 = vlaneseq
    %v4403 = vshrl.u32 %v4402, 7
    %v4404 = vsub.s32 0, %v4403
    %v4405 = vrot.slane %v4369, %v4404
    %v4406 = vadd.f32 %v4400, %v4405
    %v4407 = vadd.f32 %v4401, %v4405
    %v4408 = vld [vmem:[%s4 + $0x100] sm:$0xff]
    %v4409 = vld [vmem:[%s4 + $0x108] sm:$0xff]
    %v4410 = vld [vmem:[%s4 + $0x110] sm:$0xff]
    %v4411 = vld [vmem:[%s4 + $0x118] sm:$0xff]
    %v4412 = vld [vmem:[%s4 + $0x120] sm:$0xff]
    %v4413 = vld [vmem:[%s4 + $0x128] sm:$0xff]
    %v4414 = vld [vmem:[%s4 + $0x130] sm:$0xff]
    %v4415 = vld [vmem:[%s4 + $0x138] sm:$0xff]
    %v4416 = vld [vmem:[%s5 + $0x7] sm:$0x1]
    %v4417 = vlaneseq
    %v4418 = vshrl.u32 %v4417, 7
    %v4419 = vsub.s32 0, %v4418
    %v4420 = vrot.slane %v4416, %v4419
    %v4422 = vsel %vm34, %v4406, 0
    %v4425 = vsel %vm34, %v4407, 0
    %v4428 = vsel %vm34, %v4408, 0
    %v4431 = vsel %vm34, %v4409, 0
    %v4434 = vsel %vm34, %v4410, 0
    %v4437 = vsel %vm34, %v4411, 0
    %v4440 = vsel %vm34, %v4412, 0
    %v4443 = vsel %vm34, %v4413, 0
    %v4446 = vsel %vm34, %v4414, 0
    %v4449 = vsel %vm34, %v4415, 0
    %4451 = vmatprep.subr.mxu0 0.0
    %4452 = vmatpush1.xpose.msra.mxu0 %v4428
    %4453 = vmatprep.subr.mxu0 0.0
    %4454 = vmatpush1.xpose.msra.mxu0 %v4431
    %4455 = vmatprep.subr.mxu0 0.0
    %4456 = vmatpush1.xpose.msra.mxu0 %v4434
    %4457 = vmatprep.subr.mxu0 0.0
    %4458 = vmatpush1.xpose.msra.mxu0 %v4437
    %4459 = vmatprep.subr.mxu0 0.0
    %4460 = vmatpush1.xpose.msra.mxu0 %v4440
    %4461 = vmatprep.subr.mxu0 0.0
    %4462 = vmatpush1.xpose.msra.mxu0 %v4443
    %4463 = vmatprep.subr.mxu0 0.0
    %4464 = vmatpush1.xpose.msra.mxu0 %v4446
    %4465 = vmatprep.subr.mxu0 0.0
    %4466 = vmatpush1.xpose.msra.mxu0 %v4449
    %4467 = vmatprep.subr.mxu0 0.0
    %4468 = vmatpush1.xpose.msra.mxu0 0.0
    %4469 = vmatprep.subr.mxu0 0.0
    %4470 = vmatpush1.xpose.msra.mxu0 0.0
    %4471 = vmatprep.subr.mxu0 0.0
    %4472 = vmatpush1.xpose.msra.mxu0 0.0
    %4473 = vmatprep.subr.mxu0 0.0
    %4474 = vmatpush1.xpose.msra.mxu0 0.0
    %4475 = vmatprep.subr.mxu0 0.0
    %4476 = vmatpush1.xpose.msra.mxu0 0.0
    %4477 = vmatprep.subr.mxu0 0.0
    %4478 = vmatpush1.xpose.msra.mxu0 0.0
    %4479 = vmatprep.subr.mxu0 0.0
    %4480 = vmatpush1.xpose.msra.mxu0 0.0
    %4481 = vmatprep.subr.mxu0 0.0
    %4482 = vmatpush1.xpose.msra.mxu0 0.0
    %4483 = vmatprep.subr.mxu0 0.0
    %4484 = vmatpush1.xpose.msra.mxu0 0.0
    %4485 = vmatprep.subr.mxu0 0.0
    %4486 = vmatpush1.xpose.msra.mxu0 0.0
    %4487 = vmatprep.subr.mxu0 0.0
    %4488 = vmatpush1.xpose.msra.mxu0 0.0
    %4489 = vmatprep.subr.mxu0 0.0
    %4490 = vmatpush1.xpose.msra.mxu0 0.0
    %4491 = vmatprep.subr.mxu0 0.0
    %4492 = vmatpush1.xpose.msra.mxu0 0.0
    %4493 = vmatprep.subr.mxu0 0.0
    %4494 = vmatpush1.xpose.msra.mxu0 0.0
    %4495 = vmatprep.subr.mxu0 0.0
    %4496 = vmatpush1.xpose.msra.mxu0 0.0
    %4497 = vmatprep.subr.mxu0 0.0
    %4498 = vmatpush1.xpose.msra.mxu0 0.0
    %4499 = vmatprep.subr.mxu0 0.0
    %4500 = vmatpush1.xpose.msra.mxu0 0.0
    %4501 = vmatprep.subr.mxu0 0.0
    %4502 = vmatpush1.xpose.msra.mxu0 0.0
    %4503 = vmatprep.subr.mxu0 0.0
    %4504 = vmatpush1.xpose.msra.mxu0 0.0
    %4505 = vmatprep.subr.mxu0 0.0
    %4506 = vmatpush1.xpose.msra.mxu0 0.0
    %4507 = vmatprep.subr.mxu0 0.0
    %4508 = vmatpush1.xpose.msra.mxu0 0.0
    %4509 = vmatprep.subr.mxu0 0.0
    %4510 = vmatpush1.xpose.msra.mxu0 0.0
    %4511 = vmatprep.subr.mxu0 0.0
    %4512 = vmatpush1.xpose.msra.mxu0 0.0
    %4513 = vmatprep.subr.mxu0 0.0
    %4514 = vmatpush1.xpose.msra.mxu0 0.0
    %4515 = vmatprep.mubr.f32.mxu0 0.0
    %4516 = vmatmul.mubr.f32.gmra.mrb[0].mxu0 %v4422
    %v4517 = vpop.f32.mrb[0].mxu0
    %v4518 = vadd.f32 %v4420, %v4517
    %v4519 = vpop.f32.mrb[0].mxu0
    %4520 = vmatprep.mubr.f32.mxu0 0.0
    %4521 = vmatmul.mubr.f32.gmra.mrb[0].mxu0 %v4425
    %v4522 = vpop.f32.mrb[0].mxu0
    %v4523 = vadd.f32 %v4420, %v4522
    %v4524 = vpop.f32.mrb[0].mxu0
    %4525 = vdwg.mxu0
    %v4526 = vmax.f32 %v4518, 0.0
    %v4527 = vmax.f32 %v4523, 0.0
    %v4528 = vld [vmem:[%s4 + $0x140] sm:$0xff]
    %v4529 = vld [vmem:[%s4 + $0x148] sm:$0xff]
    %v4530 = vld [vmem:[%s4 + $0x150] sm:$0xff]
    %v4531 = vld [vmem:[%s4 + $0x158] sm:$0xff]
    %v4532 = vld [vmem:[%s4 + $0x160] sm:$0xff]
    %v4533 = vld [vmem:[%s4 + $0x168] sm:$0xff]
    %v4534 = vld [vmem:[%s4 + $0x170] sm:$0xff]
    %v4535 = vld [vmem:[%s4 + $0x178] sm:$0xff]
    %v4536 = vld [vmem:[%s5 + $0x6] sm:$0x1]
    %v4537 = vlaneseq
    %v4538 = vshrl.u32 %v4537, 7
    %v4539 = vsub.s32 0, %v4538
    %v4540 = vrot.slane %v4536, %v4539
    %vm4541 = vcmask 523264
    %v4543 = vsel %vm4541, %v4526, 0
    %v4546 = vsel %vm4541, %v4527, 0
    %4548 = vmatprep.subr.mxu0 0.0
    %4549 = vmatpush1.msra.mxu0 %v4528
    %4550 = vmatprep.subr.mxu0 0.0
    %4551 = vmatpush1.msra.mxu0 %v4529
    %4552 = vmatprep.subr.mxu0 0.0
    %4553 = vmatpush1.msra.mxu0 %v4530
    %4554 = vmatprep.subr.mxu0 0.0
    %4555 = vmatpush1.msra.mxu0 %v4531
    %4556 = vmatprep.subr.mxu0 0.0
    %4557 = vmatpush1.msra.mxu0 %v4532
    %4558 = vmatprep.subr.mxu0 0.0
    %4559 = vmatpush1.msra.mxu0 %v4533
    %4560 = vmatprep.subr.mxu0 0.0
    %4561 = vmatpush1.msra.mxu0 %v4534
    %4562 = vmatprep.subr.mxu0 0.0
    %4563 = vmatpush1.msra.mxu0 %v4535
    %4564 = vmatprep.subr.mxu0 0.0
    %4565 = vmatpush1.msra.mxu0 0.0
    %4566 = vmatprep.subr.mxu0 0.0
    %4567 = vmatpush1.msra.mxu0 0.0
    %4568 = vmatprep.subr.mxu0 0.0
    %4569 = vmatpush1.msra.mxu0 0.0
    %4570 = vmatprep.subr.mxu0 0.0
    %4571 = vmatpush1.msra.mxu0 0.0
    %4572 = vmatprep.subr.mxu0 0.0
    %4573 = vmatpush1.msra.mxu0 0.0
    %4574 = vmatprep.subr.mxu0 0.0
    %4575 = vmatpush1.msra.mxu0 0.0
    %4576 = vmatprep.subr.mxu0 0.0
    %4577 = vmatpush1.msra.mxu0 0.0
    %4578 = vmatprep.subr.mxu0 0.0
    %4579 = vmatpush1.msra.mxu0 0.0
    %4580 = vmatprep.subr.mxu0 0.0
    %4581 = vmatpush1.msra.mxu0 0.0
    %4582 = vmatprep.subr.mxu0 0.0
    %4583 = vmatpush1.msra.mxu0 0.0
    %4584 = vmatprep.subr.mxu0 0.0
    %4585 = vmatpush1.msra.mxu0 0.0
    %4586 = vmatprep.subr.mxu0 0.0
    %4587 = vmatpush1.msra.mxu0 0.0
    %4588 = vmatprep.subr.mxu0 0.0
    %4589 = vmatpush1.msra.mxu0 0.0
    %4590 = vmatprep.subr.mxu0 0.0
    %4591 = vmatpush1.msra.mxu0 0.0
    %4592 = vmatprep.subr.mxu0 0.0
    %4593 = vmatpush1.msra.mxu0 0.0
    %4594 = vmatprep.subr.mxu0 0.0
    %4595 = vmatpush1.msra.mxu0 0.0
    %4596 = vmatprep.subr.mxu0 0.0
    %4597 = vmatpush1.msra.mxu0 0.0
    %4598 = vmatprep.subr.mxu0 0.0
    %4599 = vmatpush1.msra.mxu0 0.0
    %4600 = vmatprep.subr.mxu0 0.0
    %4601 = vmatpush1.msra.mxu0 0.0
    %4602 = vmatprep.subr.mxu0 0.0
    %4603 = vmatpush1.msra.mxu0 0.0
    %4604 = vmatprep.subr.mxu0 0.0
    %4605 = vmatpush1.msra.mxu0 0.0
    %4606 = vmatprep.subr.mxu0 0.0
    %4607 = vmatpush1.msra.mxu0 0.0
    %4608 = vmatprep.subr.mxu0 0.0
    %4609 = vmatpush1.msra.mxu0 0.0
    %4610 = vmatprep.subr.mxu0 0.0
    %4611 = vmatpush1.msra.mxu0 0.0
    %4612 = vmatprep.mubr.f32.mxu0 0.0
    %4613 = vmatmul.mubr.f32.gmra.mrb[0].mxu0 %v4543
    %v4614 = vpop.f32.mrb[0].mxu0
    %v4615 = vadd.f32 %v4540, %v4614
    %v4616 = vpop.f32.mrb[0].mxu0
    %4617 = vmatprep.mubr.f32.mxu0 0.0
    %4618 = vmatmul.mubr.f32.gmra.mrb[0].mxu0 %v4546
    %v4619 = vpop.f32.mrb[0].mxu0
    %v4620 = vadd.f32 %v4540, %v4619
    %v4621 = vpop.f32.mrb[0].mxu0
    %4622 = vdwg.mxu0
    %v4623 = vadd.f32 %v4406, %v4615
    %v4624 = vadd.f32 %v4407, %v4620
    %v4625 = vld [vmem:[%s5 + $0x4] sm:$0x1]
    %v4626 = vld [vmem:[%s5 + $0x5] sm:$0x1]
    %v4627 = vsel %vm34, %v4623, 0.0
    %4628 = vadd.xlane.f32.xlu0 %v4627
    %v4629 = vpop.xlane.xlu0 %4628
    %v4630 = vsel %vm34, %v4624, 0.0
    %4631 = vadd.xlane.f32.xlu0 %v4630
    %v4632 = vpop.xlane.xlu0 %4631
    %v4633 = vmul.f32 %v4629, %v2181
    %v4634 = vmul.f32 %v4632, %v2181
    %v4635 = vsub.f32 %v4623, %v4633
    %v4636 = vsub.f32 %v4624, %v4634
    %v4637 = vmul.f32 %v4635, %v4635
    %v4638 = vmul.f32 %v4636, %v4636
    %v4639 = vsel %vm34, %v4637, 0.0
    %4640 = vadd.xlane.f32.xlu0 %v4639
    %v4641 = vpop.xlane.xlu0 %4640
    %v4642 = vsel %vm34, %v4638, 0.0
    %4643 = vadd.xlane.f32.xlu0 %v4642
    %v4644 = vpop.xlane.xlu0 %4643
    %v4645 = vmul.f32 %v4641, %v2181
    %v4646 = vmul.f32 %v4644, %v2181
    %v4647 = vadd.f32 %v4645, 1e-05
    %v4648 = vadd.f32 %v4646, 1e-05
    %v4649 = vrsqrt.pop %v4647
    %v4650 = vrsqrt.pop %v4648
    %v4651 = vmul.f32 %v4635, %v4649
    %v4652 = vmul.f32 %v4636, %v4650
    %v4653 = vlaneseq
    %v4654 = vshrl.u32 %v4653, 7
    %v4655 = vsub.s32 0, %v4654
    %v4656 = vrot.slane %v4625, %v4655
    %v4657 = vmul.f32 %v4651, %v4656
    %v4658 = vmul.f32 %v4652, %v4656
    %v4659 = vlaneseq
    %v4660 = vshrl.u32 %v4659, 7
    %v4661 = vsub.s32 0, %v4660
    %v4662 = vrot.slane %v4626, %v4661
    %v4663 = vadd.f32 %v4657, %v4662
    %v4664 = vadd.f32 %v4658, %v4662
    %4665 = vst.msk [vmem:[#allocation2] sm:$0xff] %vm34, %v4663
    %4666 = vst.msk [vmem:[#allocation2 + $0x8] sm:$0xff] %vm34, %v4664
    // Predicated region
    $region26: #{tpu_custom_call.1} parent=1 // pred_check
      _
    $region27: #{tpu_custom_call.1} parent=1 // pred_check_branch
      %4668 = sbr.rel (0) target = $region29
    $region28: #{tpu_custom_call.1} parent=1 // pred_region
      %s4670 = ssub.s32 256, 256
      %4671 = vsyncadd [#allocation3], %s4670
      %s4672 = sshll.u32 [#allocation2], 4
      %s4673 = int_to_ptr.vmem [resolvable:$true] %s4672
      %4678 = dma.vmem_to_hbm [thread:$0]  %s4673, 256, %s6, [#allocation3], 128, 128, 8
    $region29: #{tpu_custom_call.1} parent=1 // pred_fallthru
      _
    // Predicated region
    $region30: #{tpu_custom_call.1} parent=1 // pred_check
      _
    $region31: #{tpu_custom_call.1} parent=1 // pred_check_branch
      %4680 = sbr.rel (0) target = $region33
    $region32: #{tpu_custom_call.1} parent=1 // pred_region
      %4681 = dma.done [#allocation3], 256
    $region33: #{tpu_custom_call.1} parent=1 // pred_fallthru
      _
    %4682 = vsyncpa [#allocation3], 1

</llo_original>
